<compile_context>
chip_gen: v6e
topology: v6e:2x2x1
jax: 0.10.0
libtpu: 0.0.40
codegen_flags: <defaults>
</compile_context>

<pallas_src>
import jax
import jax.numpy as jnp
from jax import lax
from jax.experimental import pallas as pl
from jax.experimental.pallas import tpu as pltpu


def _round_up(a, b):
    return (a + b - 1) // b * b


def lstm_ha_kernel(x_ref, wih_ref, whh_ref, b_ref, wt_ref, wout_ref, bvec_ref,
                   o_ref, gin_s, h_s, c_s, acc_s):
    """One grid block of N_tile sequences.

    x_ref:    (K, Nt, F)   VMEM (mxu dtype: f32 or bf16)
    wih_ref:  (F, 4H)      VMEM (mxu dtype), gate order [i, f, o, g]
    whh_ref:  (H, 4H)      VMEM (mxu dtype), gate order [i, f, o, g]
    b_ref:    (1, 4H)      VMEM f32 (bih + bhh, reordered)
    wt_ref:   (K,)         SMEM f32 (time-mixing Linear(K->1) weights)
    wout_ref: (1, H)       VMEM f32 (scoring Linear(H->1) weights, as a row)
    bvec_ref: (2,)         SMEM f32 = [b_time, b_out]
    o_ref:    (Nt, 1)      VMEM f32
    gin_s:    (K*Nt, 4H)   VMEM f32 scratch: precomputed input projection
    h_s/c_s/acc_s: (Nt, H) VMEM f32 scratch
    """
    Nt, H = h_s.shape
    K = x_ref.shape[0]
    F = x_ref.shape[2]

    # ---- hoisted input projection: one big MXU matmul + one bias add instead
    # of K tiny matmuls + K bias broadcasts inside the serial recurrence.
    x_all = x_ref[...].reshape(K * Nt, F)                              # (K*Nt, F)
    gin_s[...] = (jnp.dot(x_all, wih_ref[...],
                          preferred_element_type=jnp.float32)
                  + b_ref[...])                                        # (K*Nt, 4H)

    h_s[...] = jnp.zeros_like(h_s)
    c_s[...] = jnp.zeros_like(c_s)
    acc_s[...] = jnp.zeros_like(acc_s)

    whh = whh_ref[...]        # hoisted: read once, reused by every unrolled step

    def step(t, carry):
        # only the h-dependent matmul remains on the per-step critical path
        gates = (gin_s[pl.ds(t * Nt, Nt), :]
                 + jnp.dot(h_s[...].astype(whh.dtype), whh,
                           preferred_element_type=jnp.float32))        # (Nt, 4H)
        # gate layout [i, f, o | g]: one contiguous sigmoid slab, one tanh slab
        sig = jax.nn.sigmoid(gates[:, 0:3 * H])
        i = sig[:, 0:H]
        f = sig[:, H:2 * H]
        o = sig[:, 2 * H:3 * H]
        g = jnp.tanh(gates[:, 3 * H:4 * H])
        c = f * c_s[...] + i * g
        h = o * jnp.tanh(c)
        c_s[...] = c
        h_s[...] = h
        # fuse the Linear(K -> 1) over the time axis as an online weighted sum
        acc_s[...] = acc_s[...] + h * wt_ref[t]
        return carry

    # full unroll is fine at K=12; partial unroll avoids vreg blowup at large K
    lax.fori_loop(0, K, step, 0, unroll=True if K <= 16 else 4)

    # ---- scoring head on the VPU/XLU: elementwise mul + lane reduction, no
    # lane-width-1 MXU matmul / drain at the kernel tail.  Output kept (Nt, 1):
    # total output traffic is <= N_tile floats per block, so masked stores are
    # negligible next to the 12-step recurrence.
    rep = acc_s[...] + bvec_ref[0]                                     # (Nt, H)
    o_ref[...] = (jnp.sum(rep * wout_ref[...], axis=-1, keepdims=True)
                  + bvec_ref[1])                                       # (Nt, 1)


def network_forward(x, p, *, mxu_dtype=jnp.float32, n_tile_max=256):
    """x: (B, S, K, F) float32  ->  (B, S) float32 stock scores.

    mxu_dtype: dtype of the MXU matmul operands. Use jnp.bfloat16 on v6e/v7x
    for matmul throughput; accumulation and all elementwise math stay float32.
    """
    B, S, K, F = x.shape
    N = B * S
    H = p["Whh"].shape[1]

    # gate reorder: PyTorch packs rows as [i, f, g, o]; we pack [i, f, o, g]
    # so the three sigmoid gates are one contiguous 3H slab in the kernel.
    def reorder_gates(w):
        i, f, g, o = jnp.split(w, 4, axis=0)
        return jnp.concatenate([i, f, o, g], axis=0)

    wih_t = jnp.transpose(reorder_gates(p["Wih"])).astype(mxu_dtype)      # (F, 4H)
    whh_t = jnp.transpose(reorder_gates(p["Whh"])).astype(mxu_dtype)      # (H, 4H)
    b = reorder_gates(p["bih"] + p["bhh"]).reshape(1, 4 * H).astype(jnp.float32)
    wt = p["Wt"].reshape(K).astype(jnp.float32)                           # (K,)
    wout = p["Wo"].reshape(1, H).astype(jnp.float32)                      # (1, H)
    bvec = jnp.stack([p["bt"][0], p["bo"][0]]).astype(jnp.float32)        # (2,)

    # pad N so sublanes are dense (16 also covers bf16 packing), then tile it
    n_pad16 = _round_up(N, 16)
    n_tile = min(n_tile_max, n_pad16)
    n_pad = _round_up(n_pad16, n_tile)

    x_km = jnp.transpose(x.reshape(N, K, F), (1, 0, 2))                   # (K, N, F)
    if n_pad != N:
        x_km = jnp.pad(x_km, ((0, 0), (0, n_pad - N), (0, 0)))
    x_km = x_km.astype(mxu_dtype)

    grid = (n_pad // n_tile,)
    out = pl.pallas_call(
        lstm_ha_kernel,
        out_shape=jax.ShapeDtypeStruct((n_pad, 1), jnp.float32),
        grid=grid,
        in_specs=[
            pl.BlockSpec((K, n_tile, F), lambda i: (0, i, 0)),            # x
            pl.BlockSpec((F, 4 * H), lambda i: (0, 0)),                   # Wih^T
            pl.BlockSpec((H, 4 * H), lambda i: (0, 0)),                   # Whh^T
            pl.BlockSpec((1, 4 * H), lambda i: (0, 0)),                   # bias
            pl.BlockSpec(memory_space=pltpu.MemorySpace.SMEM),            # wt (K,)
            pl.BlockSpec((1, H), lambda i: (0, 0)),                       # Wout row
            pl.BlockSpec(memory_space=pltpu.MemorySpace.SMEM),            # [bt, bo]
        ],
        out_specs=pl.BlockSpec((n_tile, 1), lambda i: (i, 0)),
        scratch_shapes=[
            pltpu.VMEM((K * n_tile, 4 * H), jnp.float32),   # precomputed x-gates
            pltpu.VMEM((n_tile, H), jnp.float32),           # h
            pltpu.VMEM((n_tile, H), jnp.float32),           # c
            pltpu.VMEM((n_tile, H), jnp.float32),           # time-weighted acc
        ],
        compiler_params=pltpu.CompilerParams(
            # N-tiles are independent: shards across the 2 TensorCores on v7x,
            # harmless on v5e/v6e.
            dimension_semantics=("parallel",),
        ),
    )(x_km, wih_t, whh_t, b, wt, wout, bvec)

    return out[:N, 0].reshape(B, S)


def init_params(key, F, H, K):
    """Deterministic synthetic parameters matching PyTorch layer shapes."""
    ks = jax.random.split(key, 8)
    s = 1.0 / jnp.sqrt(jnp.float32(H))
    sk = 1.0 / jnp.sqrt(jnp.float32(K))
    return {
        "Wih": jax.random.uniform(ks[0], (4 * H, F), jnp.float32, -s, s),
        "Whh": jax.random.uniform(ks[1], (4 * H, H), jnp.float32, -s, s),
        "bih": jax.random.uniform(ks[2], (4 * H,), jnp.float32, -s, s),
        "bhh": jax.random.uniform(ks[3], (4 * H,), jnp.float32, -s, s),
        "Wt":  jax.random.uniform(ks[4], (1, K), jnp.float32, -sk, sk),   # LSTMHA.ll
        "bt":  jax.random.uniform(ks[5], (1,), jnp.float32, -sk, sk),
        "Wo":  jax.random.uniform(ks[6], (1, H), jnp.float32, -s, s),     # Network.ll
        "bo":  jax.random.uniform(ks[7], (1,), jnp.float32, -s, s),
    }


def reference_forward(x, p):
    """Pure-JAX reference matching the PyTorch forward exactly (i,f,g,o order)."""
    B, S, K, F = x.shape
    N = B * S
    H = p["Whh"].shape[1]
    xs = x.reshape(N, K, F)

    def cell(carry, xt):
        h, c = carry
        gates = xt @ p["Wih"].T + h @ p["Whh"].T + p["bih"] + p["bhh"]
        i = jax.nn.sigmoid(gates[:, 0:H])
        f = jax.nn.sigmoid(gates[:, H:2 * H])
        g = jnp.tanh(gates[:, 2 * H:3 * H])
        o = jax.nn.sigmoid(gates[:, 3 * H:4 * H])
        c = f * c + i * g
        h = o * jnp.tanh(c)
        return (h, c), h

    h0 = jnp.zeros((N, H), jnp.float32)
    c0 = jnp.zeros((N, H), jnp.float32)
    _, hs = lax.scan(cell, (h0, c0), jnp.transpose(xs, (1, 0, 2)))   # (K, N, H)
    outputs = jnp.transpose(hs, (1, 0, 2))                           # (N, K, H)
    rep = jnp.einsum("nkh,k->nh", outputs, p["Wt"][0]) + p["bt"][0]  # (N, H)
    score = rep @ p["Wo"].T + p["bo"]                                # (N, 1)
    return score.reshape(B, S)


if __name__ == "__main__":
    # TODO(synk): nn.LSTM's dropout=0.2 is a no-op for num_layers=1 (and inference),
    # so it is intentionally not implemented.
    B, S, K, F, H = 2, 3, 12, 31, 128   # batch, num_stock, K_lookback, feature_dim, lstm_h_dim
    key = jax.random.PRNGKey(0)
    kx, kp = jax.random.split(key)
    x_b = jax.random.normal(kx, (B, S, K, F), jnp.float32)
    params = init_params(kp, F, H, K)

    ref = reference_forward(x_b, params)

    # f32 MXU path: numerically comparable with the PyTorch/JAX reference
    out = jax.block_until_ready(network_forward(x_b, params))
    assert out.shape == (B, S), out.shape
    if not bool(jnp.allclose(out, ref, atol=1e-4, rtol=1e-4)):
        raise AssertionError(f"f32 mismatch: max err {jnp.max(jnp.abs(out - ref))}")

    # bf16-on-MXU perf path (v6e/v7x): f32 accumulation, loose sanity tolerance
    out_bf16 = jax.block_until_ready(
        network_forward(x_b, params, mxu_dtype=jnp.bfloat16))
    if not bool(jnp.max(jnp.abs(out_bf16 - ref)) < 2.5e-1):
        raise AssertionError(
            f"bf16 sanity check failed: max err {jnp.max(jnp.abs(out_bf16 - ref))}")

    print("KERNEL_OK")
</pallas_src>

<mosaic_0001>
module attributes {stable_mosaic.version = 11 : i64} {
  func.func @lstm_ha_kernel(%arg0: i32, %arg1: memref<12x16x31xf32, #tpu.memory_space<vmem>>, %arg2: memref<31x512xf32, #tpu.memory_space<vmem>>, %arg3: memref<128x512xf32, #tpu.memory_space<vmem>>, %arg4: memref<1x512xf32, #tpu.memory_space<vmem>>, %arg5: memref<12xf32, #tpu.memory_space<smem>>, %arg6: memref<1x128xf32, #tpu.memory_space<vmem>>, %arg7: memref<2xf32, #tpu.memory_space<smem>>, %arg8: memref<16x1xf32, #tpu.memory_space<vmem>>, %arg9: memref<192x512xf32, #tpu.memory_space<vmem>>, %arg10: memref<16x128xf32, #tpu.memory_space<vmem>>, %arg11: memref<16x128xf32, #tpu.memory_space<vmem>>, %arg12: memref<16x128xf32, #tpu.memory_space<vmem>>) attributes {dimension_semantics = [#tpu.dimension_semantics<parallel>], iteration_bounds = array<i64: 1>, scalar_prefetch = 0 : i64, scratch_operands = 4 : i64, tpu.core_type = #tpu.core_type<tc>, window_params = [{transform_indices = @transform_0, window_bounds = array<i64: 12, 16, 31>}, {pipeline_mode = #tpu.pipeline_mode<synchronous>, transform_indices = @transform_1, window_bounds = array<i64: 31, 512>}, {pipeline_mode = #tpu.pipeline_mode<synchronous>, transform_indices = @transform_2, window_bounds = array<i64: 128, 512>}, {pipeline_mode = #tpu.pipeline_mode<synchronous>, transform_indices = @transform_3, window_bounds = array<i64: 1, 512>}, {transform_indices = @transform_4, window_bounds = array<i64: 12>}, {pipeline_mode = #tpu.pipeline_mode<synchronous>, transform_indices = @transform_5, window_bounds = array<i64: 1, 128>}, {transform_indices = @transform_6, window_bounds = array<i64: 2>}, {transform_indices = @transform_7, window_bounds = array<i64: 16, 1>}]} {
    %c0 = arith.constant 0 : index
    %c0_0 = arith.constant 0 : index
    %c0_1 = arith.constant 0 : index
    %0 = vector.load %arg1[%c0, %c0_0, %c0_1] : memref<12x16x31xf32, #tpu.memory_space<vmem>>, vector<12x16x31xf32>
    %1 = vector.shape_cast %0 : vector<12x16x31xf32> to vector<192x31xf32>
    %c0_2 = arith.constant 0 : index
    %c0_3 = arith.constant 0 : index
    %2 = vector.load %arg2[%c0_2, %c0_3] : memref<31x512xf32, #tpu.memory_space<vmem>>, vector<31x512xf32>
    %cst = arith.constant dense<0.000000e+00> : vector<192x512xf32>
    %3 = tpu.matmul %1, %2, %cst {dimension_numbers = #tpu.dot_dimension_numbers<[1], [0], [0], [1], [0, 0, 1, 1], [], []>} : vector<192x31xf32>, vector<31x512xf32>, vector<192x512xf32> -> vector<192x512xf32>
    %c0_4 = arith.constant 0 : index
    %c0_5 = arith.constant 0 : index
    %4 = vector.load %arg4[%c0_4, %c0_5] : memref<1x512xf32, #tpu.memory_space<vmem>>, vector<1x512xf32>
    %5 = vector.broadcast %4 : vector<1x512xf32> to vector<192x512xf32>
    %6 = arith.addf %3, %5 : vector<192x512xf32>
    %c0_6 = arith.constant 0 : index
    %c0_7 = arith.constant 0 : index
    %7 = vector.load %arg9[%c0_6, %c0_7] : memref<192x512xf32, #tpu.memory_space<vmem>>, vector<192x512xf32>
    tpu.vector_store %arg9[%c0_6, %c0_7], %6 {strides = array<i32>} : memref<192x512xf32, #tpu.memory_space<vmem>>, vector<192x512xf32>,
    %cst_8 = arith.constant 0.000000e+00 : f32
    %8 = vector.broadcast %cst_8 : f32 to vector<16x128xf32>
    %c0_9 = arith.constant 0 : index
    %c0_10 = arith.constant 0 : index
    %9 = vector.load %arg10[%c0_9, %c0_10] : memref<16x128xf32, #tpu.memory_space<vmem>>, vector<16x128xf32>
    tpu.vector_store %arg10[%c0_9, %c0_10], %8 {strides = array<i32>} : memref<16x128xf32, #tpu.memory_space<vmem>>, vector<16x128xf32>,
    %cst_11 = arith.constant 0.000000e+00 : f32
    %10 = vector.broadcast %cst_11 : f32 to vector<16x128xf32>
    %c0_12 = arith.constant 0 : index
    %c0_13 = arith.constant 0 : index
    %11 = vector.load %arg11[%c0_12, %c0_13] : memref<16x128xf32, #tpu.memory_space<vmem>>, vector<16x128xf32>
    tpu.vector_store %arg11[%c0_12, %c0_13], %10 {strides = array<i32>} : memref<16x128xf32, #tpu.memory_space<vmem>>, vector<16x128xf32>,
    %cst_14 = arith.constant 0.000000e+00 : f32
    %12 = vector.broadcast %cst_14 : f32 to vector<16x128xf32>
    %c0_15 = arith.constant 0 : index
    %c0_16 = arith.constant 0 : index
    %13 = vector.load %arg12[%c0_15, %c0_16] : memref<16x128xf32, #tpu.memory_space<vmem>>, vector<16x128xf32>
    tpu.vector_store %arg12[%c0_15, %c0_16], %12 {strides = array<i32>} : memref<16x128xf32, #tpu.memory_space<vmem>>, vector<16x128xf32>,
    %c0_17 = arith.constant 0 : index
    %c0_18 = arith.constant 0 : index
    %14 = vector.load %arg3[%c0_17, %c0_18] : memref<128x512xf32, #tpu.memory_space<vmem>>, vector<128x512xf32>
    %c0_i32 = arith.constant 0 : i32
    %c16_i32 = arith.constant 16 : i32
    %15 = arith.muli %c0_i32, %c16_i32 : i32
    %16 = arith.index_cast %15 : i32 to index
    %c0_19 = arith.constant 0 : index
    %17 = vector.load %arg9[%16, %c0_19] : memref<192x512xf32, #tpu.memory_space<vmem>>, vector<16x512xf32>
    %c0_20 = arith.constant 0 : index
    %c0_21 = arith.constant 0 : index
    %18 = vector.load %arg10[%c0_20, %c0_21] : memref<16x128xf32, #tpu.memory_space<vmem>>, vector<16x128xf32>
    %cst_22 = arith.constant dense<0.000000e+00> : vector<16x512xf32>
    %19 = tpu.matmul %18, %14, %cst_22 {dimension_numbers = #tpu.dot_dimension_numbers<[1], [0], [0], [1], [0, 0, 1, 1], [], []>} : vector<16x128xf32>, vector<128x512xf32>, vector<16x512xf32> -> vector<16x512xf32>
    %20 = arith.addf %17, %19 : vector<16x512xf32>
    %21 = vector.extract_strided_slice %20 {offsets = [0, 0], sizes = [16, 384], strides = [1, 1]} : vector<16x512xf32> to vector<16x384xf32>
    %22 = arith.negf %21 : vector<16x384xf32>
    %23 = math.exp %22 : vector<16x384xf32>
    %cst_23 = arith.constant 1.000000e+00 : f32
    %24 = vector.broadcast %cst_23 : f32 to vector<16x384xf32>
    %25 = arith.addf %24, %23 : vector<16x384xf32>
    %26 = arith.divf %24, %25 : vector<16x384xf32>
    %27 = vector.extract_strided_slice %26 {offsets = [0, 0], sizes = [16, 128], strides = [1, 1]} : vector<16x384xf32> to vector<16x128xf32>
    %28 = vector.extract_strided_slice %26 {offsets = [0, 128], sizes = [16, 128], strides = [1, 1]} : vector<16x384xf32> to vector<16x128xf32>
    %29 = vector.extract_strided_slice %26 {offsets = [0, 256], sizes = [16, 128], strides = [1, 1]} : vector<16x384xf32> to vector<16x128xf32>
    %30 = vector.extract_strided_slice %20 {offsets = [0, 384], sizes = [16, 128], strides = [1, 1]} : vector<16x512xf32> to vector<16x128xf32>
    %31 = math.tanh %30 : vector<16x128xf32>
    %c0_24 = arith.constant 0 : index
    %c0_25 = arith.constant 0 : index
    %32 = vector.load %arg11[%c0_24, %c0_25] : memref<16x128xf32, #tpu.memory_space<vmem>>, vector<16x128xf32>
    %33 = arith.mulf %28, %32 : vector<16x128xf32>
    %34 = arith.mulf %27, %31 : vector<16x128xf32>
    %35 = arith.addf %33, %34 : vector<16x128xf32>
    %36 = math.tanh %35 : vector<16x128xf32>
    %37 = arith.mulf %29, %36 : vector<16x128xf32>
    %c0_26 = arith.constant 0 : index
    %c0_27 = arith.constant 0 : index
    %38 = vector.load %arg11[%c0_26, %c0_27] : memref<16x128xf32, #tpu.memory_space<vmem>>, vector<16x128xf32>
    tpu.vector_store %arg11[%c0_26, %c0_27], %35 {strides = array<i32>} : memref<16x128xf32, #tpu.memory_space<vmem>>, vector<16x128xf32>,
    %c0_28 = arith.constant 0 : index
    %c0_29 = arith.constant 0 : index
    %39 = vector.load %arg10[%c0_28, %c0_29] : memref<16x128xf32, #tpu.memory_space<vmem>>, vector<16x128xf32>
    tpu.vector_store %arg10[%c0_28, %c0_29], %37 {strides = array<i32>} : memref<16x128xf32, #tpu.memory_space<vmem>>, vector<16x128xf32>,
    %c0_30 = arith.constant 0 : index
    %c0_31 = arith.constant 0 : index
    %40 = vector.load %arg12[%c0_30, %c0_31] : memref<16x128xf32, #tpu.memory_space<vmem>>, vector<16x128xf32>
    %41 = arith.index_cast %c0_i32 : i32 to index
    %42 = memref.load %arg5[%41] : memref<12xf32, #tpu.memory_space<smem>>
    %43 = vector.broadcast %42 : f32 to vector<16x128xf32>
    %44 = arith.mulf %37, %43 : vector<16x128xf32>
    %45 = arith.addf %40, %44 : vector<16x128xf32>
    %c0_32 = arith.constant 0 : index
    %c0_33 = arith.constant 0 : index
    %46 = vector.load %arg12[%c0_32, %c0_33] : memref<16x128xf32, #tpu.memory_space<vmem>>, vector<16x128xf32>
    tpu.vector_store %arg12[%c0_32, %c0_33], %45 {strides = array<i32>} : memref<16x128xf32, #tpu.memory_space<vmem>>, vector<16x128xf32>,
    %c1_i32 = arith.constant 1 : i32
    %c16_i32_34 = arith.constant 16 : i32
    %47 = arith.muli %c1_i32, %c16_i32_34 : i32
    %48 = arith.index_cast %47 : i32 to index
    %c0_35 = arith.constant 0 : index
    %49 = vector.load %arg9[%48, %c0_35] : memref<192x512xf32, #tpu.memory_space<vmem>>, vector<16x512xf32>
    %c0_36 = arith.constant 0 : index
    %c0_37 = arith.constant 0 : index
    %50 = vector.load %arg10[%c0_36, %c0_37] : memref<16x128xf32, #tpu.memory_space<vmem>>, vector<16x128xf32>
    %cst_38 = arith.constant dense<0.000000e+00> : vector<16x512xf32>
    %51 = tpu.matmul %50, %14, %cst_38 {dimension_numbers = #tpu.dot_dimension_numbers<[1], [0], [0], [1], [0, 0, 1, 1], [], []>} : vector<16x128xf32>, vector<128x512xf32>, vector<16x512xf32> -> vector<16x512xf32>
    %52 = arith.addf %49, %51 : vector<16x512xf32>
    %53 = vector.extract_strided_slice %52 {offsets = [0, 0], sizes = [16, 384], strides = [1, 1]} : vector<16x512xf32> to vector<16x384xf32>
    %54 = arith.negf %53 : vector<16x384xf32>
    %55 = math.exp %54 : vector<16x384xf32>
    %cst_39 = arith.constant 1.000000e+00 : f32
    %56 = vector.broadcast %cst_39 : f32 to vector<16x384xf32>
    %57 = arith.addf %56, %55 : vector<16x384xf32>
    %58 = arith.divf %56, %57 : vector<16x384xf32>
    %59 = vector.extract_strided_slice %58 {offsets = [0, 0], sizes = [16, 128], strides = [1, 1]} : vector<16x384xf32> to vector<16x128xf32>
    %60 = vector.extract_strided_slice %58 {offsets = [0, 128], sizes = [16, 128], strides = [1, 1]} : vector<16x384xf32> to vector<16x128xf32>
    %61 = vector.extract_strided_slice %58 {offsets = [0, 256], sizes = [16, 128], strides = [1, 1]} : vector<16x384xf32> to vector<16x128xf32>
    %62 = vector.extract_strided_slice %52 {offsets = [0, 384], sizes = [16, 128], strides = [1, 1]} : vector<16x512xf32> to vector<16x128xf32>
    %63 = math.tanh %62 : vector<16x128xf32>
    %c0_40 = arith.constant 0 : index
    %c0_41 = arith.constant 0 : index
    %64 = vector.load %arg11[%c0_40, %c0_41] : memref<16x128xf32, #tpu.memory_space<vmem>>, vector<16x128xf32>
    %65 = arith.mulf %60, %64 : vector<16x128xf32>
    %66 = arith.mulf %59, %63 : vector<16x128xf32>
    %67 = arith.addf %65, %66 : vector<16x128xf32>
    %68 = math.tanh %67 : vector<16x128xf32>
    %69 = arith.mulf %61, %68 : vector<16x128xf32>
    %c0_42 = arith.constant 0 : index
    %c0_43 = arith.constant 0 : index
    %70 = vector.load %arg11[%c0_42, %c0_43] : memref<16x128xf32, #tpu.memory_space<vmem>>, vector<16x128xf32>
    tpu.vector_store %arg11[%c0_42, %c0_43], %67 {strides = array<i32>} : memref<16x128xf32, #tpu.memory_space<vmem>>, vector<16x128xf32>,
    %c0_44 = arith.constant 0 : index
    %c0_45 = arith.constant 0 : index
    %71 = vector.load %arg10[%c0_44, %c0_45] : memref<16x128xf32, #tpu.memory_space<vmem>>, vector<16x128xf32>
    tpu.vector_store %arg10[%c0_44, %c0_45], %69 {strides = array<i32>} : memref<16x128xf32, #tpu.memory_space<vmem>>, vector<16x128xf32>,
    %c0_46 = arith.constant 0 : index
    %c0_47 = arith.constant 0 : index
    %72 = vector.load %arg12[%c0_46, %c0_47] : memref<16x128xf32, #tpu.memory_space<vmem>>, vector<16x128xf32>
    %73 = arith.index_cast %c1_i32 : i32 to index
    %74 = memref.load %arg5[%73] : memref<12xf32, #tpu.memory_space<smem>>
    %75 = vector.broadcast %74 : f32 to vector<16x128xf32>
    %76 = arith.mulf %69, %75 : vector<16x128xf32>
    %77 = arith.addf %72, %76 : vector<16x128xf32>
    %c0_48 = arith.constant 0 : index
    %c0_49 = arith.constant 0 : index
    %78 = vector.load %arg12[%c0_48, %c0_49] : memref<16x128xf32, #tpu.memory_space<vmem>>, vector<16x128xf32>
    tpu.vector_store %arg12[%c0_48, %c0_49], %77 {strides = array<i32>} : memref<16x128xf32, #tpu.memory_space<vmem>>, vector<16x128xf32>,
    %c2_i32 = arith.constant 2 : i32
    %c16_i32_50 = arith.constant 16 : i32
    %79 = arith.muli %c2_i32, %c16_i32_50 : i32
    %80 = arith.index_cast %79 : i32 to index
    %c0_51 = arith.constant 0 : index
    %81 = vector.load %arg9[%80, %c0_51] : memref<192x512xf32, #tpu.memory_space<vmem>>, vector<16x512xf32>
    %c0_52 = arith.constant 0 : index
    %c0_53 = arith.constant 0 : index
    %82 = vector.load %arg10[%c0_52, %c0_53] : memref<16x128xf32, #tpu.memory_space<vmem>>, vector<16x128xf32>
    %cst_54 = arith.constant dense<0.000000e+00> : vector<16x512xf32>
    %83 = tpu.matmul %82, %14, %cst_54 {dimension_numbers = #tpu.dot_dimension_numbers<[1], [0], [0], [1], [0, 0, 1, 1], [], []>} : vector<16x128xf32>, vector<128x512xf32>, vector<16x512xf32> -> vector<16x512xf32>
    %84 = arith.addf %81, %83 : vector<16x512xf32>
    %85 = vector.extract_strided_slice %84 {offsets = [0, 0], sizes = [16, 384], strides = [1, 1]} : vector<16x512xf32> to vector<16x384xf32>
    %86 = arith.negf %85 : vector<16x384xf32>
    %87 = math.exp %86 : vector<16x384xf32>
    %cst_55 = arith.constant 1.000000e+00 : f32
    %88 = vector.broadcast %cst_55 : f32 to vector<16x384xf32>
    %89 = arith.addf %88, %87 : vector<16x384xf32>
    %90 = arith.divf %88, %89 : vector<16x384xf32>
    %91 = vector.extract_strided_slice %90 {offsets = [0, 0], sizes = [16, 128], strides = [1, 1]} : vector<16x384xf32> to vector<16x128xf32>
    %92 = vector.extract_strided_slice %90 {offsets = [0, 128], sizes = [16, 128], strides = [1, 1]} : vector<16x384xf32> to vector<16x128xf32>
    %93 = vector.extract_strided_slice %90 {offsets = [0, 256], sizes = [16, 128], strides = [1, 1]} : vector<16x384xf32> to vector<16x128xf32>
    %94 = vector.extract_strided_slice %84 {offsets = [0, 384], sizes = [16, 128], strides = [1, 1]} : vector<16x512xf32> to vector<16x128xf32>
    %95 = math.tanh %94 : vector<16x128xf32>
    %c0_56 = arith.constant 0 : index
    %c0_57 = arith.constant 0 : index
    %96 = vector.load %arg11[%c0_56, %c0_57] : memref<16x128xf32, #tpu.memory_space<vmem>>, vector<16x128xf32>
    %97 = arith.mulf %92, %96 : vector<16x128xf32>
    %98 = arith.mulf %91, %95 : vector<16x128xf32>
    %99 = arith.addf %97, %98 : vector<16x128xf32>
    %100 = math.tanh %99 : vector<16x128xf32>
    %101 = arith.mulf %93, %100 : vector<16x128xf32>
    %c0_58 = arith.constant 0 : index
    %c0_59 = arith.constant 0 : index
    %102 = vector.load %arg11[%c0_58, %c0_59] : memref<16x128xf32, #tpu.memory_space<vmem>>, vector<16x128xf32>
    tpu.vector_store %arg11[%c0_58, %c0_59], %99 {strides = array<i32>} : memref<16x128xf32, #tpu.memory_space<vmem>>, vector<16x128xf32>,
    %c0_60 = arith.constant 0 : index
    %c0_61 = arith.constant 0 : index
    %103 = vector.load %arg10[%c0_60, %c0_61] : memref<16x128xf32, #tpu.memory_space<vmem>>, vector<16x128xf32>
    tpu.vector_store %arg10[%c0_60, %c0_61], %101 {strides = array<i32>} : memref<16x128xf32, #tpu.memory_space<vmem>>, vector<16x128xf32>,
    %c0_62 = arith.constant 0 : index
    %c0_63 = arith.constant 0 : index
    %104 = vector.load %arg12[%c0_62, %c0_63] : memref<16x128xf32, #tpu.memory_space<vmem>>, vector<16x128xf32>
    %105 = arith.index_cast %c2_i32 : i32 to index
    %106 = memref.load %arg5[%105] : memref<12xf32, #tpu.memory_space<smem>>
    %107 = vector.broadcast %106 : f32 to vector<16x128xf32>
    %108 = arith.mulf %101, %107 : vector<16x128xf32>
    %109 = arith.addf %104, %108 : vector<16x128xf32>
    %c0_64 = arith.constant 0 : index
    %c0_65 = arith.constant 0 : index
    %110 = vector.load %arg12[%c0_64, %c0_65] : memref<16x128xf32, #tpu.memory_space<vmem>>, vector<16x128xf32>
    tpu.vector_store %arg12[%c0_64, %c0_65], %109 {strides = array<i32>} : memref<16x128xf32, #tpu.memory_space<vmem>>, vector<16x128xf32>,
    %c3_i32 = arith.constant 3 : i32
    %c16_i32_66 = arith.constant 16 : i32
    %111 = arith.muli %c3_i32, %c16_i32_66 : i32
    %112 = arith.index_cast %111 : i32 to index
    %c0_67 = arith.constant 0 : index
    %113 = vector.load %arg9[%112, %c0_67] : memref<192x512xf32, #tpu.memory_space<vmem>>, vector<16x512xf32>
    %c0_68 = arith.constant 0 : index
    %c0_69 = arith.constant 0 : index
    %114 = vector.load %arg10[%c0_68, %c0_69] : memref<16x128xf32, #tpu.memory_space<vmem>>, vector<16x128xf32>
    %cst_70 = arith.constant dense<0.000000e+00> : vector<16x512xf32>
    %115 = tpu.matmul %114, %14, %cst_70 {dimension_numbers = #tpu.dot_dimension_numbers<[1], [0], [0], [1], [0, 0, 1, 1], [], []>} : vector<16x128xf32>, vector<128x512xf32>, vector<16x512xf32> -> vector<16x512xf32>
    %116 = arith.addf %113, %115 : vector<16x512xf32>
    %117 = vector.extract_strided_slice %116 {offsets = [0, 0], sizes = [16, 384], strides = [1, 1]} : vector<16x512xf32> to vector<16x384xf32>
    %118 = arith.negf %117 : vector<16x384xf32>
    %119 = math.exp %118 : vector<16x384xf32>
    %cst_71 = arith.constant 1.000000e+00 : f32
    %120 = vector.broadcast %cst_71 : f32 to vector<16x384xf32>
    %121 = arith.addf %120, %119 : vector<16x384xf32>
    %122 = arith.divf %120, %121 : vector<16x384xf32>
    %123 = vector.extract_strided_slice %122 {offsets = [0, 0], sizes = [16, 128], strides = [1, 1]} : vector<16x384xf32> to vector<16x128xf32>
    %124 = vector.extract_strided_slice %122 {offsets = [0, 128], sizes = [16, 128], strides = [1, 1]} : vector<16x384xf32> to vector<16x128xf32>
    %125 = vector.extract_strided_slice %122 {offsets = [0, 256], sizes = [16, 128], strides = [1, 1]} : vector<16x384xf32> to vector<16x128xf32>
    %126 = vector.extract_strided_slice %116 {offsets = [0, 384], sizes = [16, 128], strides = [1, 1]} : vector<16x512xf32> to vector<16x128xf32>
    %127 = math.tanh %126 : vector<16x128xf32>
    %c0_72 = arith.constant 0 : index
    %c0_73 = arith.constant 0 : index
    %128 = vector.load %arg11[%c0_72, %c0_73] : memref<16x128xf32, #tpu.memory_space<vmem>>, vector<16x128xf32>
    %129 = arith.mulf %124, %128 : vector<16x128xf32>
    %130 = arith.mulf %123, %127 : vector<16x128xf32>
    %131 = arith.addf %129, %130 : vector<16x128xf32>
    %132 = math.tanh %131 : vector<16x128xf32>
    %133 = arith.mulf %125, %132 : vector<16x128xf32>
    %c0_74 = arith.constant 0 : index
    %c0_75 = arith.constant 0 : index
    %134 = vector.load %arg11[%c0_74, %c0_75] : memref<16x128xf32, #tpu.memory_space<vmem>>, vector<16x128xf32>
    tpu.vector_store %arg11[%c0_74, %c0_75], %131 {strides = array<i32>} : memref<16x128xf32, #tpu.memory_space<vmem>>, vector<16x128xf32>,
    %c0_76 = arith.constant 0 : index
    %c0_77 = arith.constant 0 : index
    %135 = vector.load %arg10[%c0_76, %c0_77] : memref<16x128xf32, #tpu.memory_space<vmem>>, vector<16x128xf32>
    tpu.vector_store %arg10[%c0_76, %c0_77], %133 {strides = array<i32>} : memref<16x128xf32, #tpu.memory_space<vmem>>, vector<16x128xf32>,
    %c0_78 = arith.constant 0 : index
    %c0_79 = arith.constant 0 : index
    %136 = vector.load %arg12[%c0_78, %c0_79] : memref<16x128xf32, #tpu.memory_space<vmem>>, vector<16x128xf32>
    %137 = arith.index_cast %c3_i32 : i32 to index
    %138 = memref.load %arg5[%137] : memref<12xf32, #tpu.memory_space<smem>>
    %139 = vector.broadcast %138 : f32 to vector<16x128xf32>
    %140 = arith.mulf %133, %139 : vector<16x128xf32>
    %141 = arith.addf %136, %140 : vector<16x128xf32>
    %c0_80 = arith.constant 0 : index
    %c0_81 = arith.constant 0 : index
    %142 = vector.load %arg12[%c0_80, %c0_81] : memref<16x128xf32, #tpu.memory_space<vmem>>, vector<16x128xf32>
    tpu.vector_store %arg12[%c0_80, %c0_81], %141 {strides = array<i32>} : memref<16x128xf32, #tpu.memory_space<vmem>>, vector<16x128xf32>,
    %c4_i32 = arith.constant 4 : i32
    %c16_i32_82 = arith.constant 16 : i32
    %143 = arith.muli %c4_i32, %c16_i32_82 : i32
    %144 = arith.index_cast %143 : i32 to index
    %c0_83 = arith.constant 0 : index
    %145 = vector.load %arg9[%144, %c0_83] : memref<192x512xf32, #tpu.memory_space<vmem>>, vector<16x512xf32>
    %c0_84 = arith.constant 0 : index
    %c0_85 = arith.constant 0 : index
    %146 = vector.load %arg10[%c0_84, %c0_85] : memref<16x128xf32, #tpu.memory_space<vmem>>, vector<16x128xf32>
    %cst_86 = arith.constant dense<0.000000e+00> : vector<16x512xf32>
    %147 = tpu.matmul %146, %14, %cst_86 {dimension_numbers = #tpu.dot_dimension_numbers<[1], [0], [0], [1], [0, 0, 1, 1], [], []>} : vector<16x128xf32>, vector<128x512xf32>, vector<16x512xf32> -> vector<16x512xf32>
    %148 = arith.addf %145, %147 : vector<16x512xf32>
    %149 = vector.extract_strided_slice %148 {offsets = [0, 0], sizes = [16, 384], strides = [1, 1]} : vector<16x512xf32> to vector<16x384xf32>
    %150 = arith.negf %149 : vector<16x384xf32>
    %151 = math.exp %150 : vector<16x384xf32>
    %cst_87 = arith.constant 1.000000e+00 : f32
    %152 = vector.broadcast %cst_87 : f32 to vector<16x384xf32>
    %153 = arith.addf %152, %151 : vector<16x384xf32>
    %154 = arith.divf %152, %153 : vector<16x384xf32>
    %155 = vector.extract_strided_slice %154 {offsets = [0, 0], sizes = [16, 128], strides = [1, 1]} : vector<16x384xf32> to vector<16x128xf32>
    %156 = vector.extract_strided_slice %154 {offsets = [0, 128], sizes = [16, 128], strides = [1, 1]} : vector<16x384xf32> to vector<16x128xf32>
    %157 = vector.extract_strided_slice %154 {offsets = [0, 256], sizes = [16, 128], strides = [1, 1]} : vector<16x384xf32> to vector<16x128xf32>
    %158 = vector.extract_strided_slice %148 {offsets = [0, 384], sizes = [16, 128], strides = [1, 1]} : vector<16x512xf32> to vector<16x128xf32>
    %159 = math.tanh %158 : vector<16x128xf32>
    %c0_88 = arith.constant 0 : index
    %c0_89 = arith.constant 0 : index
    %160 = vector.load %arg11[%c0_88, %c0_89] : memref<16x128xf32, #tpu.memory_space<vmem>>, vector<16x128xf32>
    %161 = arith.mulf %156, %160 : vector<16x128xf32>
    %162 = arith.mulf %155, %159 : vector<16x128xf32>
    %163 = arith.addf %161, %162 : vector<16x128xf32>
    %164 = math.tanh %163 : vector<16x128xf32>
    %165 = arith.mulf %157, %164 : vector<16x128xf32>
    %c0_90 = arith.constant 0 : index
    %c0_91 = arith.constant 0 : index
    %166 = vector.load %arg11[%c0_90, %c0_91] : memref<16x128xf32, #tpu.memory_space<vmem>>, vector<16x128xf32>
    tpu.vector_store %arg11[%c0_90, %c0_91], %163 {strides = array<i32>} : memref<16x128xf32, #tpu.memory_space<vmem>>, vector<16x128xf32>,
    %c0_92 = arith.constant 0 : index
    %c0_93 = arith.constant 0 : index
    %167 = vector.load %arg10[%c0_92, %c0_93] : memref<16x128xf32, #tpu.memory_space<vmem>>, vector<16x128xf32>
    tpu.vector_store %arg10[%c0_92, %c0_93], %165 {strides = array<i32>} : memref<16x128xf32, #tpu.memory_space<vmem>>, vector<16x128xf32>,
    %c0_94 = arith.constant 0 : index
    %c0_95 = arith.constant 0 : index
    %168 = vector.load %arg12[%c0_94, %c0_95] : memref<16x128xf32, #tpu.memory_space<vmem>>, vector<16x128xf32>
    %169 = arith.index_cast %c4_i32 : i32 to index
    %170 = memref.load %arg5[%169] : memref<12xf32, #tpu.memory_space<smem>>
    %171 = vector.broadcast %170 : f32 to vector<16x128xf32>
    %172 = arith.mulf %165, %171 : vector<16x128xf32>
    %173 = arith.addf %168, %172 : vector<16x128xf32>
    %c0_96 = arith.constant 0 : index
    %c0_97 = arith.constant 0 : index
    %174 = vector.load %arg12[%c0_96, %c0_97] : memref<16x128xf32, #tpu.memory_space<vmem>>, vector<16x128xf32>
    tpu.vector_store %arg12[%c0_96, %c0_97], %173 {strides = array<i32>} : memref<16x128xf32, #tpu.memory_space<vmem>>, vector<16x128xf32>,
    %c5_i32 = arith.constant 5 : i32
    %c16_i32_98 = arith.constant 16 : i32
    %175 = arith.muli %c5_i32, %c16_i32_98 : i32
    %176 = arith.index_cast %175 : i32 to index
    %c0_99 = arith.constant 0 : index
    %177 = vector.load %arg9[%176, %c0_99] : memref<192x512xf32, #tpu.memory_space<vmem>>, vector<16x512xf32>
    %c0_100 = arith.constant 0 : index
    %c0_101 = arith.constant 0 : index
    %178 = vector.load %arg10[%c0_100, %c0_101] : memref<16x128xf32, #tpu.memory_space<vmem>>, vector<16x128xf32>
    %cst_102 = arith.constant dense<0.000000e+00> : vector<16x512xf32>
    %179 = tpu.matmul %178, %14, %cst_102 {dimension_numbers = #tpu.dot_dimension_numbers<[1], [0], [0], [1], [0, 0, 1, 1], [], []>} : vector<16x128xf32>, vector<128x512xf32>, vector<16x512xf32> -> vector<16x512xf32>
    %180 = arith.addf %177, %179 : vector<16x512xf32>
    %181 = vector.extract_strided_slice %180 {offsets = [0, 0], sizes = [16, 384], strides = [1, 1]} : vector<16x512xf32> to vector<16x384xf32>
    %182 = arith.negf %181 : vector<16x384xf32>
    %183 = math.exp %182 : vector<16x384xf32>
    %cst_103 = arith.constant 1.000000e+00 : f32
    %184 = vector.broadcast %cst_103 : f32 to vector<16x384xf32>
    %185 = arith.addf %184, %183 : vector<16x384xf32>
    %186 = arith.divf %184, %185 : vector<16x384xf32>
    %187 = vector.extract_strided_slice %186 {offsets = [0, 0], sizes = [16, 128], strides = [1, 1]} : vector<16x384xf32> to vector<16x128xf32>
    %188 = vector.extract_strided_slice %186 {offsets = [0, 128], sizes = [16, 128], strides = [1, 1]} : vector<16x384xf32> to vector<16x128xf32>
    %189 = vector.extract_strided_slice %186 {offsets = [0, 256], sizes = [16, 128], strides = [1, 1]} : vector<16x384xf32> to vector<16x128xf32>
    %190 = vector.extract_strided_slice %180 {offsets = [0, 384], sizes = [16, 128], strides = [1, 1]} : vector<16x512xf32> to vector<16x128xf32>
    %191 = math.tanh %190 : vector<16x128xf32>
    %c0_104 = arith.constant 0 : index
    %c0_105 = arith.constant 0 : index
    %192 = vector.load %arg11[%c0_104, %c0_105] : memref<16x128xf32, #tpu.memory_space<vmem>>, vector<16x128xf32>
    %193 = arith.mulf %188, %192 : vector<16x128xf32>
    %194 = arith.mulf %187, %191 : vector<16x128xf32>
    %195 = arith.addf %193, %194 : vector<16x128xf32>
    %196 = math.tanh %195 : vector<16x128xf32>
    %197 = arith.mulf %189, %196 : vector<16x128xf32>
    %c0_106 = arith.constant 0 : index
    %c0_107 = arith.constant 0 : index
    %198 = vector.load %arg11[%c0_106, %c0_107] : memref<16x128xf32, #tpu.memory_space<vmem>>, vector<16x128xf32>
    tpu.vector_store %arg11[%c0_106, %c0_107], %195 {strides = array<i32>} : memref<16x128xf32, #tpu.memory_space<vmem>>, vector<16x128xf32>,
    %c0_108 = arith.constant 0 : index
    %c0_109 = arith.constant 0 : index
    %199 = vector.load %arg10[%c0_108, %c0_109] : memref<16x128xf32, #tpu.memory_space<vmem>>, vector<16x128xf32>
    tpu.vector_store %arg10[%c0_108, %c0_109], %197 {strides = array<i32>} : memref<16x128xf32, #tpu.memory_space<vmem>>, vector<16x128xf32>,
    %c0_110 = arith.constant 0 : index
    %c0_111 = arith.constant 0 : index
    %200 = vector.load %arg12[%c0_110, %c0_111] : memref<16x128xf32, #tpu.memory_space<vmem>>, vector<16x128xf32>
    %201 = arith.index_cast %c5_i32 : i32 to index
    %202 = memref.load %arg5[%201] : memref<12xf32, #tpu.memory_space<smem>>
    %203 = vector.broadcast %202 : f32 to vector<16x128xf32>
    %204 = arith.mulf %197, %203 : vector<16x128xf32>
    %205 = arith.addf %200, %204 : vector<16x128xf32>
    %c0_112 = arith.constant 0 : index
    %c0_113 = arith.constant 0 : index
    %206 = vector.load %arg12[%c0_112, %c0_113] : memref<16x128xf32, #tpu.memory_space<vmem>>, vector<16x128xf32>
    tpu.vector_store %arg12[%c0_112, %c0_113], %205 {strides = array<i32>} : memref<16x128xf32, #tpu.memory_space<vmem>>, vector<16x128xf32>,
    %c6_i32 = arith.constant 6 : i32
    %c16_i32_114 = arith.constant 16 : i32
    %207 = arith.muli %c6_i32, %c16_i32_114 : i32
    %208 = arith.index_cast %207 : i32 to index
    %c0_115 = arith.constant 0 : index
    %209 = vector.load %arg9[%208, %c0_115] : memref<192x512xf32, #tpu.memory_space<vmem>>, vector<16x512xf32>
    %c0_116 = arith.constant 0 : index
    %c0_117 = arith.constant 0 : index
    %210 = vector.load %arg10[%c0_116, %c0_117] : memref<16x128xf32, #tpu.memory_space<vmem>>, vector<16x128xf32>
    %cst_118 = arith.constant dense<0.000000e+00> : vector<16x512xf32>
    %211 = tpu.matmul %210, %14, %cst_118 {dimension_numbers = #tpu.dot_dimension_numbers<[1], [0], [0], [1], [0, 0, 1, 1], [], []>} : vector<16x128xf32>, vector<128x512xf32>, vector<16x512xf32> -> vector<16x512xf32>
    %212 = arith.addf %209, %211 : vector<16x512xf32>
    %213 = vector.extract_strided_slice %212 {offsets = [0, 0], sizes = [16, 384], strides = [1, 1]} : vector<16x512xf32> to vector<16x384xf32>
    %214 = arith.negf %213 : vector<16x384xf32>
    %215 = math.exp %214 : vector<16x384xf32>
    %cst_119 = arith.constant 1.000000e+00 : f32
    %216 = vector.broadcast %cst_119 : f32 to vector<16x384xf32>
    %217 = arith.addf %216, %215 : vector<16x384xf32>
    %218 = arith.divf %216, %217 : vector<16x384xf32>
    %219 = vector.extract_strided_slice %218 {offsets = [0, 0], sizes = [16, 128], strides = [1, 1]} : vector<16x384xf32> to vector<16x128xf32>
    %220 = vector.extract_strided_slice %218 {offsets = [0, 128], sizes = [16, 128], strides = [1, 1]} : vector<16x384xf32> to vector<16x128xf32>
    %221 = vector.extract_strided_slice %218 {offsets = [0, 256], sizes = [16, 128], strides = [1, 1]} : vector<16x384xf32> to vector<16x128xf32>
    %222 = vector.extract_strided_slice %212 {offsets = [0, 384], sizes = [16, 128], strides = [1, 1]} : vector<16x512xf32> to vector<16x128xf32>
    %223 = math.tanh %222 : vector<16x128xf32>
    %c0_120 = arith.constant 0 : index
    %c0_121 = arith.constant 0 : index
    %224 = vector.load %arg11[%c0_120, %c0_121] : memref<16x128xf32, #tpu.memory_space<vmem>>, vector<16x128xf32>
    %225 = arith.mulf %220, %224 : vector<16x128xf32>
    %226 = arith.mulf %219, %223 : vector<16x128xf32>
    %227 = arith.addf %225, %226 : vector<16x128xf32>
    %228 = math.tanh %227 : vector<16x128xf32>
    %229 = arith.mulf %221, %228 : vector<16x128xf32>
    %c0_122 = arith.constant 0 : index
    %c0_123 = arith.constant 0 : index
    %230 = vector.load %arg11[%c0_122, %c0_123] : memref<16x128xf32, #tpu.memory_space<vmem>>, vector<16x128xf32>
    tpu.vector_store %arg11[%c0_122, %c0_123], %227 {strides = array<i32>} : memref<16x128xf32, #tpu.memory_space<vmem>>, vector<16x128xf32>,
    %c0_124 = arith.constant 0 : index
    %c0_125 = arith.constant 0 : index
    %231 = vector.load %arg10[%c0_124, %c0_125] : memref<16x128xf32, #tpu.memory_space<vmem>>, vector<16x128xf32>
    tpu.vector_store %arg10[%c0_124, %c0_125], %229 {strides = array<i32>} : memref<16x128xf32, #tpu.memory_space<vmem>>, vector<16x128xf32>,
    %c0_126 = arith.constant 0 : index
    %c0_127 = arith.constant 0 : index
    %232 = vector.load %arg12[%c0_126, %c0_127] : memref<16x128xf32, #tpu.memory_space<vmem>>, vector<16x128xf32>
    %233 = arith.index_cast %c6_i32 : i32 to index
    %234 = memref.load %arg5[%233] : memref<12xf32, #tpu.memory_space<smem>>
    %235 = vector.broadcast %234 : f32 to vector<16x128xf32>
    %236 = arith.mulf %229, %235 : vector<16x128xf32>
    %237 = arith.addf %232, %236 : vector<16x128xf32>
    %c0_128 = arith.constant 0 : index
    %c0_129 = arith.constant 0 : index
    %238 = vector.load %arg12[%c0_128, %c0_129] : memref<16x128xf32, #tpu.memory_space<vmem>>, vector<16x128xf32>
    tpu.vector_store %arg12[%c0_128, %c0_129], %237 {strides = array<i32>} : memref<16x128xf32, #tpu.memory_space<vmem>>, vector<16x128xf32>,
    %c7_i32 = arith.constant 7 : i32
    %c16_i32_130 = arith.constant 16 : i32
    %239 = arith.muli %c7_i32, %c16_i32_130 : i32
    %240 = arith.index_cast %239 : i32 to index
    %c0_131 = arith.constant 0 : index
    %241 = vector.load %arg9[%240, %c0_131] : memref<192x512xf32, #tpu.memory_space<vmem>>, vector<16x512xf32>
    %c0_132 = arith.constant 0 : index
    %c0_133 = arith.constant 0 : index
    %242 = vector.load %arg10[%c0_132, %c0_133] : memref<16x128xf32, #tpu.memory_space<vmem>>, vector<16x128xf32>
    %cst_134 = arith.constant dense<0.000000e+00> : vector<16x512xf32>
    %243 = tpu.matmul %242, %14, %cst_134 {dimension_numbers = #tpu.dot_dimension_numbers<[1], [0], [0], [1], [0, 0, 1, 1], [], []>} : vector<16x128xf32>, vector<128x512xf32>, vector<16x512xf32> -> vector<16x512xf32>
    %244 = arith.addf %241, %243 : vector<16x512xf32>
    %245 = vector.extract_strided_slice %244 {offsets = [0, 0], sizes = [16, 384], strides = [1, 1]} : vector<16x512xf32> to vector<16x384xf32>
    %246 = arith.negf %245 : vector<16x384xf32>
    %247 = math.exp %246 : vector<16x384xf32>
    %cst_135 = arith.constant 1.000000e+00 : f32
    %248 = vector.broadcast %cst_135 : f32 to vector<16x384xf32>
    %249 = arith.addf %248, %247 : vector<16x384xf32>
    %250 = arith.divf %248, %249 : vector<16x384xf32>
    %251 = vector.extract_strided_slice %250 {offsets = [0, 0], sizes = [16, 128], strides = [1, 1]} : vector<16x384xf32> to vector<16x128xf32>
    %252 = vector.extract_strided_slice %250 {offsets = [0, 128], sizes = [16, 128], strides = [1, 1]} : vector<16x384xf32> to vector<16x128xf32>
    %253 = vector.extract_strided_slice %250 {offsets = [0, 256], sizes = [16, 128], strides = [1, 1]} : vector<16x384xf32> to vector<16x128xf32>
    %254 = vector.extract_strided_slice %244 {offsets = [0, 384], sizes = [16, 128], strides = [1, 1]} : vector<16x512xf32> to vector<16x128xf32>
    %255 = math.tanh %254 : vector<16x128xf32>
    %c0_136 = arith.constant 0 : index
    %c0_137 = arith.constant 0 : index
    %256 = vector.load %arg11[%c0_136, %c0_137] : memref<16x128xf32, #tpu.memory_space<vmem>>, vector<16x128xf32>
    %257 = arith.mulf %252, %256 : vector<16x128xf32>
    %258 = arith.mulf %251, %255 : vector<16x128xf32>
    %259 = arith.addf %257, %258 : vector<16x128xf32>
    %260 = math.tanh %259 : vector<16x128xf32>
    %261 = arith.mulf %253, %260 : vector<16x128xf32>
    %c0_138 = arith.constant 0 : index
    %c0_139 = arith.constant 0 : index
    %262 = vector.load %arg11[%c0_138, %c0_139] : memref<16x128xf32, #tpu.memory_space<vmem>>, vector<16x128xf32>
    tpu.vector_store %arg11[%c0_138, %c0_139], %259 {strides = array<i32>} : memref<16x128xf32, #tpu.memory_space<vmem>>, vector<16x128xf32>,
    %c0_140 = arith.constant 0 : index
    %c0_141 = arith.constant 0 : index
    %263 = vector.load %arg10[%c0_140, %c0_141] : memref<16x128xf32, #tpu.memory_space<vmem>>, vector<16x128xf32>
    tpu.vector_store %arg10[%c0_140, %c0_141], %261 {strides = array<i32>} : memref<16x128xf32, #tpu.memory_space<vmem>>, vector<16x128xf32>,
    %c0_142 = arith.constant 0 : index
    %c0_143 = arith.constant 0 : index
    %264 = vector.load %arg12[%c0_142, %c0_143] : memref<16x128xf32, #tpu.memory_space<vmem>>, vector<16x128xf32>
    %265 = arith.index_cast %c7_i32 : i32 to index
    %266 = memref.load %arg5[%265] : memref<12xf32, #tpu.memory_space<smem>>
    %267 = vector.broadcast %266 : f32 to vector<16x128xf32>
    %268 = arith.mulf %261, %267 : vector<16x128xf32>
    %269 = arith.addf %264, %268 : vector<16x128xf32>
    %c0_144 = arith.constant 0 : index
    %c0_145 = arith.constant 0 : index
    %270 = vector.load %arg12[%c0_144, %c0_145] : memref<16x128xf32, #tpu.memory_space<vmem>>, vector<16x128xf32>
    tpu.vector_store %arg12[%c0_144, %c0_145], %269 {strides = array<i32>} : memref<16x128xf32, #tpu.memory_space<vmem>>, vector<16x128xf32>,
    %c8_i32 = arith.constant 8 : i32
    %c16_i32_146 = arith.constant 16 : i32
    %271 = arith.muli %c8_i32, %c16_i32_146 : i32
    %272 = arith.index_cast %271 : i32 to index
    %c0_147 = arith.constant 0 : index
    %273 = vector.load %arg9[%272, %c0_147] : memref<192x512xf32, #tpu.memory_space<vmem>>, vector<16x512xf32>
    %c0_148 = arith.constant 0 : index
    %c0_149 = arith.constant 0 : index
    %274 = vector.load %arg10[%c0_148, %c0_149] : memref<16x128xf32, #tpu.memory_space<vmem>>, vector<16x128xf32>
    %cst_150 = arith.constant dense<0.000000e+00> : vector<16x512xf32>
    %275 = tpu.matmul %274, %14, %cst_150 {dimension_numbers = #tpu.dot_dimension_numbers<[1], [0], [0], [1], [0, 0, 1, 1], [], []>} : vector<16x128xf32>, vector<128x512xf32>, vector<16x512xf32> -> vector<16x512xf32>
    %276 = arith.addf %273, %275 : vector<16x512xf32>
    %277 = vector.extract_strided_slice %276 {offsets = [0, 0], sizes = [16, 384], strides = [1, 1]} : vector<16x512xf32> to vector<16x384xf32>
    %278 = arith.negf %277 : vector<16x384xf32>
    %279 = math.exp %278 : vector<16x384xf32>
    %cst_151 = arith.constant 1.000000e+00 : f32
    %280 = vector.broadcast %cst_151 : f32 to vector<16x384xf32>
    %281 = arith.addf %280, %279 : vector<16x384xf32>
    %282 = arith.divf %280, %281 : vector<16x384xf32>
    %283 = vector.extract_strided_slice %282 {offsets = [0, 0], sizes = [16, 128], strides = [1, 1]} : vector<16x384xf32> to vector<16x128xf32>
    %284 = vector.extract_strided_slice %282 {offsets = [0, 128], sizes = [16, 128], strides = [1, 1]} : vector<16x384xf32> to vector<16x128xf32>
    %285 = vector.extract_strided_slice %282 {offsets = [0, 256], sizes = [16, 128], strides = [1, 1]} : vector<16x384xf32> to vector<16x128xf32>
    %286 = vector.extract_strided_slice %276 {offsets = [0, 384], sizes = [16, 128], strides = [1, 1]} : vector<16x512xf32> to vector<16x128xf32>
    %287 = math.tanh %286 : vector<16x128xf32>
    %c0_152 = arith.constant 0 : index
    %c0_153 = arith.constant 0 : index
    %288 = vector.load %arg11[%c0_152, %c0_153] : memref<16x128xf32, #tpu.memory_space<vmem>>, vector<16x128xf32>
    %289 = arith.mulf %284, %288 : vector<16x128xf32>
    %290 = arith.mulf %283, %287 : vector<16x128xf32>
    %291 = arith.addf %289, %290 : vector<16x128xf32>
    %292 = math.tanh %291 : vector<16x128xf32>
    %293 = arith.mulf %285, %292 : vector<16x128xf32>
    %c0_154 = arith.constant 0 : index
    %c0_155 = arith.constant 0 : index
    %294 = vector.load %arg11[%c0_154, %c0_155] : memref<16x128xf32, #tpu.memory_space<vmem>>, vector<16x128xf32>
    tpu.vector_store %arg11[%c0_154, %c0_155], %291 {strides = array<i32>} : memref<16x128xf32, #tpu.memory_space<vmem>>, vector<16x128xf32>,
    %c0_156 = arith.constant 0 : index
    %c0_157 = arith.constant 0 : index
    %295 = vector.load %arg10[%c0_156, %c0_157] : memref<16x128xf32, #tpu.memory_space<vmem>>, vector<16x128xf32>
    tpu.vector_store %arg10[%c0_156, %c0_157], %293 {strides = array<i32>} : memref<16x128xf32, #tpu.memory_space<vmem>>, vector<16x128xf32>,
    %c0_158 = arith.constant 0 : index
    %c0_159 = arith.constant 0 : index
    %296 = vector.load %arg12[%c0_158, %c0_159] : memref<16x128xf32, #tpu.memory_space<vmem>>, vector<16x128xf32>
    %297 = arith.index_cast %c8_i32 : i32 to index
    %298 = memref.load %arg5[%297] : memref<12xf32, #tpu.memory_space<smem>>
    %299 = vector.broadcast %298 : f32 to vector<16x128xf32>
    %300 = arith.mulf %293, %299 : vector<16x128xf32>
    %301 = arith.addf %296, %300 : vector<16x128xf32>
    %c0_160 = arith.constant 0 : index
    %c0_161 = arith.constant 0 : index
    %302 = vector.load %arg12[%c0_160, %c0_161] : memref<16x128xf32, #tpu.memory_space<vmem>>, vector<16x128xf32>
    tpu.vector_store %arg12[%c0_160, %c0_161], %301 {strides = array<i32>} : memref<16x128xf32, #tpu.memory_space<vmem>>, vector<16x128xf32>,
    %c9_i32 = arith.constant 9 : i32
    %c16_i32_162 = arith.constant 16 : i32
    %303 = arith.muli %c9_i32, %c16_i32_162 : i32
    %304 = arith.index_cast %303 : i32 to index
    %c0_163 = arith.constant 0 : index
    %305 = vector.load %arg9[%304, %c0_163] : memref<192x512xf32, #tpu.memory_space<vmem>>, vector<16x512xf32>
    %c0_164 = arith.constant 0 : index
    %c0_165 = arith.constant 0 : index
    %306 = vector.load %arg10[%c0_164, %c0_165] : memref<16x128xf32, #tpu.memory_space<vmem>>, vector<16x128xf32>
    %cst_166 = arith.constant dense<0.000000e+00> : vector<16x512xf32>
    %307 = tpu.matmul %306, %14, %cst_166 {dimension_numbers = #tpu.dot_dimension_numbers<[1], [0], [0], [1], [0, 0, 1, 1], [], []>} : vector<16x128xf32>, vector<128x512xf32>, vector<16x512xf32> -> vector<16x512xf32>
    %308 = arith.addf %305, %307 : vector<16x512xf32>
    %309 = vector.extract_strided_slice %308 {offsets = [0, 0], sizes = [16, 384], strides = [1, 1]} : vector<16x512xf32> to vector<16x384xf32>
    %310 = arith.negf %309 : vector<16x384xf32>
    %311 = math.exp %310 : vector<16x384xf32>
    %cst_167 = arith.constant 1.000000e+00 : f32
    %312 = vector.broadcast %cst_167 : f32 to vector<16x384xf32>
    %313 = arith.addf %312, %311 : vector<16x384xf32>
    %314 = arith.divf %312, %313 : vector<16x384xf32>
    %315 = vector.extract_strided_slice %314 {offsets = [0, 0], sizes = [16, 128], strides = [1, 1]} : vector<16x384xf32> to vector<16x128xf32>
    %316 = vector.extract_strided_slice %314 {offsets = [0, 128], sizes = [16, 128], strides = [1, 1]} : vector<16x384xf32> to vector<16x128xf32>
    %317 = vector.extract_strided_slice %314 {offsets = [0, 256], sizes = [16, 128], strides = [1, 1]} : vector<16x384xf32> to vector<16x128xf32>
    %318 = vector.extract_strided_slice %308 {offsets = [0, 384], sizes = [16, 128], strides = [1, 1]} : vector<16x512xf32> to vector<16x128xf32>
    %319 = math.tanh %318 : vector<16x128xf32>
    %c0_168 = arith.constant 0 : index
    %c0_169 = arith.constant 0 : index
    %320 = vector.load %arg11[%c0_168, %c0_169] : memref<16x128xf32, #tpu.memory_space<vmem>>, vector<16x128xf32>
    %321 = arith.mulf %316, %320 : vector<16x128xf32>
    %322 = arith.mulf %315, %319 : vector<16x128xf32>
    %323 = arith.addf %321, %322 : vector<16x128xf32>
    %324 = math.tanh %323 : vector<16x128xf32>
    %325 = arith.mulf %317, %324 : vector<16x128xf32>
    %c0_170 = arith.constant 0 : index
    %c0_171 = arith.constant 0 : index
    %326 = vector.load %arg11[%c0_170, %c0_171] : memref<16x128xf32, #tpu.memory_space<vmem>>, vector<16x128xf32>
    tpu.vector_store %arg11[%c0_170, %c0_171], %323 {strides = array<i32>} : memref<16x128xf32, #tpu.memory_space<vmem>>, vector<16x128xf32>,
    %c0_172 = arith.constant 0 : index
    %c0_173 = arith.constant 0 : index
    %327 = vector.load %arg10[%c0_172, %c0_173] : memref<16x128xf32, #tpu.memory_space<vmem>>, vector<16x128xf32>
    tpu.vector_store %arg10[%c0_172, %c0_173], %325 {strides = array<i32>} : memref<16x128xf32, #tpu.memory_space<vmem>>, vector<16x128xf32>,
    %c0_174 = arith.constant 0 : index
    %c0_175 = arith.constant 0 : index
    %328 = vector.load %arg12[%c0_174, %c0_175] : memref<16x128xf32, #tpu.memory_space<vmem>>, vector<16x128xf32>
    %329 = arith.index_cast %c9_i32 : i32 to index
    %330 = memref.load %arg5[%329] : memref<12xf32, #tpu.memory_space<smem>>
    %331 = vector.broadcast %330 : f32 to vector<16x128xf32>
    %332 = arith.mulf %325, %331 : vector<16x128xf32>
    %333 = arith.addf %328, %332 : vector<16x128xf32>
    %c0_176 = arith.constant 0 : index
    %c0_177 = arith.constant 0 : index
    %334 = vector.load %arg12[%c0_176, %c0_177] : memref<16x128xf32, #tpu.memory_space<vmem>>, vector<16x128xf32>
    tpu.vector_store %arg12[%c0_176, %c0_177], %333 {strides = array<i32>} : memref<16x128xf32, #tpu.memory_space<vmem>>, vector<16x128xf32>,
    %c10_i32 = arith.constant 10 : i32
    %c16_i32_178 = arith.constant 16 : i32
    %335 = arith.muli %c10_i32, %c16_i32_178 : i32
    %336 = arith.index_cast %335 : i32 to index
    %c0_179 = arith.constant 0 : index
    %337 = vector.load %arg9[%336, %c0_179] : memref<192x512xf32, #tpu.memory_space<vmem>>, vector<16x512xf32>
    %c0_180 = arith.constant 0 : index
    %c0_181 = arith.constant 0 : index
    %338 = vector.load %arg10[%c0_180, %c0_181] : memref<16x128xf32, #tpu.memory_space<vmem>>, vector<16x128xf32>
    %cst_182 = arith.constant dense<0.000000e+00> : vector<16x512xf32>
    %339 = tpu.matmul %338, %14, %cst_182 {dimension_numbers = #tpu.dot_dimension_numbers<[1], [0], [0], [1], [0, 0, 1, 1], [], []>} : vector<16x128xf32>, vector<128x512xf32>, vector<16x512xf32> -> vector<16x512xf32>
    %340 = arith.addf %337, %339 : vector<16x512xf32>
    %341 = vector.extract_strided_slice %340 {offsets = [0, 0], sizes = [16, 384], strides = [1, 1]} : vector<16x512xf32> to vector<16x384xf32>
    %342 = arith.negf %341 : vector<16x384xf32>
    %343 = math.exp %342 : vector<16x384xf32>
    %cst_183 = arith.constant 1.000000e+00 : f32
    %344 = vector.broadcast %cst_183 : f32 to vector<16x384xf32>
    %345 = arith.addf %344, %343 : vector<16x384xf32>
    %346 = arith.divf %344, %345 : vector<16x384xf32>
    %347 = vector.extract_strided_slice %346 {offsets = [0, 0], sizes = [16, 128], strides = [1, 1]} : vector<16x384xf32> to vector<16x128xf32>
    %348 = vector.extract_strided_slice %346 {offsets = [0, 128], sizes = [16, 128], strides = [1, 1]} : vector<16x384xf32> to vector<16x128xf32>
    %349 = vector.extract_strided_slice %346 {offsets = [0, 256], sizes = [16, 128], strides = [1, 1]} : vector<16x384xf32> to vector<16x128xf32>
    %350 = vector.extract_strided_slice %340 {offsets = [0, 384], sizes = [16, 128], strides = [1, 1]} : vector<16x512xf32> to vector<16x128xf32>
    %351 = math.tanh %350 : vector<16x128xf32>
    %c0_184 = arith.constant 0 : index
    %c0_185 = arith.constant 0 : index
    %352 = vector.load %arg11[%c0_184, %c0_185] : memref<16x128xf32, #tpu.memory_space<vmem>>, vector<16x128xf32>
    %353 = arith.mulf %348, %352 : vector<16x128xf32>
    %354 = arith.mulf %347, %351 : vector<16x128xf32>
    %355 = arith.addf %353, %354 : vector<16x128xf32>
    %356 = math.tanh %355 : vector<16x128xf32>
    %357 = arith.mulf %349, %356 : vector<16x128xf32>
    %c0_186 = arith.constant 0 : index
    %c0_187 = arith.constant 0 : index
    %358 = vector.load %arg11[%c0_186, %c0_187] : memref<16x128xf32, #tpu.memory_space<vmem>>, vector<16x128xf32>
    tpu.vector_store %arg11[%c0_186, %c0_187], %355 {strides = array<i32>} : memref<16x128xf32, #tpu.memory_space<vmem>>, vector<16x128xf32>,
    %c0_188 = arith.constant 0 : index
    %c0_189 = arith.constant 0 : index
    %359 = vector.load %arg10[%c0_188, %c0_189] : memref<16x128xf32, #tpu.memory_space<vmem>>, vector<16x128xf32>
    tpu.vector_store %arg10[%c0_188, %c0_189], %357 {strides = array<i32>} : memref<16x128xf32, #tpu.memory_space<vmem>>, vector<16x128xf32>,
    %c0_190 = arith.constant 0 : index
    %c0_191 = arith.constant 0 : index
    %360 = vector.load %arg12[%c0_190, %c0_191] : memref<16x128xf32, #tpu.memory_space<vmem>>, vector<16x128xf32>
    %361 = arith.index_cast %c10_i32 : i32 to index
    %362 = memref.load %arg5[%361] : memref<12xf32, #tpu.memory_space<smem>>
    %363 = vector.broadcast %362 : f32 to vector<16x128xf32>
    %364 = arith.mulf %357, %363 : vector<16x128xf32>
    %365 = arith.addf %360, %364 : vector<16x128xf32>
    %c0_192 = arith.constant 0 : index
    %c0_193 = arith.constant 0 : index
    %366 = vector.load %arg12[%c0_192, %c0_193] : memref<16x128xf32, #tpu.memory_space<vmem>>, vector<16x128xf32>
    tpu.vector_store %arg12[%c0_192, %c0_193], %365 {strides = array<i32>} : memref<16x128xf32, #tpu.memory_space<vmem>>, vector<16x128xf32>,
    %c11_i32 = arith.constant 11 : i32
    %c16_i32_194 = arith.constant 16 : i32
    %367 = arith.muli %c11_i32, %c16_i32_194 : i32
    %368 = arith.index_cast %367 : i32 to index
    %c0_195 = arith.constant 0 : index
    %369 = vector.load %arg9[%368, %c0_195] : memref<192x512xf32, #tpu.memory_space<vmem>>, vector<16x512xf32>
    %c0_196 = arith.constant 0 : index
    %c0_197 = arith.constant 0 : index
    %370 = vector.load %arg10[%c0_196, %c0_197] : memref<16x128xf32, #tpu.memory_space<vmem>>, vector<16x128xf32>
    %cst_198 = arith.constant dense<0.000000e+00> : vector<16x512xf32>
    %371 = tpu.matmul %370, %14, %cst_198 {dimension_numbers = #tpu.dot_dimension_numbers<[1], [0], [0], [1], [0, 0, 1, 1], [], []>} : vector<16x128xf32>, vector<128x512xf32>, vector<16x512xf32> -> vector<16x512xf32>
    %372 = arith.addf %369, %371 : vector<16x512xf32>
    %373 = vector.extract_strided_slice %372 {offsets = [0, 0], sizes = [16, 384], strides = [1, 1]} : vector<16x512xf32> to vector<16x384xf32>
    %374 = arith.negf %373 : vector<16x384xf32>
    %375 = math.exp %374 : vector<16x384xf32>
    %cst_199 = arith.constant 1.000000e+00 : f32
    %376 = vector.broadcast %cst_199 : f32 to vector<16x384xf32>
    %377 = arith.addf %376, %375 : vector<16x384xf32>
    %378 = arith.divf %376, %377 : vector<16x384xf32>
    %379 = vector.extract_strided_slice %378 {offsets = [0, 0], sizes = [16, 128], strides = [1, 1]} : vector<16x384xf32> to vector<16x128xf32>
    %380 = vector.extract_strided_slice %378 {offsets = [0, 128], sizes = [16, 128], strides = [1, 1]} : vector<16x384xf32> to vector<16x128xf32>
    %381 = vector.extract_strided_slice %378 {offsets = [0, 256], sizes = [16, 128], strides = [1, 1]} : vector<16x384xf32> to vector<16x128xf32>
    %382 = vector.extract_strided_slice %372 {offsets = [0, 384], sizes = [16, 128], strides = [1, 1]} : vector<16x512xf32> to vector<16x128xf32>
    %383 = math.tanh %382 : vector<16x128xf32>
    %c0_200 = arith.constant 0 : index
    %c0_201 = arith.constant 0 : index
    %384 = vector.load %arg11[%c0_200, %c0_201] : memref<16x128xf32, #tpu.memory_space<vmem>>, vector<16x128xf32>
    %385 = arith.mulf %380, %384 : vector<16x128xf32>
    %386 = arith.mulf %379, %383 : vector<16x128xf32>
    %387 = arith.addf %385, %386 : vector<16x128xf32>
    %388 = math.tanh %387 : vector<16x128xf32>
    %389 = arith.mulf %381, %388 : vector<16x128xf32>
    %c0_202 = arith.constant 0 : index
    %c0_203 = arith.constant 0 : index
    %390 = vector.load %arg11[%c0_202, %c0_203] : memref<16x128xf32, #tpu.memory_space<vmem>>, vector<16x128xf32>
    tpu.vector_store %arg11[%c0_202, %c0_203], %387 {strides = array<i32>} : memref<16x128xf32, #tpu.memory_space<vmem>>, vector<16x128xf32>,
    %c0_204 = arith.constant 0 : index
    %c0_205 = arith.constant 0 : index
    %391 = vector.load %arg10[%c0_204, %c0_205] : memref<16x128xf32, #tpu.memory_space<vmem>>, vector<16x128xf32>
    tpu.vector_store %arg10[%c0_204, %c0_205], %389 {strides = array<i32>} : memref<16x128xf32, #tpu.memory_space<vmem>>, vector<16x128xf32>,
    %c0_206 = arith.constant 0 : index
    %c0_207 = arith.constant 0 : index
    %392 = vector.load %arg12[%c0_206, %c0_207] : memref<16x128xf32, #tpu.memory_space<vmem>>, vector<16x128xf32>
    %393 = arith.index_cast %c11_i32 : i32 to index
    %394 = memref.load %arg5[%393] : memref<12xf32, #tpu.memory_space<smem>>
    %395 = vector.broadcast %394 : f32 to vector<16x128xf32>
    %396 = arith.mulf %389, %395 : vector<16x128xf32>
    %397 = arith.addf %392, %396 : vector<16x128xf32>
    %c0_208 = arith.constant 0 : index
    %c0_209 = arith.constant 0 : index
    %398 = vector.load %arg12[%c0_208, %c0_209] : memref<16x128xf32, #tpu.memory_space<vmem>>, vector<16x128xf32>
    tpu.vector_store %arg12[%c0_208, %c0_209], %397 {strides = array<i32>} : memref<16x128xf32, #tpu.memory_space<vmem>>, vector<16x128xf32>,
    %c12_i32 = arith.constant 12 : i32
    %c0_210 = arith.constant 0 : index
    %c0_211 = arith.constant 0 : index
    %399 = vector.load %arg12[%c0_210, %c0_211] : memref<16x128xf32, #tpu.memory_space<vmem>>, vector<16x128xf32>
    %c0_212 = arith.constant 0 : index
    %400 = memref.load %arg7[%c0_212] : memref<2xf32, #tpu.memory_space<smem>>
    %401 = vector.broadcast %400 : f32 to vector<16x128xf32>
    %402 = arith.addf %399, %401 : vector<16x128xf32>
    %c0_213 = arith.constant 0 : index
    %c0_214 = arith.constant 0 : index
    %403 = vector.load %arg6[%c0_213, %c0_214] : memref<1x128xf32, #tpu.memory_space<vmem>>, vector<1x128xf32>
    %404 = vector.broadcast %403 : vector<1x128xf32> to vector<16x128xf32>
    %405 = arith.mulf %402, %404 : vector<16x128xf32>
    %cst_215 = arith.constant dense<0.000000e+00> : vector<16xf32>
    %406 = vector.multi_reduction <add>, %405, %cst_215 [1] : vector<16x128xf32> to vector<16xf32>
    %407 = vector.shape_cast %406 : vector<16xf32> to vector<16x1xf32>
    %c1 = arith.constant 1 : index
    %408 = memref.load %arg7[%c1] : memref<2xf32, #tpu.memory_space<smem>>
    %409 = vector.broadcast %408 : f32 to vector<16x1xf32>
    %410 = arith.addf %407, %409 : vector<16x1xf32>
    %c0_216 = arith.constant 0 : index
    %c0_217 = arith.constant 0 : index
    %411 = vector.load %arg8[%c0_216, %c0_217] : memref<16x1xf32, #tpu.memory_space<vmem>>, vector<16x1xf32>
    tpu.vector_store %arg8[%c0_216, %c0_217], %410 {strides = array<i32>} : memref<16x1xf32, #tpu.memory_space<vmem>>, vector<16x1xf32>,
    return
  }
  func.func @transform_0(%arg0: i32) -> (i32, i32, i32) {
    %c0_i32 = arith.constant 0 : i32
    %c0_i32_0 = arith.constant 0 : i32
    %c0_i32_1 = arith.constant 0 : i32
    return %c0_i32, %arg0, %c0_i32_0 : i32, i32, i32
  }
  func.func @transform_1(%arg0: i32) -> (i32, i32) {
    %c0_i32 = arith.constant 0 : i32
    %c0_i32_0 = arith.constant 0 : i32
    %c0_i32_1 = arith.constant 0 : i32
    return %c0_i32, %c0_i32_0 : i32, i32
  }
  func.func @transform_2(%arg0: i32) -> (i32, i32) {
    %c0_i32 = arith.constant 0 : i32
    %c0_i32_0 = arith.constant 0 : i32
    %c0_i32_1 = arith.constant 0 : i32
    return %c0_i32, %c0_i32_0 : i32, i32
  }
  func.func @transform_3(%arg0: i32) -> (i32, i32) {
    %c0_i32 = arith.constant 0 : i32
    %c0_i32_0 = arith.constant 0 : i32
    %c0_i32_1 = arith.constant 0 : i32
    return %c0_i32, %c0_i32_0 : i32, i32
  }
  func.func @transform_4(%arg0: i32) -> i32 {
    %c0_i32 = arith.constant 0 : i32
    %c0_i32_0 = arith.constant 0 : i32
    return %c0_i32 : i32
  }
  func.func @transform_5(%arg0: i32) -> (i32, i32) {
    %c0_i32 = arith.constant 0 : i32
    %c0_i32_0 = arith.constant 0 : i32
    %c0_i32_1 = arith.constant 0 : i32
    return %c0_i32, %c0_i32_0 : i32, i32
  }
  func.func @transform_6(%arg0: i32) -> i32 {
    %c0_i32 = arith.constant 0 : i32
    %c0_i32_0 = arith.constant 0 : i32
    return %c0_i32 : i32
  }
  func.func @transform_7(%arg0: i32) -> (i32, i32) {
    %c0_i32 = arith.constant 0 : i32
    %c0_i32_0 = arith.constant 0 : i32
    return %arg0, %c0_i32 : i32, i32
  }
}

</mosaic_0001>

<llo_original>
// kernel: tpu_custom_call.1
$region0: #{tpu_custom_call.1}
  #allocation0 [shape = 'u32[]', space=smem, size = 0x4, offset = 0x4, fixed_abs, tag = 'smem constant byte address 0x4 - core index']
  #allocation1 [shape = 'u32[144,128]{1,0:T(1,128)}', space=vmem, size = 0x12000, scoped, tag = 'internal scratch']
  #allocation2 [shape = 'f32[192,512]{1,0:T(8,128)}', space=vmem, size = 0x60000, scoped, tag = 'scratch operand']
  #allocation3 [shape = 'f32[16,128]{1,0:T(8,128)}', space=vmem, size = 0x2000, scoped, tag = 'scratch operand']
  #allocation4 [shape = 'f32[16,128]{1,0:T(8,128)}', space=vmem, size = 0x2000, scoped, tag = 'scratch operand']
  #allocation5 [shape = 'f32[16,128]{1,0:T(8,128)}', space=vmem, size = 0x2000, scoped, tag = 'scratch operand']
  %s0 = inlined_call_operand.hbm [shape: f32[12,16,31], index: 0, kind: input, shape index: {}]
  %s1 = inlined_call_operand.hbm [shape: f32[31,512], index: 1, kind: input, shape index: {}]
  %s2 = inlined_call_operand.hbm [shape: f32[128,512], index: 2, kind: input, shape index: {}]
  %s3 = inlined_call_operand.vmem [shape: f32[1,512], index: 3, kind: input, shape index: {}]
  %s4 = inlined_call_operand.vmem [shape: f32[12], index: 4, kind: input, shape index: {}]
  %s5 = inlined_call_operand.vmem [shape: f32[1,128], index: 5, kind: input, shape index: {}]
  %s6 = inlined_call_operand.vmem [shape: f32[2], index: 6, kind: input, shape index: {}]
  %s7 = inlined_call_operand.vmem [shape: f32[16,1], index: 7, kind: output, shape index: {}]
  %s8 = sld [smem:[#allocation0]]
  $region58: #{tpu_custom_call.1} parent=0
    _
  %s10 = ssub.s32 1, %s8
  %s11 = scalar_select 0, %s10, %s8
  $region1: #{tpu_custom_call.1} parent=0
    #allocation6 [shape = 'u8[98304]{0}', space=vmem, size = 0x18000, scoped, tag = 'input window, operand 0, single buffered']
    #allocation7 [shape = 's32[1]{0}', space=sflag, size = 0x4, scoped, tag = 'scoped memory for tpu_custom_call.1']
    #allocation8 [shape = 's32[1]{0}', space=sflag, size = 0x4, scoped, tag = 'scoped memory for tpu_custom_call.1']
    #allocation9 [shape = 'u8[65536]{0}', space=vmem, size = 0x10000, scoped, tag = 'input window, operand 1, single buffered']
    #allocation10 [shape = 's32[1]{0}', space=sflag, size = 0x4, scoped, tag = 'scoped memory for tpu_custom_call.1']
    #allocation11 [shape = 'u8[262144]{0}', space=vmem, size = 0x40000, scoped, tag = 'input window, operand 2, single buffered']
    #allocation12 [shape = 'u8[512]{0}', space=smem, size = 0x200, scoped, tag = 'input window, operand 4, single buffered']
    #allocation13 [shape = 'u8[512]{0}', space=smem, size = 0x200, scoped, tag = 'input window, operand 6, single buffered']
    #allocation14 [shape = 's32[1]{0}', space=sflag, size = 0x4, scoped, tag = 'scoped memory for tpu_custom_call.1']
    %12 = vsyncpa [#allocation7], 0
    %13 = vsyncpa [#allocation10], 0
    %14 = vsyncpa [#allocation8], 0
    %15 = vsyncpa [#allocation14], 0
    // Predicated region
    $region2: #{tpu_custom_call.1} parent=1 // pred_check
      _
    $region3: #{tpu_custom_call.1} parent=1 // pred_check_branch
      %17 = sbr.rel (0) target = $region5
    $region4: #{tpu_custom_call.1} parent=1 // pred_region
      %s19 = ssub.s32 3072, 3072
      %20 = vsyncadd [#allocation7], %s19
      %s21 = sshll.u32 [#allocation6], 4
      %s22 = int_to_ptr.vmem [resolvable:$true] %s21
      %27 = dma.hbm_to_vmem [thread:$0]  %s0, 3072, %s22, [#allocation7], 128, 128, 8
    $region5: #{tpu_custom_call.1} parent=1 // pred_fallthru
      _
    // Predicated region
    $region6: #{tpu_custom_call.1} parent=1 // pred_check
      _
    $region7: #{tpu_custom_call.1} parent=1 // pred_check_branch
      %29 = sbr.rel (0) target = $region9
    $region8: #{tpu_custom_call.1} parent=1 // pred_region
      %s31 = ssub.s32 2048, 2048
      %32 = vsyncadd [#allocation10], %s31
      %s33 = sshll.u32 [#allocation9], 4
      %s34 = int_to_ptr.vmem [resolvable:$true] %s33
      %39 = dma.hbm_to_vmem [thread:$0]  %s1, 2048, %s34, [#allocation10], 512, 512, 32
    $region9: #{tpu_custom_call.1} parent=1 // pred_fallthru
      _
    // Predicated region
    $region10: #{tpu_custom_call.1} parent=1 // pred_check
      _
    $region11: #{tpu_custom_call.1} parent=1 // pred_check_branch
      %41 = sbr.rel (0) target = $region13
    $region12: #{tpu_custom_call.1} parent=1 // pred_region
      %s43 = ssub.s32 8192, 8192
      %44 = vsyncadd [#allocation10], %s43
      %s45 = sshll.u32 [#allocation11], 4
      %s46 = int_to_ptr.vmem [resolvable:$true] %s45
      %51 = dma.hbm_to_vmem [thread:$0]  %s2, 8192, %s46, [#allocation10], 512, 512, 32
    $region13: #{tpu_custom_call.1} parent=1 // pred_fallthru
      _
    // Predicated region
    $region14: #{tpu_custom_call.1} parent=1 // pred_check
      _
    $region15: #{tpu_custom_call.1} parent=1 // pred_check_branch
      %53 = sbr.rel (0) target = $region17
    $region16: #{tpu_custom_call.1} parent=1 // pred_region
      _
    $region17: #{tpu_custom_call.1} parent=1 // pred_fallthru
      _
    // Predicated region
    $region18: #{tpu_custom_call.1} parent=1 // pred_check
      _
    $region19: #{tpu_custom_call.1} parent=1 // pred_check_branch
      %55 = sbr.rel (0) target = $region21
    $region20: #{tpu_custom_call.1} parent=1 // pred_region
      %s57 = ssub.s32 16, 16
      %58 = vsyncadd [#allocation8], %s57
      %s60 = sshll.u32 %s4, 4
      %s61 = int_to_ptr.vmem [resolvable:$true] %s60
      %63 = dma.vmem_to_smem %s61, 16, [#allocation12], [#allocation8]
    $region21: #{tpu_custom_call.1} parent=1 // pred_fallthru
      _
    // Predicated region
    $region22: #{tpu_custom_call.1} parent=1 // pred_check
      _
    $region23: #{tpu_custom_call.1} parent=1 // pred_check_branch
      %65 = sbr.rel (0) target = $region25
    $region24: #{tpu_custom_call.1} parent=1 // pred_region
      _
    $region25: #{tpu_custom_call.1} parent=1 // pred_fallthru
      _
    // Predicated region
    $region26: #{tpu_custom_call.1} parent=1 // pred_check
      _
    $region27: #{tpu_custom_call.1} parent=1 // pred_check_branch
      %67 = sbr.rel (0) target = $region29
    $region28: #{tpu_custom_call.1} parent=1 // pred_region
      %s69 = ssub.s32 16, 16
      %70 = vsyncadd [#allocation14], %s69
      %s72 = sshll.u32 %s6, 4
      %s73 = int_to_ptr.vmem [resolvable:$true] %s72
      %75 = dma.vmem_to_smem %s73, 16, [#allocation13], [#allocation14]
    $region29: #{tpu_custom_call.1} parent=1 // pred_fallthru
      _
    // Predicated region
    $region30: #{tpu_custom_call.1} parent=1 // pred_check
      _
    $region31: #{tpu_custom_call.1} parent=1 // pred_check_branch
      %77 = sbr.rel (0) target = $region33
    $region32: #{tpu_custom_call.1} parent=1 // pred_region
      %78 = dma.done [#allocation7], 3072
    $region33: #{tpu_custom_call.1} parent=1 // pred_fallthru
      _
    // Predicated region
    $region34: #{tpu_custom_call.1} parent=1 // pred_check
      _
    $region35: #{tpu_custom_call.1} parent=1 // pred_check_branch
      %80 = sbr.rel (0) target = $region37
    $region36: #{tpu_custom_call.1} parent=1 // pred_region
      %81 = dma.done [#allocation10], 2048
    $region37: #{tpu_custom_call.1} parent=1 // pred_fallthru
      _
    // Predicated region
    $region38: #{tpu_custom_call.1} parent=1 // pred_check
      _
    $region39: #{tpu_custom_call.1} parent=1 // pred_check_branch
      %83 = sbr.rel (0) target = $region41
    $region40: #{tpu_custom_call.1} parent=1 // pred_region
      %84 = dma.done [#allocation10], 8192
    $region41: #{tpu_custom_call.1} parent=1 // pred_fallthru
      _
    // Predicated region
    $region42: #{tpu_custom_call.1} parent=1 // pred_check
      _
    $region43: #{tpu_custom_call.1} parent=1 // pred_check_branch
      %86 = sbr.rel (0) target = $region45
    $region44: #{tpu_custom_call.1} parent=1 // pred_region
      %87 = dma.done [#allocation8], 16
    $region45: #{tpu_custom_call.1} parent=1 // pred_fallthru
      _
    // Predicated region
    $region46: #{tpu_custom_call.1} parent=1 // pred_check
      _
    $region47: #{tpu_custom_call.1} parent=1 // pred_check_branch
      %89 = sbr.rel (0) target = $region49
    $region48: #{tpu_custom_call.1} parent=1 // pred_region
      %90 = dma.done [#allocation14], 16
    $region49: #{tpu_custom_call.1} parent=1 // pred_fallthru
      _
    %91 = sfence
    %v92 = vld [vmem:[#allocation6] sm:$0xff]
    %v93 = vld [vmem:[#allocation6 + $0x8] sm:$0xff]
    %v94 = vld [vmem:[#allocation6 + $0x10] sm:$0xff]
    %v95 = vld [vmem:[#allocation6 + $0x18] sm:$0xff]
    %v96 = vld [vmem:[#allocation6 + $0x20] sm:$0xff]
    %v97 = vld [vmem:[#allocation6 + $0x28] sm:$0xff]
    %v98 = vld [vmem:[#allocation6 + $0x30] sm:$0xff]
    %v99 = vld [vmem:[#allocation6 + $0x38] sm:$0xff]
    %v100 = vld [vmem:[#allocation6 + $0x40] sm:$0xff]
    %v101 = vld [vmem:[#allocation6 + $0x48] sm:$0xff]
    %v102 = vld [vmem:[#allocation6 + $0x50] sm:$0xff]
    %v103 = vld [vmem:[#allocation6 + $0x58] sm:$0xff]
    %v104 = vld [vmem:[#allocation6 + $0x60] sm:$0xff]
    %v105 = vld [vmem:[#allocation6 + $0x68] sm:$0xff]
    %v106 = vld [vmem:[#allocation6 + $0x70] sm:$0xff]
    %v107 = vld [vmem:[#allocation6 + $0x78] sm:$0xff]
    %v108 = vld [vmem:[#allocation6 + $0x80] sm:$0xff]
    %v109 = vld [vmem:[#allocation6 + $0x88] sm:$0xff]
    %v110 = vld [vmem:[#allocation6 + $0x90] sm:$0xff]
    %v111 = vld [vmem:[#allocation6 + $0x98] sm:$0xff]
    %v112 = vld [vmem:[#allocation6 + $0xa0] sm:$0xff]
    %v113 = vld [vmem:[#allocation6 + $0xa8] sm:$0xff]
    %v114 = vld [vmem:[#allocation6 + $0xb0] sm:$0xff]
    %v115 = vld [vmem:[#allocation6 + $0xb8] sm:$0xff]
    %v116 = vld [vmem:[#allocation9] sm:$0xff]
    %v117 = vld [vmem:[#allocation9 + $0x8] sm:$0xff]
    %v118 = vld [vmem:[#allocation9 + $0x10] sm:$0xff]
    %v119 = vld [vmem:[#allocation9 + $0x18] sm:$0xff]
    %v120 = vld [vmem:[#allocation9 + $0x20] sm:$0xff]
    %v121 = vld [vmem:[#allocation9 + $0x28] sm:$0xff]
    %v122 = vld [vmem:[#allocation9 + $0x30] sm:$0xff]
    %v123 = vld [vmem:[#allocation9 + $0x38] sm:$0xff]
    %v124 = vld [vmem:[#allocation9 + $0x40] sm:$0xff]
    %v125 = vld [vmem:[#allocation9 + $0x48] sm:$0xff]
    %v126 = vld [vmem:[#allocation9 + $0x50] sm:$0xff]
    %v127 = vld [vmem:[#allocation9 + $0x58] sm:$0xff]
    %v128 = vld [vmem:[#allocation9 + $0x60] sm:$0x7f]
    %v129 = vld [vmem:[#allocation9 + $0x68] sm:$0x7f]
    %v130 = vld [vmem:[#allocation9 + $0x70] sm:$0x7f]
    %v131 = vld [vmem:[#allocation9 + $0x78] sm:$0x7f]
    %v132 = vld [vmem:[%s3] sm:$0xf]
    %v134 = vlaneseq
    %v135 = vshrl.u32 %v134, 7
    %v136 = vsub.s32 0, %v135
    %v137 = vrot.slane %v132, %v136
    %v138 = vlaneseq
    %v139 = vshrl.u32 %v138, 7
    %v140 = vsub.s32 1, %v139
    %v141 = vrot.slane %v132, %v140
    %v142 = vlaneseq
    %v143 = vshrl.u32 %v142, 7
    %v144 = vsub.s32 2, %v143
    %v145 = vrot.slane %v132, %v144
    %v146 = vlaneseq
    %v147 = vshrl.u32 %v146, 7
    %v148 = vsub.s32 3, %v147
    %v149 = vrot.slane %v132, %v148
    %vm154 = vcmask 252928
    %v156 = vsel %vm154, %v92, 0
    %v159 = vsel %vm154, %v93, 0
    %v162 = vsel %vm154, %v94, 0
    %v165 = vsel %vm154, %v95, 0
    %v168 = vsel %vm154, %v96, 0
    %v171 = vsel %vm154, %v97, 0
    %v174 = vsel %vm154, %v98, 0
    %v177 = vsel %vm154, %v99, 0
    %v180 = vsel %vm154, %v100, 0
    %v183 = vsel %vm154, %v101, 0
    %v186 = vsel %vm154, %v102, 0
    %v189 = vsel %vm154, %v103, 0
    %v192 = vsel %vm154, %v104, 0
    %v195 = vsel %vm154, %v105, 0
    %v198 = vsel %vm154, %v106, 0
    %v201 = vsel %vm154, %v107, 0
    %v204 = vsel %vm154, %v108, 0
    %v207 = vsel %vm154, %v109, 0
    %v210 = vsel %vm154, %v110, 0
    %v213 = vsel %vm154, %v111, 0
    %v216 = vsel %vm154, %v112, 0
    %v219 = vsel %vm154, %v113, 0
    %v222 = vsel %vm154, %v114, 0
    %v225 = vsel %vm154, %v115, 0
    %vm227 = vcmask 1046528
    %v229 = vsel %vm227, %v128, 0
    %v232 = vsel %vm227, %v129, 0
    %v235 = vsel %vm227, %v130, 0
    %v238 = vsel %vm227, %v131, 0
    %240 = vmatprep.subr.mxu0 0.0
    %241 = vmatpush1.msra.mxu0 0.0
    %242 = vmatprep.subr.mxu0 0.0
    %243 = vmatpush1.msra.mxu0 0.0
    %244 = vmatprep.subr.mxu0 0.0
    %245 = vmatpush1.msra.mxu0 0.0
    %246 = vmatprep.subr.mxu0 0.0
    %247 = vmatpush1.msra.mxu0 0.0
    %248 = vmatprep.subr.mxu0 0.0
    %249 = vmatpush1.msra.mxu0 0.0
    %250 = vmatprep.subr.mxu0 0.0
    %251 = vmatpush1.msra.mxu0 0.0
    %252 = vmatprep.subr.mxu0 0.0
    %253 = vmatpush1.msra.mxu0 0.0
    %254 = vmatprep.subr.mxu0 0.0
    %255 = vmatpush1.msra.mxu0 0.0
    %256 = vmatprep.subr.mxu0 0.0
    %257 = vmatpush1.msra.mxu0 0.0
    %258 = vmatprep.subr.mxu0 0.0
    %259 = vmatpush1.msra.mxu0 0.0
    %260 = vmatprep.subr.mxu0 0.0
    %261 = vmatpush1.msra.mxu0 0.0
    %262 = vmatprep.subr.mxu0 0.0
    %263 = vmatpush1.msra.mxu0 0.0
    %264 = vmatprep.subr.mxu0 %v232
    %265 = vmatpush1.msra.mxu0 %v229
    %266 = vmatprep.subr.mxu0 %v125
    %267 = vmatpush1.msra.mxu0 %v124
    %268 = vmatprep.subr.mxu0 %v121
    %269 = vmatpush1.msra.mxu0 %v120
    %270 = vmatprep.subr.mxu0 %v117
    %271 = vmatpush1.msra.mxu0 %v116
    %272 = vmatprep.subr.mxu0 0.0
    %273 = vmatpush2.msra.mxu0 0.0
    %274 = vmatprep.subr.mxu0 0.0
    %275 = vmatpush2.msra.mxu0 0.0
    %276 = vmatprep.subr.mxu0 0.0
    %277 = vmatpush2.msra.mxu0 0.0
    %278 = vmatprep.subr.mxu0 0.0
    %279 = vmatpush2.msra.mxu0 0.0
    %280 = vmatprep.subr.mxu0 0.0
    %281 = vmatpush2.msra.mxu0 0.0
    %282 = vmatprep.subr.mxu0 0.0
    %283 = vmatpush2.msra.mxu0 0.0
    %284 = vmatprep.subr.mxu0 0.0
    %285 = vmatpush2.msra.mxu0 0.0
    %286 = vmatprep.subr.mxu0 0.0
    %287 = vmatpush2.msra.mxu0 0.0
    %288 = vmatprep.subr.mxu0 0.0
    %289 = vmatpush2.msra.mxu0 0.0
    %290 = vmatprep.subr.mxu0 0.0
    %291 = vmatpush2.msra.mxu0 0.0
    %292 = vmatprep.subr.mxu0 0.0
    %293 = vmatpush2.msra.mxu0 0.0
    %294 = vmatprep.subr.mxu0 0.0
    %295 = vmatpush2.msra.mxu0 0.0
    %296 = vmatprep.subr.mxu0 0.0
    %297 = vmatpush2.msra.mxu0 0.0
    %298 = vmatprep.subr.mxu0 0.0
    %299 = vmatpush2.msra.mxu0 0.0
    %300 = vmatprep.subr.mxu0 0.0
    %301 = vmatpush2.msra.mxu0 0.0
    %302 = vmatprep.subr.mxu0 0.0
    %303 = vmatpush2.msra.mxu0 0.0
    %304 = vmatprep.mubr.f32.mxu0 0.0
    %305 = vmatmul.mubr.f32.gmra.mxu0 %v156
    %v306 = vpop.f32.mrf.mxu0
    %v307 = vadd.f32 %v137, %v306
    %v308 = vpop.f32.mrf.mxu0
    %v309 = vadd.f32 %v141, %v308
    %310 = vmatprep.mubr.f32.mxu0 0.0
    %311 = vmatmul.mubr.f32.gmra.mxu0 %v159
    %v312 = vpop.f32.mrf.mxu0
    %v313 = vadd.f32 %v137, %v312
    %v314 = vpop.f32.mrf.mxu0
    %v315 = vadd.f32 %v141, %v314
    %316 = vmatprep.mubr.f32.mxu0 0.0
    %317 = vmatmul.mubr.f32.gmra.mxu0 %v162
    %v318 = vpop.f32.mrf.mxu0
    %v319 = vadd.f32 %v137, %v318
    %v320 = vpop.f32.mrf.mxu0
    %v321 = vadd.f32 %v141, %v320
    %322 = vmatprep.mubr.f32.mxu0 0.0
    %323 = vmatmul.mubr.f32.gmra.mxu0 %v165
    %v324 = vpop.f32.mrf.mxu0
    %v325 = vadd.f32 %v137, %v324
    %v326 = vpop.f32.mrf.mxu0
    %v327 = vadd.f32 %v141, %v326
    %328 = vmatprep.mubr.f32.mxu0 0.0
    %329 = vmatmul.mubr.f32.gmra.mxu0 %v168
    %v330 = vpop.f32.mrf.mxu0
    %v331 = vadd.f32 %v137, %v330
    %v332 = vpop.f32.mrf.mxu0
    %v333 = vadd.f32 %v141, %v332
    %334 = vmatprep.mubr.f32.mxu0 0.0
    %335 = vmatmul.mubr.f32.gmra.mxu0 %v171
    %v336 = vpop.f32.mrf.mxu0
    %v337 = vadd.f32 %v137, %v336
    %v338 = vpop.f32.mrf.mxu0
    %v339 = vadd.f32 %v141, %v338
    %340 = vmatprep.mubr.f32.mxu0 0.0
    %341 = vmatmul.mubr.f32.gmra.mxu0 %v174
    %v342 = vpop.f32.mrf.mxu0
    %v343 = vadd.f32 %v137, %v342
    %v344 = vpop.f32.mrf.mxu0
    %v345 = vadd.f32 %v141, %v344
    %346 = vmatprep.mubr.f32.mxu0 0.0
    %347 = vmatmul.mubr.f32.gmra.mxu0 %v177
    %v348 = vpop.f32.mrf.mxu0
    %v349 = vadd.f32 %v137, %v348
    %v350 = vpop.f32.mrf.mxu0
    %v351 = vadd.f32 %v141, %v350
    %352 = vmatprep.mubr.f32.mxu0 0.0
    %353 = vmatmul.mubr.f32.gmra.mxu0 %v180
    %v354 = vpop.f32.mrf.mxu0
    %v355 = vadd.f32 %v137, %v354
    %v356 = vpop.f32.mrf.mxu0
    %v357 = vadd.f32 %v141, %v356
    %358 = vmatprep.mubr.f32.mxu0 0.0
    %359 = vmatmul.mubr.f32.gmra.mxu0 %v183
    %v360 = vpop.f32.mrf.mxu0
    %v361 = vadd.f32 %v137, %v360
    %v362 = vpop.f32.mrf.mxu0
    %v363 = vadd.f32 %v141, %v362
    %364 = vmatprep.mubr.f32.mxu0 0.0
    %365 = vmatmul.mubr.f32.gmra.mxu0 %v186
    %v366 = vpop.f32.mrf.mxu0
    %v367 = vadd.f32 %v137, %v366
    %v368 = vpop.f32.mrf.mxu0
    %v369 = vadd.f32 %v141, %v368
    %370 = vmatprep.mubr.f32.mxu0 0.0
    %371 = vmatmul.mubr.f32.gmra.mxu0 %v189
    %v372 = vpop.f32.mrf.mxu0
    %v373 = vadd.f32 %v137, %v372
    %v374 = vpop.f32.mrf.mxu0
    %v375 = vadd.f32 %v141, %v374
    %376 = vmatprep.mubr.f32.mxu0 0.0
    %377 = vmatmul.mubr.f32.gmra.mxu0 %v192
    %v378 = vpop.f32.mrf.mxu0
    %v379 = vadd.f32 %v137, %v378
    %v380 = vpop.f32.mrf.mxu0
    %v381 = vadd.f32 %v141, %v380
    %382 = vmatprep.mubr.f32.mxu0 0.0
    %383 = vmatmul.mubr.f32.gmra.mxu0 %v195
    %v384 = vpop.f32.mrf.mxu0
    %v385 = vadd.f32 %v137, %v384
    %v386 = vpop.f32.mrf.mxu0
    %v387 = vadd.f32 %v141, %v386
    %388 = vmatprep.mubr.f32.mxu0 0.0
    %389 = vmatmul.mubr.f32.gmra.mxu0 %v198
    %v390 = vpop.f32.mrf.mxu0
    %v391 = vadd.f32 %v137, %v390
    %v392 = vpop.f32.mrf.mxu0
    %v393 = vadd.f32 %v141, %v392
    %394 = vmatprep.mubr.f32.mxu0 0.0
    %395 = vmatmul.mubr.f32.gmra.mxu0 %v201
    %v396 = vpop.f32.mrf.mxu0
    %v397 = vadd.f32 %v137, %v396
    %v398 = vpop.f32.mrf.mxu0
    %v399 = vadd.f32 %v141, %v398
    %400 = vmatprep.mubr.f32.mxu0 0.0
    %401 = vmatmul.mubr.f32.gmra.mxu0 %v204
    %v402 = vpop.f32.mrf.mxu0
    %v403 = vadd.f32 %v137, %v402
    %v404 = vpop.f32.mrf.mxu0
    %v405 = vadd.f32 %v141, %v404
    %406 = vmatprep.mubr.f32.mxu0 0.0
    %407 = vmatmul.mubr.f32.gmra.mxu0 %v207
    %v408 = vpop.f32.mrf.mxu0
    %v409 = vadd.f32 %v137, %v408
    %v410 = vpop.f32.mrf.mxu0
    %v411 = vadd.f32 %v141, %v410
    %412 = vmatprep.mubr.f32.mxu0 0.0
    %413 = vmatmul.mubr.f32.gmra.mxu0 %v210
    %v414 = vpop.f32.mrf.mxu0
    %v415 = vadd.f32 %v137, %v414
    %v416 = vpop.f32.mrf.mxu0
    %v417 = vadd.f32 %v141, %v416
    %418 = vmatprep.mubr.f32.mxu0 0.0
    %419 = vmatmul.mubr.f32.gmra.mxu0 %v213
    %v420 = vpop.f32.mrf.mxu0
    %v421 = vadd.f32 %v137, %v420
    %v422 = vpop.f32.mrf.mxu0
    %v423 = vadd.f32 %v141, %v422
    %424 = vmatprep.mubr.f32.mxu0 0.0
    %425 = vmatmul.mubr.f32.gmra.mxu0 %v216
    %v426 = vpop.f32.mrf.mxu0
    %v427 = vadd.f32 %v137, %v426
    %v428 = vpop.f32.mrf.mxu0
    %v429 = vadd.f32 %v141, %v428
    %430 = vmatprep.mubr.f32.mxu0 0.0
    %431 = vmatmul.mubr.f32.gmra.mxu0 %v219
    %v432 = vpop.f32.mrf.mxu0
    %v433 = vadd.f32 %v137, %v432
    %v434 = vpop.f32.mrf.mxu0
    %v435 = vadd.f32 %v141, %v434
    %436 = vmatprep.mubr.f32.mxu0 0.0
    %437 = vmatmul.mubr.f32.gmra.mxu0 %v222
    %v438 = vpop.f32.mrf.mxu0
    %v439 = vadd.f32 %v137, %v438
    %v440 = vpop.f32.mrf.mxu0
    %v441 = vadd.f32 %v141, %v440
    %442 = vmatprep.mubr.f32.mxu0 0.0
    %443 = vmatmul.mubr.f32.gmra.mxu0 %v225
    %v444 = vpop.f32.mrf.mxu0
    %v445 = vadd.f32 %v137, %v444
    %v446 = vpop.f32.mrf.mxu0
    %v447 = vadd.f32 %v141, %v446
    %448 = vdwg.mxu0
    %449 = vmatprep.subr.mxu0 0.0
    %450 = vmatpush1.msra.mxu0 0.0
    %451 = vmatprep.subr.mxu0 0.0
    %452 = vmatpush1.msra.mxu0 0.0
    %453 = vmatprep.subr.mxu0 0.0
    %454 = vmatpush1.msra.mxu0 0.0
    %455 = vmatprep.subr.mxu0 0.0
    %456 = vmatpush1.msra.mxu0 0.0
    %457 = vmatprep.subr.mxu0 0.0
    %458 = vmatpush1.msra.mxu0 0.0
    %459 = vmatprep.subr.mxu0 0.0
    %460 = vmatpush1.msra.mxu0 0.0
    %461 = vmatprep.subr.mxu0 0.0
    %462 = vmatpush1.msra.mxu0 0.0
    %463 = vmatprep.subr.mxu0 0.0
    %464 = vmatpush1.msra.mxu0 0.0
    %465 = vmatprep.subr.mxu0 0.0
    %466 = vmatpush1.msra.mxu0 0.0
    %467 = vmatprep.subr.mxu0 0.0
    %468 = vmatpush1.msra.mxu0 0.0
    %469 = vmatprep.subr.mxu0 0.0
    %470 = vmatpush1.msra.mxu0 0.0
    %471 = vmatprep.subr.mxu0 0.0
    %472 = vmatpush1.msra.mxu0 0.0
    %473 = vmatprep.subr.mxu0 %v238
    %474 = vmatpush1.msra.mxu0 %v235
    %475 = vmatprep.subr.mxu0 %v127
    %476 = vmatpush1.msra.mxu0 %v126
    %477 = vmatprep.subr.mxu0 %v123
    %478 = vmatpush1.msra.mxu0 %v122
    %479 = vmatprep.subr.mxu0 %v119
    %480 = vmatpush1.msra.mxu0 %v118
    %481 = vmatprep.subr.mxu0 0.0
    %482 = vmatpush2.msra.mxu0 0.0
    %483 = vmatprep.subr.mxu0 0.0
    %484 = vmatpush2.msra.mxu0 0.0
    %485 = vmatprep.subr.mxu0 0.0
    %486 = vmatpush2.msra.mxu0 0.0
    %487 = vmatprep.subr.mxu0 0.0
    %488 = vmatpush2.msra.mxu0 0.0
    %489 = vmatprep.subr.mxu0 0.0
    %490 = vmatpush2.msra.mxu0 0.0
    %491 = vmatprep.subr.mxu0 0.0
    %492 = vmatpush2.msra.mxu0 0.0
    %493 = vmatprep.subr.mxu0 0.0
    %494 = vmatpush2.msra.mxu0 0.0
    %495 = vmatprep.subr.mxu0 0.0
    %496 = vmatpush2.msra.mxu0 0.0
    %497 = vmatprep.subr.mxu0 0.0
    %498 = vmatpush2.msra.mxu0 0.0
    %499 = vmatprep.subr.mxu0 0.0
    %500 = vmatpush2.msra.mxu0 0.0
    %501 = vmatprep.subr.mxu0 0.0
    %502 = vmatpush2.msra.mxu0 0.0
    %503 = vmatprep.subr.mxu0 0.0
    %504 = vmatpush2.msra.mxu0 0.0
    %505 = vmatprep.subr.mxu0 0.0
    %506 = vmatpush2.msra.mxu0 0.0
    %507 = vmatprep.subr.mxu0 0.0
    %508 = vmatpush2.msra.mxu0 0.0
    %509 = vmatprep.subr.mxu0 0.0
    %510 = vmatpush2.msra.mxu0 0.0
    %511 = vmatprep.subr.mxu0 0.0
    %512 = vmatpush2.msra.mxu0 0.0
    %513 = vmatprep.mubr.f32.mxu0 0.0
    %514 = vmatmul.mubr.f32.gmra.mxu0 %v156
    %v515 = vpop.f32.mrf.mxu0
    %v516 = vadd.f32 %v145, %v515
    %v517 = vpop.f32.mrf.mxu0
    %v518 = vadd.f32 %v149, %v517
    %519 = vmatprep.mubr.f32.mxu0 0.0
    %520 = vmatmul.mubr.f32.gmra.mxu0 %v159
    %v521 = vpop.f32.mrf.mxu0
    %v522 = vadd.f32 %v145, %v521
    %v523 = vpop.f32.mrf.mxu0
    %v524 = vadd.f32 %v149, %v523
    %525 = vmatprep.mubr.f32.mxu0 0.0
    %526 = vmatmul.mubr.f32.gmra.mxu0 %v162
    %v527 = vpop.f32.mrf.mxu0
    %v528 = vadd.f32 %v145, %v527
    %v529 = vpop.f32.mrf.mxu0
    %v530 = vadd.f32 %v149, %v529
    %531 = vmatprep.mubr.f32.mxu0 0.0
    %532 = vmatmul.mubr.f32.gmra.mxu0 %v165
    %v533 = vpop.f32.mrf.mxu0
    %v534 = vadd.f32 %v145, %v533
    %v535 = vpop.f32.mrf.mxu0
    %v536 = vadd.f32 %v149, %v535
    %537 = vmatprep.mubr.f32.mxu0 0.0
    %538 = vmatmul.mubr.f32.gmra.mxu0 %v168
    %v539 = vpop.f32.mrf.mxu0
    %v540 = vadd.f32 %v145, %v539
    %v541 = vpop.f32.mrf.mxu0
    %v542 = vadd.f32 %v149, %v541
    %543 = vmatprep.mubr.f32.mxu0 0.0
    %544 = vmatmul.mubr.f32.gmra.mxu0 %v171
    %v545 = vpop.f32.mrf.mxu0
    %v546 = vadd.f32 %v145, %v545
    %v547 = vpop.f32.mrf.mxu0
    %v548 = vadd.f32 %v149, %v547
    %549 = vmatprep.mubr.f32.mxu0 0.0
    %550 = vmatmul.mubr.f32.gmra.mxu0 %v174
    %v551 = vpop.f32.mrf.mxu0
    %v552 = vadd.f32 %v145, %v551
    %v553 = vpop.f32.mrf.mxu0
    %v554 = vadd.f32 %v149, %v553
    %555 = vmatprep.mubr.f32.mxu0 0.0
    %556 = vmatmul.mubr.f32.gmra.mxu0 %v177
    %v557 = vpop.f32.mrf.mxu0
    %v558 = vadd.f32 %v145, %v557
    %v559 = vpop.f32.mrf.mxu0
    %v560 = vadd.f32 %v149, %v559
    %561 = vmatprep.mubr.f32.mxu0 0.0
    %562 = vmatmul.mubr.f32.gmra.mxu0 %v180
    %v563 = vpop.f32.mrf.mxu0
    %v564 = vadd.f32 %v145, %v563
    %v565 = vpop.f32.mrf.mxu0
    %v566 = vadd.f32 %v149, %v565
    %567 = vmatprep.mubr.f32.mxu0 0.0
    %568 = vmatmul.mubr.f32.gmra.mxu0 %v183
    %v569 = vpop.f32.mrf.mxu0
    %v570 = vadd.f32 %v145, %v569
    %v571 = vpop.f32.mrf.mxu0
    %v572 = vadd.f32 %v149, %v571
    %573 = vmatprep.mubr.f32.mxu0 0.0
    %574 = vmatmul.mubr.f32.gmra.mxu0 %v186
    %v575 = vpop.f32.mrf.mxu0
    %v576 = vadd.f32 %v145, %v575
    %v577 = vpop.f32.mrf.mxu0
    %v578 = vadd.f32 %v149, %v577
    %579 = vmatprep.mubr.f32.mxu0 0.0
    %580 = vmatmul.mubr.f32.gmra.mxu0 %v189
    %v581 = vpop.f32.mrf.mxu0
    %v582 = vadd.f32 %v145, %v581
    %v583 = vpop.f32.mrf.mxu0
    %v584 = vadd.f32 %v149, %v583
    %585 = vmatprep.mubr.f32.mxu0 0.0
    %586 = vmatmul.mubr.f32.gmra.mxu0 %v192
    %v587 = vpop.f32.mrf.mxu0
    %v588 = vadd.f32 %v145, %v587
    %v589 = vpop.f32.mrf.mxu0
    %v590 = vadd.f32 %v149, %v589
    %591 = vmatprep.mubr.f32.mxu0 0.0
    %592 = vmatmul.mubr.f32.gmra.mxu0 %v195
    %v593 = vpop.f32.mrf.mxu0
    %v594 = vadd.f32 %v145, %v593
    %v595 = vpop.f32.mrf.mxu0
    %v596 = vadd.f32 %v149, %v595
    %597 = vmatprep.mubr.f32.mxu0 0.0
    %598 = vmatmul.mubr.f32.gmra.mxu0 %v198
    %v599 = vpop.f32.mrf.mxu0
    %v600 = vadd.f32 %v145, %v599
    %v601 = vpop.f32.mrf.mxu0
    %v602 = vadd.f32 %v149, %v601
    %603 = vmatprep.mubr.f32.mxu0 0.0
    %604 = vmatmul.mubr.f32.gmra.mxu0 %v201
    %v605 = vpop.f32.mrf.mxu0
    %v606 = vadd.f32 %v145, %v605
    %v607 = vpop.f32.mrf.mxu0
    %v608 = vadd.f32 %v149, %v607
    %609 = vmatprep.mubr.f32.mxu0 0.0
    %610 = vmatmul.mubr.f32.gmra.mxu0 %v204
    %v611 = vpop.f32.mrf.mxu0
    %v612 = vadd.f32 %v145, %v611
    %v613 = vpop.f32.mrf.mxu0
    %v614 = vadd.f32 %v149, %v613
    %615 = vmatprep.mubr.f32.mxu0 0.0
    %616 = vmatmul.mubr.f32.gmra.mxu0 %v207
    %v617 = vpop.f32.mrf.mxu0
    %v618 = vadd.f32 %v145, %v617
    %v619 = vpop.f32.mrf.mxu0
    %v620 = vadd.f32 %v149, %v619
    %621 = vmatprep.mubr.f32.mxu0 0.0
    %622 = vmatmul.mubr.f32.gmra.mxu0 %v210
    %v623 = vpop.f32.mrf.mxu0
    %v624 = vadd.f32 %v145, %v623
    %v625 = vpop.f32.mrf.mxu0
    %v626 = vadd.f32 %v149, %v625
    %627 = vmatprep.mubr.f32.mxu0 0.0
    %628 = vmatmul.mubr.f32.gmra.mxu0 %v213
    %v629 = vpop.f32.mrf.mxu0
    %v630 = vadd.f32 %v145, %v629
    %v631 = vpop.f32.mrf.mxu0
    %v632 = vadd.f32 %v149, %v631
    %633 = vmatprep.mubr.f32.mxu0 0.0
    %634 = vmatmul.mubr.f32.gmra.mxu0 %v216
    %v635 = vpop.f32.mrf.mxu0
    %v636 = vadd.f32 %v145, %v635
    %v637 = vpop.f32.mrf.mxu0
    %v638 = vadd.f32 %v149, %v637
    %639 = vmatprep.mubr.f32.mxu0 0.0
    %640 = vmatmul.mubr.f32.gmra.mxu0 %v219
    %v641 = vpop.f32.mrf.mxu0
    %v642 = vadd.f32 %v145, %v641
    %v643 = vpop.f32.mrf.mxu0
    %v644 = vadd.f32 %v149, %v643
    %645 = vmatprep.mubr.f32.mxu0 0.0
    %646 = vmatmul.mubr.f32.gmra.mxu0 %v222
    %v647 = vpop.f32.mrf.mxu0
    %v648 = vadd.f32 %v145, %v647
    %v649 = vpop.f32.mrf.mxu0
    %v650 = vadd.f32 %v149, %v649
    %651 = vmatprep.mubr.f32.mxu0 0.0
    %652 = vmatmul.mubr.f32.gmra.mxu0 %v225
    %v653 = vpop.f32.mrf.mxu0
    %v654 = vadd.f32 %v145, %v653
    %v655 = vpop.f32.mrf.mxu0
    %v656 = vadd.f32 %v149, %v655
    %657 = vdwg.mxu0
    %658 = vst [vmem:[#allocation2] sm:$0xff] %v307
    %659 = vst [vmem:[#allocation2 + $0x8] sm:$0xff] %v309
    %660 = vst [vmem:[#allocation2 + $0x10] sm:$0xff] %v516
    %661 = vst [vmem:[#allocation2 + $0x18] sm:$0xff] %v518
    %662 = vst [vmem:[#allocation2 + $0x20] sm:$0xff] %v313
    %663 = vst [vmem:[#allocation2 + $0x28] sm:$0xff] %v315
    %664 = vst [vmem:[#allocation2 + $0x30] sm:$0xff] %v522
    %665 = vst [vmem:[#allocation2 + $0x38] sm:$0xff] %v524
    %666 = vst [vmem:[#allocation2 + $0x40] sm:$0xff] %v319
    %667 = vst [vmem:[#allocation2 + $0x48] sm:$0xff] %v321
    %668 = vst [vmem:[#allocation2 + $0x50] sm:$0xff] %v528
    %669 = vst [vmem:[#allocation2 + $0x58] sm:$0xff] %v530
    %670 = vst [vmem:[#allocation2 + $0x60] sm:$0xff] %v325
    %671 = vst [vmem:[#allocation2 + $0x68] sm:$0xff] %v327
    %672 = vst [vmem:[#allocation2 + $0x70] sm:$0xff] %v534
    %673 = vst [vmem:[#allocation2 + $0x78] sm:$0xff] %v536
    %674 = vst [vmem:[#allocation2 + $0x80] sm:$0xff] %v331
    %675 = vst [vmem:[#allocation2 + $0x88] sm:$0xff] %v333
    %676 = vst [vmem:[#allocation2 + $0x90] sm:$0xff] %v540
    %677 = vst [vmem:[#allocation2 + $0x98] sm:$0xff] %v542
    %678 = vst [vmem:[#allocation2 + $0xa0] sm:$0xff] %v337
    %679 = vst [vmem:[#allocation2 + $0xa8] sm:$0xff] %v339
    %680 = vst [vmem:[#allocation2 + $0xb0] sm:$0xff] %v546
    %681 = vst [vmem:[#allocation2 + $0xb8] sm:$0xff] %v548
    %682 = vst [vmem:[#allocation2 + $0xc0] sm:$0xff] %v343
    %683 = vst [vmem:[#allocation2 + $0xc8] sm:$0xff] %v345
    %684 = vst [vmem:[#allocation2 + $0xd0] sm:$0xff] %v552
    %685 = vst [vmem:[#allocation2 + $0xd8] sm:$0xff] %v554
    %686 = vst [vmem:[#allocation2 + $0xe0] sm:$0xff] %v349
    %687 = vst [vmem:[#allocation2 + $0xe8] sm:$0xff] %v351
    %688 = vst [vmem:[#allocation2 + $0xf0] sm:$0xff] %v558
    %689 = vst [vmem:[#allocation2 + $0xf8] sm:$0xff] %v560
    %690 = vst [vmem:[#allocation2 + $0x100] sm:$0xff] %v355
    %691 = vst [vmem:[#allocation2 + $0x108] sm:$0xff] %v357
    %692 = vst [vmem:[#allocation2 + $0x110] sm:$0xff] %v564
    %693 = vst [vmem:[#allocation2 + $0x118] sm:$0xff] %v566
    %694 = vst [vmem:[#allocation2 + $0x120] sm:$0xff] %v361
    %695 = vst [vmem:[#allocation2 + $0x128] sm:$0xff] %v363
    %696 = vst [vmem:[#allocation2 + $0x130] sm:$0xff] %v570
    %697 = vst [vmem:[#allocation2 + $0x138] sm:$0xff] %v572
    %698 = vst [vmem:[#allocation2 + $0x140] sm:$0xff] %v367
    %699 = vst [vmem:[#allocation2 + $0x148] sm:$0xff] %v369
    %700 = vst [vmem:[#allocation2 + $0x150] sm:$0xff] %v576
    %701 = vst [vmem:[#allocation2 + $0x158] sm:$0xff] %v578
    %702 = vst [vmem:[#allocation2 + $0x160] sm:$0xff] %v373
    %703 = vst [vmem:[#allocation2 + $0x168] sm:$0xff] %v375
    %704 = vst [vmem:[#allocation2 + $0x170] sm:$0xff] %v582
    %705 = vst [vmem:[#allocation2 + $0x178] sm:$0xff] %v584
    %706 = vst [vmem:[#allocation2 + $0x180] sm:$0xff] %v379
    %707 = vst [vmem:[#allocation2 + $0x188] sm:$0xff] %v381
    %708 = vst [vmem:[#allocation2 + $0x190] sm:$0xff] %v588
    %709 = vst [vmem:[#allocation2 + $0x198] sm:$0xff] %v590
    %710 = vst [vmem:[#allocation2 + $0x1a0] sm:$0xff] %v385
    %711 = vst [vmem:[#allocation2 + $0x1a8] sm:$0xff] %v387
    %712 = vst [vmem:[#allocation2 + $0x1b0] sm:$0xff] %v594
    %713 = vst [vmem:[#allocation2 + $0x1b8] sm:$0xff] %v596
    %714 = vst [vmem:[#allocation2 + $0x1c0] sm:$0xff] %v391
    %715 = vst [vmem:[#allocation2 + $0x1c8] sm:$0xff] %v393
    %716 = vst [vmem:[#allocation2 + $0x1d0] sm:$0xff] %v600
    %717 = vst [vmem:[#allocation2 + $0x1d8] sm:$0xff] %v602
    %718 = vst [vmem:[#allocation2 + $0x1e0] sm:$0xff] %v397
    %719 = vst [vmem:[#allocation2 + $0x1e8] sm:$0xff] %v399
    %720 = vst [vmem:[#allocation2 + $0x1f0] sm:$0xff] %v606
    %721 = vst [vmem:[#allocation2 + $0x1f8] sm:$0xff] %v608
    %722 = vst [vmem:[#allocation2 + $0x200] sm:$0xff] %v403
    %723 = vst [vmem:[#allocation2 + $0x208] sm:$0xff] %v405
    %724 = vst [vmem:[#allocation2 + $0x210] sm:$0xff] %v612
    %725 = vst [vmem:[#allocation2 + $0x218] sm:$0xff] %v614
    %726 = vst [vmem:[#allocation2 + $0x220] sm:$0xff] %v409
    %727 = vst [vmem:[#allocation2 + $0x228] sm:$0xff] %v411
    %728 = vst [vmem:[#allocation2 + $0x230] sm:$0xff] %v618
    %729 = vst [vmem:[#allocation2 + $0x238] sm:$0xff] %v620
    %730 = vst [vmem:[#allocation2 + $0x240] sm:$0xff] %v415
    %731 = vst [vmem:[#allocation2 + $0x248] sm:$0xff] %v417
    %732 = vst [vmem:[#allocation2 + $0x250] sm:$0xff] %v624
    %733 = vst [vmem:[#allocation2 + $0x258] sm:$0xff] %v626
    %734 = vst [vmem:[#allocation2 + $0x260] sm:$0xff] %v421
    %735 = vst [vmem:[#allocation2 + $0x268] sm:$0xff] %v423
    %736 = vst [vmem:[#allocation2 + $0x270] sm:$0xff] %v630
    %737 = vst [vmem:[#allocation2 + $0x278] sm:$0xff] %v632
    %738 = vst [vmem:[#allocation2 + $0x280] sm:$0xff] %v427
    %739 = vst [vmem:[#allocation2 + $0x288] sm:$0xff] %v429
    %740 = vst [vmem:[#allocation2 + $0x290] sm:$0xff] %v636
    %741 = vst [vmem:[#allocation2 + $0x298] sm:$0xff] %v638
    %742 = vst [vmem:[#allocation2 + $0x2a0] sm:$0xff] %v433
    %743 = vst [vmem:[#allocation2 + $0x2a8] sm:$0xff] %v435
    %744 = vst [vmem:[#allocation2 + $0x2b0] sm:$0xff] %v642
    %745 = vst [vmem:[#allocation2 + $0x2b8] sm:$0xff] %v644
    %746 = vst [vmem:[#allocation2 + $0x2c0] sm:$0xff] %v439
    %747 = vst [vmem:[#allocation2 + $0x2c8] sm:$0xff] %v441
    %748 = vst [vmem:[#allocation2 + $0x2d0] sm:$0xff] %v648
    %749 = vst [vmem:[#allocation2 + $0x2d8] sm:$0xff] %v650
    %750 = vst [vmem:[#allocation2 + $0x2e0] sm:$0xff] %v445
    %751 = vst [vmem:[#allocation2 + $0x2e8] sm:$0xff] %v447
    %752 = vst [vmem:[#allocation2 + $0x2f0] sm:$0xff] %v654
    %753 = vst [vmem:[#allocation2 + $0x2f8] sm:$0xff] %v656
    %754 = vst [vmem:[#allocation3] sm:$0xff] 0.0
    %755 = vst [vmem:[#allocation3 + $0x8] sm:$0xff] 0.0
    %756 = vst [vmem:[#allocation4] sm:$0xff] 0.0
    %757 = vst [vmem:[#allocation4 + $0x8] sm:$0xff] 0.0
    %758 = vst [vmem:[#allocation5] sm:$0xff] 0.0
    %759 = vst [vmem:[#allocation5 + $0x8] sm:$0xff] 0.0
    %v760 = vld [vmem:[#allocation11] sm:$0xff]
    %v761 = vld [vmem:[#allocation11 + $0x8] sm:$0xff]
    %v762 = vld [vmem:[#allocation11 + $0x10] sm:$0xff]
    %v763 = vld [vmem:[#allocation11 + $0x18] sm:$0xff]
    %v764 = vld [vmem:[#allocation11 + $0x20] sm:$0xff]
    %v765 = vld [vmem:[#allocation11 + $0x28] sm:$0xff]
    %v766 = vld [vmem:[#allocation11 + $0x30] sm:$0xff]
    %v767 = vld [vmem:[#allocation11 + $0x38] sm:$0xff]
    %v768 = vld [vmem:[#allocation11 + $0x40] sm:$0xff]
    %v769 = vld [vmem:[#allocation11 + $0x48] sm:$0xff]
    %v770 = vld [vmem:[#allocation11 + $0x50] sm:$0xff]
    %v771 = vld [vmem:[#allocation11 + $0x58] sm:$0xff]
    %v772 = vld [vmem:[#allocation11 + $0x60] sm:$0xff]
    %v773 = vld [vmem:[#allocation11 + $0x68] sm:$0xff]
    %v774 = vld [vmem:[#allocation11 + $0x70] sm:$0xff]
    %v775 = vld [vmem:[#allocation11 + $0x78] sm:$0xff]
    %v776 = vld [vmem:[#allocation11 + $0x80] sm:$0xff]
    %v777 = vld [vmem:[#allocation11 + $0x88] sm:$0xff]
    %v778 = vld [vmem:[#allocation11 + $0x90] sm:$0xff]
    %v779 = vld [vmem:[#allocation11 + $0x98] sm:$0xff]
    %v780 = vld [vmem:[#allocation11 + $0xa0] sm:$0xff]
    %v781 = vld [vmem:[#allocation11 + $0xa8] sm:$0xff]
    %v782 = vld [vmem:[#allocation11 + $0xb0] sm:$0xff]
    %v783 = vld [vmem:[#allocation11 + $0xb8] sm:$0xff]
    %v784 = vld [vmem:[#allocation11 + $0xc0] sm:$0xff]
    %v785 = vld [vmem:[#allocation11 + $0xc8] sm:$0xff]
    %v786 = vld [vmem:[#allocation11 + $0xd0] sm:$0xff]
    %v787 = vld [vmem:[#allocation11 + $0xd8] sm:$0xff]
    %v788 = vld [vmem:[#allocation11 + $0xe0] sm:$0xff]
    %v789 = vld [vmem:[#allocation11 + $0xe8] sm:$0xff]
    %v790 = vld [vmem:[#allocation11 + $0xf0] sm:$0xff]
    %v791 = vld [vmem:[#allocation11 + $0xf8] sm:$0xff]
    %v792 = vld [vmem:[#allocation11 + $0x100] sm:$0xff]
    %v793 = vld [vmem:[#allocation11 + $0x108] sm:$0xff]
    %v794 = vld [vmem:[#allocation11 + $0x110] sm:$0xff]
    %v795 = vld [vmem:[#allocation11 + $0x118] sm:$0xff]
    %v796 = vld [vmem:[#allocation11 + $0x120] sm:$0xff]
    %v797 = vld [vmem:[#allocation11 + $0x128] sm:$0xff]
    %v798 = vld [vmem:[#allocation11 + $0x130] sm:$0xff]
    %v799 = vld [vmem:[#allocation11 + $0x138] sm:$0xff]
    %v800 = vld [vmem:[#allocation11 + $0x140] sm:$0xff]
    %v801 = vld [vmem:[#allocation11 + $0x148] sm:$0xff]
    %v802 = vld [vmem:[#allocation11 + $0x150] sm:$0xff]
    %v803 = vld [vmem:[#allocation11 + $0x158] sm:$0xff]
    %v804 = vld [vmem:[#allocation11 + $0x160] sm:$0xff]
    %v805 = vld [vmem:[#allocation11 + $0x168] sm:$0xff]
    %v806 = vld [vmem:[#allocation11 + $0x170] sm:$0xff]
    %v807 = vld [vmem:[#allocation11 + $0x178] sm:$0xff]
    %v808 = vld [vmem:[#allocation11 + $0x180] sm:$0xff]
    %v809 = vld [vmem:[#allocation11 + $0x188] sm:$0xff]
    %v810 = vld [vmem:[#allocation11 + $0x190] sm:$0xff]
    %v811 = vld [vmem:[#allocation11 + $0x198] sm:$0xff]
    %v812 = vld [vmem:[#allocation11 + $0x1a0] sm:$0xff]
    %v813 = vld [vmem:[#allocation11 + $0x1a8] sm:$0xff]
    %v814 = vld [vmem:[#allocation11 + $0x1b0] sm:$0xff]
    %v815 = vld [vmem:[#allocation11 + $0x1b8] sm:$0xff]
    %v816 = vld [vmem:[#allocation11 + $0x1c0] sm:$0xff]
    %v817 = vld [vmem:[#allocation11 + $0x1c8] sm:$0xff]
    %v818 = vld [vmem:[#allocation11 + $0x1d0] sm:$0xff]
    %v819 = vld [vmem:[#allocation11 + $0x1d8] sm:$0xff]
    %v820 = vld [vmem:[#allocation11 + $0x1e0] sm:$0xff]
    %v821 = vld [vmem:[#allocation11 + $0x1e8] sm:$0xff]
    %v822 = vld [vmem:[#allocation11 + $0x1f0] sm:$0xff]
    %v823 = vld [vmem:[#allocation11 + $0x1f8] sm:$0xff]
    %v824 = vld [vmem:[#allocation2] sm:$0xff]
    %v825 = vld [vmem:[#allocation2 + $0x8] sm:$0xff]
    %v826 = vld [vmem:[#allocation2 + $0x10] sm:$0xff]
    %v827 = vld [vmem:[#allocation2 + $0x18] sm:$0xff]
    %v828 = vld [vmem:[#allocation2 + $0x20] sm:$0xff]
    %v829 = vld [vmem:[#allocation2 + $0x28] sm:$0xff]
    %v830 = vld [vmem:[#allocation2 + $0x30] sm:$0xff]
    %v831 = vld [vmem:[#allocation2 + $0x38] sm:$0xff]
    %v832 = vld [vmem:[#allocation3] sm:$0xff]
    %v833 = vld [vmem:[#allocation3 + $0x8] sm:$0xff]
    %834 = vmatprep.subr.mxu0 %v821
    %835 = vmatpush1.msra.mxu0 %v820
    %836 = vmatprep.subr.mxu0 %v817
    %837 = vmatpush1.msra.mxu0 %v816
    %838 = vmatprep.subr.mxu0 %v813
    %839 = vmatpush1.msra.mxu0 %v812
    %840 = vmatprep.subr.mxu0 %v809
    %841 = vmatpush1.msra.mxu0 %v808
    %842 = vmatprep.subr.mxu0 %v805
    %843 = vmatpush1.msra.mxu0 %v804
    %844 = vmatprep.subr.mxu0 %v801
    %845 = vmatpush1.msra.mxu0 %v800
    %846 = vmatprep.subr.mxu0 %v797
    %847 = vmatpush1.msra.mxu0 %v796
    %848 = vmatprep.subr.mxu0 %v793
    %849 = vmatpush1.msra.mxu0 %v792
    %850 = vmatprep.subr.mxu0 %v789
    %851 = vmatpush1.msra.mxu0 %v788
    %852 = vmatprep.subr.mxu0 %v785
    %853 = vmatpush1.msra.mxu0 %v784
    %854 = vmatprep.subr.mxu0 %v781
    %855 = vmatpush1.msra.mxu0 %v780
    %856 = vmatprep.subr.mxu0 %v777
    %857 = vmatpush1.msra.mxu0 %v776
    %858 = vmatprep.subr.mxu0 %v773
    %859 = vmatpush1.msra.mxu0 %v772
    %860 = vmatprep.subr.mxu0 %v769
    %861 = vmatpush1.msra.mxu0 %v768
    %862 = vmatprep.subr.mxu0 %v765
    %863 = vmatpush1.msra.mxu0 %v764
    %864 = vmatprep.subr.mxu0 %v761
    %865 = vmatpush1.msra.mxu0 %v760
    %866 = vmatprep.subr.mxu0 0.0
    %867 = vmatpush2.msra.mxu0 0.0
    %868 = vmatprep.subr.mxu0 0.0
    %869 = vmatpush2.msra.mxu0 0.0
    %870 = vmatprep.subr.mxu0 0.0
    %871 = vmatpush2.msra.mxu0 0.0
    %872 = vmatprep.subr.mxu0 0.0
    %873 = vmatpush2.msra.mxu0 0.0
    %874 = vmatprep.subr.mxu0 0.0
    %875 = vmatpush2.msra.mxu0 0.0
    %876 = vmatprep.subr.mxu0 0.0
    %877 = vmatpush2.msra.mxu0 0.0
    %878 = vmatprep.subr.mxu0 0.0
    %879 = vmatpush2.msra.mxu0 0.0
    %880 = vmatprep.subr.mxu0 0.0
    %881 = vmatpush2.msra.mxu0 0.0
    %882 = vmatprep.subr.mxu0 0.0
    %883 = vmatpush2.msra.mxu0 0.0
    %884 = vmatprep.subr.mxu0 0.0
    %885 = vmatpush2.msra.mxu0 0.0
    %886 = vmatprep.subr.mxu0 0.0
    %887 = vmatpush2.msra.mxu0 0.0
    %888 = vmatprep.subr.mxu0 0.0
    %889 = vmatpush2.msra.mxu0 0.0
    %890 = vmatprep.subr.mxu0 0.0
    %891 = vmatpush2.msra.mxu0 0.0
    %892 = vmatprep.subr.mxu0 0.0
    %893 = vmatpush2.msra.mxu0 0.0
    %894 = vmatprep.subr.mxu0 0.0
    %895 = vmatpush2.msra.mxu0 0.0
    %896 = vmatprep.subr.mxu0 0.0
    %897 = vmatpush2.msra.mxu0 0.0
    %898 = vmatprep.mubr.f32.mxu0 0.0
    %899 = vmatmul.mubr.f32.gmra.mxu0 %v832
    %v900 = vpop.f32.mrf.mxu0
    %v901 = vadd.f32 0.0, %v900
    %v902 = vpop.f32.mrf.mxu0
    %v903 = vadd.f32 0.0, %v902
    %904 = vmatprep.mubr.f32.mxu0 0.0
    %905 = vmatmul.mubr.f32.gmra.mxu0 %v833
    %v906 = vpop.f32.mrf.mxu0
    %v907 = vadd.f32 0.0, %v906
    %v908 = vpop.f32.mrf.mxu0
    %v909 = vadd.f32 0.0, %v908
    %910 = vdwg.mxu0
    %911 = vmatprep.subr.mxu0 %v823
    %912 = vmatpush1.msra.mxu0 %v822
    %913 = vmatprep.subr.mxu0 %v819
    %914 = vmatpush1.msra.mxu0 %v818
    %915 = vmatprep.subr.mxu0 %v815
    %916 = vmatpush1.msra.mxu0 %v814
    %917 = vmatprep.subr.mxu0 %v811
    %918 = vmatpush1.msra.mxu0 %v810
    %919 = vmatprep.subr.mxu0 %v807
    %920 = vmatpush1.msra.mxu0 %v806
    %921 = vmatprep.subr.mxu0 %v803
    %922 = vmatpush1.msra.mxu0 %v802
    %923 = vmatprep.subr.mxu0 %v799
    %924 = vmatpush1.msra.mxu0 %v798
    %925 = vmatprep.subr.mxu0 %v795
    %926 = vmatpush1.msra.mxu0 %v794
    %927 = vmatprep.subr.mxu0 %v791
    %928 = vmatpush1.msra.mxu0 %v790
    %929 = vmatprep.subr.mxu0 %v787
    %930 = vmatpush1.msra.mxu0 %v786
    %931 = vmatprep.subr.mxu0 %v783
    %932 = vmatpush1.msra.mxu0 %v782
    %933 = vmatprep.subr.mxu0 %v779
    %934 = vmatpush1.msra.mxu0 %v778
    %935 = vmatprep.subr.mxu0 %v775
    %936 = vmatpush1.msra.mxu0 %v774
    %937 = vmatprep.subr.mxu0 %v771
    %938 = vmatpush1.msra.mxu0 %v770
    %939 = vmatprep.subr.mxu0 %v767
    %940 = vmatpush1.msra.mxu0 %v766
    %941 = vmatprep.subr.mxu0 %v763
    %942 = vmatpush1.msra.mxu0 %v762
    %943 = vmatprep.subr.mxu0 0.0
    %944 = vmatpush2.msra.mxu0 0.0
    %945 = vmatprep.subr.mxu0 0.0
    %946 = vmatpush2.msra.mxu0 0.0
    %947 = vmatprep.subr.mxu0 0.0
    %948 = vmatpush2.msra.mxu0 0.0
    %949 = vmatprep.subr.mxu0 0.0
    %950 = vmatpush2.msra.mxu0 0.0
    %951 = vmatprep.subr.mxu0 0.0
    %952 = vmatpush2.msra.mxu0 0.0
    %953 = vmatprep.subr.mxu0 0.0
    %954 = vmatpush2.msra.mxu0 0.0
    %955 = vmatprep.subr.mxu0 0.0
    %956 = vmatpush2.msra.mxu0 0.0
    %957 = vmatprep.subr.mxu0 0.0
    %958 = vmatpush2.msra.mxu0 0.0
    %959 = vmatprep.subr.mxu0 0.0
    %960 = vmatpush2.msra.mxu0 0.0
    %961 = vmatprep.subr.mxu0 0.0
    %962 = vmatpush2.msra.mxu0 0.0
    %963 = vmatprep.subr.mxu0 0.0
    %964 = vmatpush2.msra.mxu0 0.0
    %965 = vmatprep.subr.mxu0 0.0
    %966 = vmatpush2.msra.mxu0 0.0
    %967 = vmatprep.subr.mxu0 0.0
    %968 = vmatpush2.msra.mxu0 0.0
    %969 = vmatprep.subr.mxu0 0.0
    %970 = vmatpush2.msra.mxu0 0.0
    %971 = vmatprep.subr.mxu0 0.0
    %972 = vmatpush2.msra.mxu0 0.0
    %973 = vmatprep.subr.mxu0 0.0
    %974 = vmatpush2.msra.mxu0 0.0
    %975 = vmatprep.mubr.f32.mxu0 0.0
    %976 = vmatmul.mubr.f32.gmra.mxu0 %v832
    %v977 = vpop.f32.mrf.mxu0
    %v978 = vadd.f32 0.0, %v977
    %v979 = vpop.f32.mrf.mxu0
    %v980 = vadd.f32 0.0, %v979
    %981 = vmatprep.mubr.f32.mxu0 0.0
    %982 = vmatmul.mubr.f32.gmra.mxu0 %v833
    %v983 = vpop.f32.mrf.mxu0
    %v984 = vadd.f32 0.0, %v983
    %v985 = vpop.f32.mrf.mxu0
    %v986 = vadd.f32 0.0, %v985
    %987 = vdwg.mxu0
    %v988 = vadd.f32 %v824, %v901
    %v989 = vadd.f32 %v825, %v903
    %v990 = vadd.f32 %v826, %v978
    %v991 = vadd.f32 %v827, %v980
    %v992 = vadd.f32 %v828, %v907
    %v993 = vadd.f32 %v829, %v909
    %v994 = vadd.f32 %v830, %v984
    %v995 = vadd.f32 %v831, %v986
    %v996 = vxor.u32 %v988, 2147483648
    %v997 = vxor.u32 %v989, 2147483648
    %v998 = vxor.u32 %v990, 2147483648
    %v999 = vxor.u32 %v992, 2147483648
    %v1000 = vxor.u32 %v993, 2147483648
    %v1001 = vxor.u32 %v994, 2147483648
    %v1002 = vmul.f32 %v996, 1.442695
    %v1003 = vpow.pop %v1002
    %v1004 = vmul.f32 %v997, 1.442695
    %v1005 = vpow.pop %v1004
    %v1006 = vmul.f32 %v998, 1.442695
    %v1007 = vpow.pop %v1006
    %v1008 = vmul.f32 %v999, 1.442695
    %v1009 = vpow.pop %v1008
    %v1010 = vmul.f32 %v1000, 1.442695
    %v1011 = vpow.pop %v1010
    %v1012 = vmul.f32 %v1001, 1.442695
    %v1013 = vpow.pop %v1012
    %v1014 = vadd.f32 %v1003, 1.0
    %v1015 = vadd.f32 %v1005, 1.0
    %v1016 = vadd.f32 %v1007, 1.0
    %v1017 = vadd.f32 %v1009, 1.0
    %v1018 = vadd.f32 %v1011, 1.0
    %v1019 = vadd.f32 %v1013, 1.0
    %v1020 = vrcp.pop %v1014
    %v1021 = vmul.f32 1.0, %v1020
    %v1022 = vrcp.pop %v1015
    %v1023 = vmul.f32 1.0, %v1022
    %v1024 = vrcp.pop %v1016
    %v1025 = vmul.f32 1.0, %v1024
    %v1026 = vrcp.pop %v1017
    %v1027 = vmul.f32 1.0, %v1026
    %v1028 = vrcp.pop %v1018
    %v1029 = vmul.f32 1.0, %v1028
    %v1030 = vrcp.pop %v1019
    %v1031 = vmul.f32 1.0, %v1030
    %v1032 = vtanh.pop %v991
    %v1033 = vtanh.pop %v995
    %v1034 = vld [vmem:[#allocation4] sm:$0xff]
    %v1035 = vld [vmem:[#allocation4 + $0x8] sm:$0xff]
    %v1036 = vmul.f32 %v1023, %v1034
    %v1037 = vmul.f32 %v1029, %v1035
    %v1038 = vmul.f32 %v1021, %v1032
    %v1039 = vmul.f32 %v1027, %v1033
    %v1040 = vadd.f32 %v1036, %v1038
    %v1041 = vadd.f32 %v1037, %v1039
    %v1042 = vtanh.pop %v1040
    %v1043 = vtanh.pop %v1041
    %v1044 = vmul.f32 %v1025, %v1042
    %v1045 = vmul.f32 %v1031, %v1043
    %1046 = vst [vmem:[#allocation4] sm:$0xff] %v1040
    %1047 = vst [vmem:[#allocation4 + $0x8] sm:$0xff] %v1041
    %1048 = vst [vmem:[#allocation3] sm:$0xff] %v1044
    %1049 = vst [vmem:[#allocation3 + $0x8] sm:$0xff] %v1045
    %v1050 = vld [vmem:[#allocation5] sm:$0xff]
    %v1051 = vld [vmem:[#allocation5 + $0x8] sm:$0xff]
    %s1052 = sld [smem:[#allocation12]]
    %v1053 = vstv %s1052
    %v1054 = vmul.f32 %v1044, %v1053
    %v1055 = vmul.f32 %v1045, %v1053
    %v1056 = vadd.f32 %v1050, %v1054
    %v1057 = vadd.f32 %v1051, %v1055
    %1058 = vst [vmem:[#allocation5] sm:$0xff] %v1056
    %1059 = vst [vmem:[#allocation5 + $0x8] sm:$0xff] %v1057
    %v1060 = vld [vmem:[#allocation2 + $0x40] sm:$0xff]
    %v1061 = vld [vmem:[#allocation2 + $0x48] sm:$0xff]
    %v1062 = vld [vmem:[#allocation2 + $0x50] sm:$0xff]
    %v1063 = vld [vmem:[#allocation2 + $0x58] sm:$0xff]
    %v1064 = vld [vmem:[#allocation2 + $0x60] sm:$0xff]
    %v1065 = vld [vmem:[#allocation2 + $0x68] sm:$0xff]
    %v1066 = vld [vmem:[#allocation2 + $0x70] sm:$0xff]
    %v1067 = vld [vmem:[#allocation2 + $0x78] sm:$0xff]
    %v1068 = vld [vmem:[#allocation3] sm:$0xff]
    %v1069 = vld [vmem:[#allocation3 + $0x8] sm:$0xff]
    %1070 = vmatprep.subr.mxu0 %v821
    %1071 = vmatpush1.msra.mxu0 %v820
    %1072 = vmatprep.subr.mxu0 %v817
    %1073 = vmatpush1.msra.mxu0 %v816
    %1074 = vmatprep.subr.mxu0 %v813
    %1075 = vmatpush1.msra.mxu0 %v812
    %1076 = vmatprep.subr.mxu0 %v809
    %1077 = vmatpush1.msra.mxu0 %v808
    %1078 = vmatprep.subr.mxu0 %v805
    %1079 = vmatpush1.msra.mxu0 %v804
    %1080 = vmatprep.subr.mxu0 %v801
    %1081 = vmatpush1.msra.mxu0 %v800
    %1082 = vmatprep.subr.mxu0 %v797
    %1083 = vmatpush1.msra.mxu0 %v796
    %1084 = vmatprep.subr.mxu0 %v793
    %1085 = vmatpush1.msra.mxu0 %v792
    %1086 = vmatprep.subr.mxu0 %v789
    %1087 = vmatpush1.msra.mxu0 %v788
    %1088 = vmatprep.subr.mxu0 %v785
    %1089 = vmatpush1.msra.mxu0 %v784
    %1090 = vmatprep.subr.mxu0 %v781
    %1091 = vmatpush1.msra.mxu0 %v780
    %1092 = vmatprep.subr.mxu0 %v777
    %1093 = vmatpush1.msra.mxu0 %v776
    %1094 = vmatprep.subr.mxu0 %v773
    %1095 = vmatpush1.msra.mxu0 %v772
    %1096 = vmatprep.subr.mxu0 %v769
    %1097 = vmatpush1.msra.mxu0 %v768
    %1098 = vmatprep.subr.mxu0 %v765
    %1099 = vmatpush1.msra.mxu0 %v764
    %1100 = vmatprep.subr.mxu0 %v761
    %1101 = vmatpush1.msra.mxu0 %v760
    %1102 = vmatprep.subr.mxu0 0.0
    %1103 = vmatpush2.msra.mxu0 0.0
    %1104 = vmatprep.subr.mxu0 0.0
    %1105 = vmatpush2.msra.mxu0 0.0
    %1106 = vmatprep.subr.mxu0 0.0
    %1107 = vmatpush2.msra.mxu0 0.0
    %1108 = vmatprep.subr.mxu0 0.0
    %1109 = vmatpush2.msra.mxu0 0.0
    %1110 = vmatprep.subr.mxu0 0.0
    %1111 = vmatpush2.msra.mxu0 0.0
    %1112 = vmatprep.subr.mxu0 0.0
    %1113 = vmatpush2.msra.mxu0 0.0
    %1114 = vmatprep.subr.mxu0 0.0
    %1115 = vmatpush2.msra.mxu0 0.0
    %1116 = vmatprep.subr.mxu0 0.0
    %1117 = vmatpush2.msra.mxu0 0.0
    %1118 = vmatprep.subr.mxu0 0.0
    %1119 = vmatpush2.msra.mxu0 0.0
    %1120 = vmatprep.subr.mxu0 0.0
    %1121 = vmatpush2.msra.mxu0 0.0
    %1122 = vmatprep.subr.mxu0 0.0
    %1123 = vmatpush2.msra.mxu0 0.0
    %1124 = vmatprep.subr.mxu0 0.0
    %1125 = vmatpush2.msra.mxu0 0.0
    %1126 = vmatprep.subr.mxu0 0.0
    %1127 = vmatpush2.msra.mxu0 0.0
    %1128 = vmatprep.subr.mxu0 0.0
    %1129 = vmatpush2.msra.mxu0 0.0
    %1130 = vmatprep.subr.mxu0 0.0
    %1131 = vmatpush2.msra.mxu0 0.0
    %1132 = vmatprep.subr.mxu0 0.0
    %1133 = vmatpush2.msra.mxu0 0.0
    %1134 = vmatprep.mubr.f32.mxu0 0.0
    %1135 = vmatmul.mubr.f32.gmra.mxu0 %v1068
    %v1136 = vpop.f32.mrf.mxu0
    %v1137 = vadd.f32 0.0, %v1136
    %v1138 = vpop.f32.mrf.mxu0
    %v1139 = vadd.f32 0.0, %v1138
    %1140 = vmatprep.mubr.f32.mxu0 0.0
    %1141 = vmatmul.mubr.f32.gmra.mxu0 %v1069
    %v1142 = vpop.f32.mrf.mxu0
    %v1143 = vadd.f32 0.0, %v1142
    %v1144 = vpop.f32.mrf.mxu0
    %v1145 = vadd.f32 0.0, %v1144
    %1146 = vdwg.mxu0
    %1147 = vmatprep.subr.mxu0 %v823
    %1148 = vmatpush1.msra.mxu0 %v822
    %1149 = vmatprep.subr.mxu0 %v819
    %1150 = vmatpush1.msra.mxu0 %v818
    %1151 = vmatprep.subr.mxu0 %v815
    %1152 = vmatpush1.msra.mxu0 %v814
    %1153 = vmatprep.subr.mxu0 %v811
    %1154 = vmatpush1.msra.mxu0 %v810
    %1155 = vmatprep.subr.mxu0 %v807
    %1156 = vmatpush1.msra.mxu0 %v806
    %1157 = vmatprep.subr.mxu0 %v803
    %1158 = vmatpush1.msra.mxu0 %v802
    %1159 = vmatprep.subr.mxu0 %v799
    %1160 = vmatpush1.msra.mxu0 %v798
    %1161 = vmatprep.subr.mxu0 %v795
    %1162 = vmatpush1.msra.mxu0 %v794
    %1163 = vmatprep.subr.mxu0 %v791
    %1164 = vmatpush1.msra.mxu0 %v790
    %1165 = vmatprep.subr.mxu0 %v787
    %1166 = vmatpush1.msra.mxu0 %v786
    %1167 = vmatprep.subr.mxu0 %v783
    %1168 = vmatpush1.msra.mxu0 %v782
    %1169 = vmatprep.subr.mxu0 %v779
    %1170 = vmatpush1.msra.mxu0 %v778
    %1171 = vmatprep.subr.mxu0 %v775
    %1172 = vmatpush1.msra.mxu0 %v774
    %1173 = vmatprep.subr.mxu0 %v771
    %1174 = vmatpush1.msra.mxu0 %v770
    %1175 = vmatprep.subr.mxu0 %v767
    %1176 = vmatpush1.msra.mxu0 %v766
    %1177 = vmatprep.subr.mxu0 %v763
    %1178 = vmatpush1.msra.mxu0 %v762
    %1179 = vmatprep.subr.mxu0 0.0
    %1180 = vmatpush2.msra.mxu0 0.0
    %1181 = vmatprep.subr.mxu0 0.0
    %1182 = vmatpush2.msra.mxu0 0.0
    %1183 = vmatprep.subr.mxu0 0.0
    %1184 = vmatpush2.msra.mxu0 0.0
    %1185 = vmatprep.subr.mxu0 0.0
    %1186 = vmatpush2.msra.mxu0 0.0
    %1187 = vmatprep.subr.mxu0 0.0
    %1188 = vmatpush2.msra.mxu0 0.0
    %1189 = vmatprep.subr.mxu0 0.0
    %1190 = vmatpush2.msra.mxu0 0.0
    %1191 = vmatprep.subr.mxu0 0.0
    %1192 = vmatpush2.msra.mxu0 0.0
    %1193 = vmatprep.subr.mxu0 0.0
    %1194 = vmatpush2.msra.mxu0 0.0
    %1195 = vmatprep.subr.mxu0 0.0
    %1196 = vmatpush2.msra.mxu0 0.0
    %1197 = vmatprep.subr.mxu0 0.0
    %1198 = vmatpush2.msra.mxu0 0.0
    %1199 = vmatprep.subr.mxu0 0.0
    %1200 = vmatpush2.msra.mxu0 0.0
    %1201 = vmatprep.subr.mxu0 0.0
    %1202 = vmatpush2.msra.mxu0 0.0
    %1203 = vmatprep.subr.mxu0 0.0
    %1204 = vmatpush2.msra.mxu0 0.0
    %1205 = vmatprep.subr.mxu0 0.0
    %1206 = vmatpush2.msra.mxu0 0.0
    %1207 = vmatprep.subr.mxu0 0.0
    %1208 = vmatpush2.msra.mxu0 0.0
    %1209 = vmatprep.subr.mxu0 0.0
    %1210 = vmatpush2.msra.mxu0 0.0
    %1211 = vmatprep.mubr.f32.mxu0 0.0
    %1212 = vmatmul.mubr.f32.gmra.mxu0 %v1068
    %v1213 = vpop.f32.mrf.mxu0
    %v1214 = vadd.f32 0.0, %v1213
    %v1215 = vpop.f32.mrf.mxu0
    %v1216 = vadd.f32 0.0, %v1215
    %1217 = vmatprep.mubr.f32.mxu0 0.0
    %1218 = vmatmul.mubr.f32.gmra.mxu0 %v1069
    %v1219 = vpop.f32.mrf.mxu0
    %v1220 = vadd.f32 0.0, %v1219
    %v1221 = vpop.f32.mrf.mxu0
    %v1222 = vadd.f32 0.0, %v1221
    %1223 = vdwg.mxu0
    %v1224 = vadd.f32 %v1060, %v1137
    %v1225 = vadd.f32 %v1061, %v1139
    %v1226 = vadd.f32 %v1062, %v1214
    %v1227 = vadd.f32 %v1063, %v1216
    %v1228 = vadd.f32 %v1064, %v1143
    %v1229 = vadd.f32 %v1065, %v1145
    %v1230 = vadd.f32 %v1066, %v1220
    %v1231 = vadd.f32 %v1067, %v1222
    %v1232 = vxor.u32 %v1224, 2147483648
    %v1233 = vxor.u32 %v1225, 2147483648
    %v1234 = vxor.u32 %v1226, 2147483648
    %v1235 = vxor.u32 %v1228, 2147483648
    %v1236 = vxor.u32 %v1229, 2147483648
    %v1237 = vxor.u32 %v1230, 2147483648
    %v1238 = vmul.f32 %v1232, 1.442695
    %v1239 = vpow.pop %v1238
    %v1240 = vmul.f32 %v1233, 1.442695
    %v1241 = vpow.pop %v1240
    %v1242 = vmul.f32 %v1234, 1.442695
    %v1243 = vpow.pop %v1242
    %v1244 = vmul.f32 %v1235, 1.442695
    %v1245 = vpow.pop %v1244
    %v1246 = vmul.f32 %v1236, 1.442695
    %v1247 = vpow.pop %v1246
    %v1248 = vmul.f32 %v1237, 1.442695
    %v1249 = vpow.pop %v1248
    %v1250 = vadd.f32 %v1239, 1.0
    %v1251 = vadd.f32 %v1241, 1.0
    %v1252 = vadd.f32 %v1243, 1.0
    %v1253 = vadd.f32 %v1245, 1.0
    %v1254 = vadd.f32 %v1247, 1.0
    %v1255 = vadd.f32 %v1249, 1.0
    %v1256 = vrcp.pop %v1250
    %v1257 = vmul.f32 1.0, %v1256
    %v1258 = vrcp.pop %v1251
    %v1259 = vmul.f32 1.0, %v1258
    %v1260 = vrcp.pop %v1252
    %v1261 = vmul.f32 1.0, %v1260
    %v1262 = vrcp.pop %v1253
    %v1263 = vmul.f32 1.0, %v1262
    %v1264 = vrcp.pop %v1254
    %v1265 = vmul.f32 1.0, %v1264
    %v1266 = vrcp.pop %v1255
    %v1267 = vmul.f32 1.0, %v1266
    %v1268 = vtanh.pop %v1227
    %v1269 = vtanh.pop %v1231
    %v1270 = vld [vmem:[#allocation4] sm:$0xff]
    %v1271 = vld [vmem:[#allocation4 + $0x8] sm:$0xff]
    %v1272 = vmul.f32 %v1259, %v1270
    %v1273 = vmul.f32 %v1265, %v1271
    %v1274 = vmul.f32 %v1257, %v1268
    %v1275 = vmul.f32 %v1263, %v1269
    %v1276 = vadd.f32 %v1272, %v1274
    %v1277 = vadd.f32 %v1273, %v1275
    %v1278 = vtanh.pop %v1276
    %v1279 = vtanh.pop %v1277
    %v1280 = vmul.f32 %v1261, %v1278
    %v1281 = vmul.f32 %v1267, %v1279
    %1282 = vst [vmem:[#allocation4] sm:$0xff] %v1276
    %1283 = vst [vmem:[#allocation4 + $0x8] sm:$0xff] %v1277
    %1284 = vst [vmem:[#allocation3] sm:$0xff] %v1280
    %1285 = vst [vmem:[#allocation3 + $0x8] sm:$0xff] %v1281
    %v1286 = vld [vmem:[#allocation5] sm:$0xff]
    %v1287 = vld [vmem:[#allocation5 + $0x8] sm:$0xff]
    %s1288 = sld [smem:[#allocation12 + $0x1]]
    %v1289 = vstv %s1288
    %v1290 = vmul.f32 %v1280, %v1289
    %v1291 = vmul.f32 %v1281, %v1289
    %v1292 = vadd.f32 %v1286, %v1290
    %v1293 = vadd.f32 %v1287, %v1291
    %1294 = vst [vmem:[#allocation5] sm:$0xff] %v1292
    %1295 = vst [vmem:[#allocation5 + $0x8] sm:$0xff] %v1293
    %v1296 = vld [vmem:[#allocation2 + $0x80] sm:$0xff]
    %v1297 = vld [vmem:[#allocation2 + $0x88] sm:$0xff]
    %v1298 = vld [vmem:[#allocation2 + $0x90] sm:$0xff]
    %v1299 = vld [vmem:[#allocation2 + $0x98] sm:$0xff]
    %v1300 = vld [vmem:[#allocation2 + $0xa0] sm:$0xff]
    %v1301 = vld [vmem:[#allocation2 + $0xa8] sm:$0xff]
    %v1302 = vld [vmem:[#allocation2 + $0xb0] sm:$0xff]
    %v1303 = vld [vmem:[#allocation2 + $0xb8] sm:$0xff]
    %v1304 = vld [vmem:[#allocation3] sm:$0xff]
    %v1305 = vld [vmem:[#allocation3 + $0x8] sm:$0xff]
    %1306 = vmatprep.subr.mxu0 %v821
    %1307 = vmatpush1.msra.mxu0 %v820
    %1308 = vmatprep.subr.mxu0 %v817
    %1309 = vmatpush1.msra.mxu0 %v816
    %1310 = vmatprep.subr.mxu0 %v813
    %1311 = vmatpush1.msra.mxu0 %v812
    %1312 = vmatprep.subr.mxu0 %v809
    %1313 = vmatpush1.msra.mxu0 %v808
    %1314 = vmatprep.subr.mxu0 %v805
    %1315 = vmatpush1.msra.mxu0 %v804
    %1316 = vmatprep.subr.mxu0 %v801
    %1317 = vmatpush1.msra.mxu0 %v800
    %1318 = vmatprep.subr.mxu0 %v797
    %1319 = vmatpush1.msra.mxu0 %v796
    %1320 = vmatprep.subr.mxu0 %v793
    %1321 = vmatpush1.msra.mxu0 %v792
    %1322 = vmatprep.subr.mxu0 %v789
    %1323 = vmatpush1.msra.mxu0 %v788
    %1324 = vmatprep.subr.mxu0 %v785
    %1325 = vmatpush1.msra.mxu0 %v784
    %1326 = vmatprep.subr.mxu0 %v781
    %1327 = vmatpush1.msra.mxu0 %v780
    %1328 = vmatprep.subr.mxu0 %v777
    %1329 = vmatpush1.msra.mxu0 %v776
    %1330 = vmatprep.subr.mxu0 %v773
    %1331 = vmatpush1.msra.mxu0 %v772
    %1332 = vmatprep.subr.mxu0 %v769
    %1333 = vmatpush1.msra.mxu0 %v768
    %1334 = vmatprep.subr.mxu0 %v765
    %1335 = vmatpush1.msra.mxu0 %v764
    %1336 = vmatprep.subr.mxu0 %v761
    %1337 = vmatpush1.msra.mxu0 %v760
    %1338 = vmatprep.subr.mxu0 0.0
    %1339 = vmatpush2.msra.mxu0 0.0
    %1340 = vmatprep.subr.mxu0 0.0
    %1341 = vmatpush2.msra.mxu0 0.0
    %1342 = vmatprep.subr.mxu0 0.0
    %1343 = vmatpush2.msra.mxu0 0.0
    %1344 = vmatprep.subr.mxu0 0.0
    %1345 = vmatpush2.msra.mxu0 0.0
    %1346 = vmatprep.subr.mxu0 0.0
    %1347 = vmatpush2.msra.mxu0 0.0
    %1348 = vmatprep.subr.mxu0 0.0
    %1349 = vmatpush2.msra.mxu0 0.0
    %1350 = vmatprep.subr.mxu0 0.0
    %1351 = vmatpush2.msra.mxu0 0.0
    %1352 = vmatprep.subr.mxu0 0.0
    %1353 = vmatpush2.msra.mxu0 0.0
    %1354 = vmatprep.subr.mxu0 0.0
    %1355 = vmatpush2.msra.mxu0 0.0
    %1356 = vmatprep.subr.mxu0 0.0
    %1357 = vmatpush2.msra.mxu0 0.0
    %1358 = vmatprep.subr.mxu0 0.0
    %1359 = vmatpush2.msra.mxu0 0.0
    %1360 = vmatprep.subr.mxu0 0.0
    %1361 = vmatpush2.msra.mxu0 0.0
    %1362 = vmatprep.subr.mxu0 0.0
    %1363 = vmatpush2.msra.mxu0 0.0
    %1364 = vmatprep.subr.mxu0 0.0
    %1365 = vmatpush2.msra.mxu0 0.0
    %1366 = vmatprep.subr.mxu0 0.0
    %1367 = vmatpush2.msra.mxu0 0.0
    %1368 = vmatprep.subr.mxu0 0.0
    %1369 = vmatpush2.msra.mxu0 0.0
    %1370 = vmatprep.mubr.f32.mxu0 0.0
    %1371 = vmatmul.mubr.f32.gmra.mxu0 %v1304
    %v1372 = vpop.f32.mrf.mxu0
    %v1373 = vadd.f32 0.0, %v1372
    %v1374 = vpop.f32.mrf.mxu0
    %v1375 = vadd.f32 0.0, %v1374
    %1376 = vmatprep.mubr.f32.mxu0 0.0
    %1377 = vmatmul.mubr.f32.gmra.mxu0 %v1305
    %v1378 = vpop.f32.mrf.mxu0
    %v1379 = vadd.f32 0.0, %v1378
    %v1380 = vpop.f32.mrf.mxu0
    %v1381 = vadd.f32 0.0, %v1380
    %1382 = vdwg.mxu0
    %1383 = vmatprep.subr.mxu0 %v823
    %1384 = vmatpush1.msra.mxu0 %v822
    %1385 = vmatprep.subr.mxu0 %v819
    %1386 = vmatpush1.msra.mxu0 %v818
    %1387 = vmatprep.subr.mxu0 %v815
    %1388 = vmatpush1.msra.mxu0 %v814
    %1389 = vmatprep.subr.mxu0 %v811
    %1390 = vmatpush1.msra.mxu0 %v810
    %1391 = vmatprep.subr.mxu0 %v807
    %1392 = vmatpush1.msra.mxu0 %v806
    %1393 = vmatprep.subr.mxu0 %v803
    %1394 = vmatpush1.msra.mxu0 %v802
    %1395 = vmatprep.subr.mxu0 %v799
    %1396 = vmatpush1.msra.mxu0 %v798
    %1397 = vmatprep.subr.mxu0 %v795
    %1398 = vmatpush1.msra.mxu0 %v794
    %1399 = vmatprep.subr.mxu0 %v791
    %1400 = vmatpush1.msra.mxu0 %v790
    %1401 = vmatprep.subr.mxu0 %v787
    %1402 = vmatpush1.msra.mxu0 %v786
    %1403 = vmatprep.subr.mxu0 %v783
    %1404 = vmatpush1.msra.mxu0 %v782
    %1405 = vmatprep.subr.mxu0 %v779
    %1406 = vmatpush1.msra.mxu0 %v778
    %1407 = vmatprep.subr.mxu0 %v775
    %1408 = vmatpush1.msra.mxu0 %v774
    %1409 = vmatprep.subr.mxu0 %v771
    %1410 = vmatpush1.msra.mxu0 %v770
    %1411 = vmatprep.subr.mxu0 %v767
    %1412 = vmatpush1.msra.mxu0 %v766
    %1413 = vmatprep.subr.mxu0 %v763
    %1414 = vmatpush1.msra.mxu0 %v762
    %1415 = vmatprep.subr.mxu0 0.0
    %1416 = vmatpush2.msra.mxu0 0.0
    %1417 = vmatprep.subr.mxu0 0.0
    %1418 = vmatpush2.msra.mxu0 0.0
    %1419 = vmatprep.subr.mxu0 0.0
    %1420 = vmatpush2.msra.mxu0 0.0
    %1421 = vmatprep.subr.mxu0 0.0
    %1422 = vmatpush2.msra.mxu0 0.0
    %1423 = vmatprep.subr.mxu0 0.0
    %1424 = vmatpush2.msra.mxu0 0.0
    %1425 = vmatprep.subr.mxu0 0.0
    %1426 = vmatpush2.msra.mxu0 0.0
    %1427 = vmatprep.subr.mxu0 0.0
    %1428 = vmatpush2.msra.mxu0 0.0
    %1429 = vmatprep.subr.mxu0 0.0
    %1430 = vmatpush2.msra.mxu0 0.0
    %1431 = vmatprep.subr.mxu0 0.0
    %1432 = vmatpush2.msra.mxu0 0.0
    %1433 = vmatprep.subr.mxu0 0.0
    %1434 = vmatpush2.msra.mxu0 0.0
    %1435 = vmatprep.subr.mxu0 0.0
    %1436 = vmatpush2.msra.mxu0 0.0
    %1437 = vmatprep.subr.mxu0 0.0
    %1438 = vmatpush2.msra.mxu0 0.0
    %1439 = vmatprep.subr.mxu0 0.0
    %1440 = vmatpush2.msra.mxu0 0.0
    %1441 = vmatprep.subr.mxu0 0.0
    %1442 = vmatpush2.msra.mxu0 0.0
    %1443 = vmatprep.subr.mxu0 0.0
    %1444 = vmatpush2.msra.mxu0 0.0
    %1445 = vmatprep.subr.mxu0 0.0
    %1446 = vmatpush2.msra.mxu0 0.0
    %1447 = vmatprep.mubr.f32.mxu0 0.0
    %1448 = vmatmul.mubr.f32.gmra.mxu0 %v1304
    %v1449 = vpop.f32.mrf.mxu0
    %v1450 = vadd.f32 0.0, %v1449
    %v1451 = vpop.f32.mrf.mxu0
    %v1452 = vadd.f32 0.0, %v1451
    %1453 = vmatprep.mubr.f32.mxu0 0.0
    %1454 = vmatmul.mubr.f32.gmra.mxu0 %v1305
    %v1455 = vpop.f32.mrf.mxu0
    %v1456 = vadd.f32 0.0, %v1455
    %v1457 = vpop.f32.mrf.mxu0
    %v1458 = vadd.f32 0.0, %v1457
    %1459 = vdwg.mxu0
    %v1460 = vadd.f32 %v1296, %v1373
    %v1461 = vadd.f32 %v1297, %v1375
    %v1462 = vadd.f32 %v1298, %v1450
    %v1463 = vadd.f32 %v1299, %v1452
    %v1464 = vadd.f32 %v1300, %v1379
    %v1465 = vadd.f32 %v1301, %v1381
    %v1466 = vadd.f32 %v1302, %v1456
    %v1467 = vadd.f32 %v1303, %v1458
    %v1468 = vxor.u32 %v1460, 2147483648
    %v1469 = vxor.u32 %v1461, 2147483648
    %v1470 = vxor.u32 %v1462, 2147483648
    %v1471 = vxor.u32 %v1464, 2147483648
    %v1472 = vxor.u32 %v1465, 2147483648
    %v1473 = vxor.u32 %v1466, 2147483648
    %v1474 = vmul.f32 %v1468, 1.442695
    %v1475 = vpow.pop %v1474
    %v1476 = vmul.f32 %v1469, 1.442695
    %v1477 = vpow.pop %v1476
    %v1478 = vmul.f32 %v1470, 1.442695
    %v1479 = vpow.pop %v1478
    %v1480 = vmul.f32 %v1471, 1.442695
    %v1481 = vpow.pop %v1480
    %v1482 = vmul.f32 %v1472, 1.442695
    %v1483 = vpow.pop %v1482
    %v1484 = vmul.f32 %v1473, 1.442695
    %v1485 = vpow.pop %v1484
    %v1486 = vadd.f32 %v1475, 1.0
    %v1487 = vadd.f32 %v1477, 1.0
    %v1488 = vadd.f32 %v1479, 1.0
    %v1489 = vadd.f32 %v1481, 1.0
    %v1490 = vadd.f32 %v1483, 1.0
    %v1491 = vadd.f32 %v1485, 1.0
    %v1492 = vrcp.pop %v1486
    %v1493 = vmul.f32 1.0, %v1492
    %v1494 = vrcp.pop %v1487
    %v1495 = vmul.f32 1.0, %v1494
    %v1496 = vrcp.pop %v1488
    %v1497 = vmul.f32 1.0, %v1496
    %v1498 = vrcp.pop %v1489
    %v1499 = vmul.f32 1.0, %v1498
    %v1500 = vrcp.pop %v1490
    %v1501 = vmul.f32 1.0, %v1500
    %v1502 = vrcp.pop %v1491
    %v1503 = vmul.f32 1.0, %v1502
    %v1504 = vtanh.pop %v1463
    %v1505 = vtanh.pop %v1467
    %v1506 = vld [vmem:[#allocation4] sm:$0xff]
    %v1507 = vld [vmem:[#allocation4 + $0x8] sm:$0xff]
    %v1508 = vmul.f32 %v1495, %v1506
    %v1509 = vmul.f32 %v1501, %v1507
    %v1510 = vmul.f32 %v1493, %v1504
    %v1511 = vmul.f32 %v1499, %v1505
    %v1512 = vadd.f32 %v1508, %v1510
    %v1513 = vadd.f32 %v1509, %v1511
    %v1514 = vtanh.pop %v1512
    %v1515 = vtanh.pop %v1513
    %v1516 = vmul.f32 %v1497, %v1514
    %v1517 = vmul.f32 %v1503, %v1515
    %1518 = vst [vmem:[#allocation4] sm:$0xff] %v1512
    %1519 = vst [vmem:[#allocation4 + $0x8] sm:$0xff] %v1513
    %1520 = vst [vmem:[#allocation3] sm:$0xff] %v1516
    %1521 = vst [vmem:[#allocation3 + $0x8] sm:$0xff] %v1517
    %v1522 = vld [vmem:[#allocation5] sm:$0xff]
    %v1523 = vld [vmem:[#allocation5 + $0x8] sm:$0xff]
    %s1524 = sld [smem:[#allocation12 + $0x2]]
    %v1525 = vstv %s1524
    %v1526 = vmul.f32 %v1516, %v1525
    %v1527 = vmul.f32 %v1517, %v1525
    %v1528 = vadd.f32 %v1522, %v1526
    %v1529 = vadd.f32 %v1523, %v1527
    %1530 = vst [vmem:[#allocation5] sm:$0xff] %v1528
    %1531 = vst [vmem:[#allocation5 + $0x8] sm:$0xff] %v1529
    %v1532 = vld [vmem:[#allocation2 + $0xc0] sm:$0xff]
    %v1533 = vld [vmem:[#allocation2 + $0xc8] sm:$0xff]
    %v1534 = vld [vmem:[#allocation2 + $0xd0] sm:$0xff]
    %v1535 = vld [vmem:[#allocation2 + $0xd8] sm:$0xff]
    %v1536 = vld [vmem:[#allocation2 + $0xe0] sm:$0xff]
    %v1537 = vld [vmem:[#allocation2 + $0xe8] sm:$0xff]
    %v1538 = vld [vmem:[#allocation2 + $0xf0] sm:$0xff]
    %v1539 = vld [vmem:[#allocation2 + $0xf8] sm:$0xff]
    %v1540 = vld [vmem:[#allocation3] sm:$0xff]
    %v1541 = vld [vmem:[#allocation3 + $0x8] sm:$0xff]
    %1542 = vmatprep.subr.mxu0 %v821
    %1543 = vmatpush1.msra.mxu0 %v820
    %1544 = vmatprep.subr.mxu0 %v817
    %1545 = vmatpush1.msra.mxu0 %v816
    %1546 = vmatprep.subr.mxu0 %v813
    %1547 = vmatpush1.msra.mxu0 %v812
    %1548 = vmatprep.subr.mxu0 %v809
    %1549 = vmatpush1.msra.mxu0 %v808
    %1550 = vmatprep.subr.mxu0 %v805
    %1551 = vmatpush1.msra.mxu0 %v804
    %1552 = vmatprep.subr.mxu0 %v801
    %1553 = vmatpush1.msra.mxu0 %v800
    %1554 = vmatprep.subr.mxu0 %v797
    %1555 = vmatpush1.msra.mxu0 %v796
    %1556 = vmatprep.subr.mxu0 %v793
    %1557 = vmatpush1.msra.mxu0 %v792
    %1558 = vmatprep.subr.mxu0 %v789
    %1559 = vmatpush1.msra.mxu0 %v788
    %1560 = vmatprep.subr.mxu0 %v785
    %1561 = vmatpush1.msra.mxu0 %v784
    %1562 = vmatprep.subr.mxu0 %v781
    %1563 = vmatpush1.msra.mxu0 %v780
    %1564 = vmatprep.subr.mxu0 %v777
    %1565 = vmatpush1.msra.mxu0 %v776
    %1566 = vmatprep.subr.mxu0 %v773
    %1567 = vmatpush1.msra.mxu0 %v772
    %1568 = vmatprep.subr.mxu0 %v769
    %1569 = vmatpush1.msra.mxu0 %v768
    %1570 = vmatprep.subr.mxu0 %v765
    %1571 = vmatpush1.msra.mxu0 %v764
    %1572 = vmatprep.subr.mxu0 %v761
    %1573 = vmatpush1.msra.mxu0 %v760
    %1574 = vmatprep.subr.mxu0 0.0
    %1575 = vmatpush2.msra.mxu0 0.0
    %1576 = vmatprep.subr.mxu0 0.0
    %1577 = vmatpush2.msra.mxu0 0.0
    %1578 = vmatprep.subr.mxu0 0.0
    %1579 = vmatpush2.msra.mxu0 0.0
    %1580 = vmatprep.subr.mxu0 0.0
    %1581 = vmatpush2.msra.mxu0 0.0
    %1582 = vmatprep.subr.mxu0 0.0
    %1583 = vmatpush2.msra.mxu0 0.0
    %1584 = vmatprep.subr.mxu0 0.0
    %1585 = vmatpush2.msra.mxu0 0.0
    %1586 = vmatprep.subr.mxu0 0.0
    %1587 = vmatpush2.msra.mxu0 0.0
    %1588 = vmatprep.subr.mxu0 0.0
    %1589 = vmatpush2.msra.mxu0 0.0
    %1590 = vmatprep.subr.mxu0 0.0
    %1591 = vmatpush2.msra.mxu0 0.0
    %1592 = vmatprep.subr.mxu0 0.0
    %1593 = vmatpush2.msra.mxu0 0.0
    %1594 = vmatprep.subr.mxu0 0.0
    %1595 = vmatpush2.msra.mxu0 0.0
    %1596 = vmatprep.subr.mxu0 0.0
    %1597 = vmatpush2.msra.mxu0 0.0
    %1598 = vmatprep.subr.mxu0 0.0
    %1599 = vmatpush2.msra.mxu0 0.0
    %1600 = vmatprep.subr.mxu0 0.0
    %1601 = vmatpush2.msra.mxu0 0.0
    %1602 = vmatprep.subr.mxu0 0.0
    %1603 = vmatpush2.msra.mxu0 0.0
    %1604 = vmatprep.subr.mxu0 0.0
    %1605 = vmatpush2.msra.mxu0 0.0
    %1606 = vmatprep.mubr.f32.mxu0 0.0
    %1607 = vmatmul.mubr.f32.gmra.mxu0 %v1540
    %v1608 = vpop.f32.mrf.mxu0
    %v1609 = vadd.f32 0.0, %v1608
    %v1610 = vpop.f32.mrf.mxu0
    %v1611 = vadd.f32 0.0, %v1610
    %1612 = vmatprep.mubr.f32.mxu0 0.0
    %1613 = vmatmul.mubr.f32.gmra.mxu0 %v1541
    %v1614 = vpop.f32.mrf.mxu0
    %v1615 = vadd.f32 0.0, %v1614
    %v1616 = vpop.f32.mrf.mxu0
    %v1617 = vadd.f32 0.0, %v1616
    %1618 = vdwg.mxu0
    %1619 = vmatprep.subr.mxu0 %v823
    %1620 = vmatpush1.msra.mxu0 %v822
    %1621 = vmatprep.subr.mxu0 %v819
    %1622 = vmatpush1.msra.mxu0 %v818
    %1623 = vmatprep.subr.mxu0 %v815
    %1624 = vmatpush1.msra.mxu0 %v814
    %1625 = vmatprep.subr.mxu0 %v811
    %1626 = vmatpush1.msra.mxu0 %v810
    %1627 = vmatprep.subr.mxu0 %v807
    %1628 = vmatpush1.msra.mxu0 %v806
    %1629 = vmatprep.subr.mxu0 %v803
    %1630 = vmatpush1.msra.mxu0 %v802
    %1631 = vmatprep.subr.mxu0 %v799
    %1632 = vmatpush1.msra.mxu0 %v798
    %1633 = vmatprep.subr.mxu0 %v795
    %1634 = vmatpush1.msra.mxu0 %v794
    %1635 = vmatprep.subr.mxu0 %v791
    %1636 = vmatpush1.msra.mxu0 %v790
    %1637 = vmatprep.subr.mxu0 %v787
    %1638 = vmatpush1.msra.mxu0 %v786
    %1639 = vmatprep.subr.mxu0 %v783
    %1640 = vmatpush1.msra.mxu0 %v782
    %1641 = vmatprep.subr.mxu0 %v779
    %1642 = vmatpush1.msra.mxu0 %v778
    %1643 = vmatprep.subr.mxu0 %v775
    %1644 = vmatpush1.msra.mxu0 %v774
    %1645 = vmatprep.subr.mxu0 %v771
    %1646 = vmatpush1.msra.mxu0 %v770
    %1647 = vmatprep.subr.mxu0 %v767
    %1648 = vmatpush1.msra.mxu0 %v766
    %1649 = vmatprep.subr.mxu0 %v763
    %1650 = vmatpush1.msra.mxu0 %v762
    %1651 = vmatprep.subr.mxu0 0.0
    %1652 = vmatpush2.msra.mxu0 0.0
    %1653 = vmatprep.subr.mxu0 0.0
    %1654 = vmatpush2.msra.mxu0 0.0
    %1655 = vmatprep.subr.mxu0 0.0
    %1656 = vmatpush2.msra.mxu0 0.0
    %1657 = vmatprep.subr.mxu0 0.0
    %1658 = vmatpush2.msra.mxu0 0.0
    %1659 = vmatprep.subr.mxu0 0.0
    %1660 = vmatpush2.msra.mxu0 0.0
    %1661 = vmatprep.subr.mxu0 0.0
    %1662 = vmatpush2.msra.mxu0 0.0
    %1663 = vmatprep.subr.mxu0 0.0
    %1664 = vmatpush2.msra.mxu0 0.0
    %1665 = vmatprep.subr.mxu0 0.0
    %1666 = vmatpush2.msra.mxu0 0.0
    %1667 = vmatprep.subr.mxu0 0.0
    %1668 = vmatpush2.msra.mxu0 0.0
    %1669 = vmatprep.subr.mxu0 0.0
    %1670 = vmatpush2.msra.mxu0 0.0
    %1671 = vmatprep.subr.mxu0 0.0
    %1672 = vmatpush2.msra.mxu0 0.0
    %1673 = vmatprep.subr.mxu0 0.0
    %1674 = vmatpush2.msra.mxu0 0.0
    %1675 = vmatprep.subr.mxu0 0.0
    %1676 = vmatpush2.msra.mxu0 0.0
    %1677 = vmatprep.subr.mxu0 0.0
    %1678 = vmatpush2.msra.mxu0 0.0
    %1679 = vmatprep.subr.mxu0 0.0
    %1680 = vmatpush2.msra.mxu0 0.0
    %1681 = vmatprep.subr.mxu0 0.0
    %1682 = vmatpush2.msra.mxu0 0.0
    %1683 = vmatprep.mubr.f32.mxu0 0.0
    %1684 = vmatmul.mubr.f32.gmra.mxu0 %v1540
    %v1685 = vpop.f32.mrf.mxu0
    %v1686 = vadd.f32 0.0, %v1685
    %v1687 = vpop.f32.mrf.mxu0
    %v1688 = vadd.f32 0.0, %v1687
    %1689 = vmatprep.mubr.f32.mxu0 0.0
    %1690 = vmatmul.mubr.f32.gmra.mxu0 %v1541
    %v1691 = vpop.f32.mrf.mxu0
    %v1692 = vadd.f32 0.0, %v1691
    %v1693 = vpop.f32.mrf.mxu0
    %v1694 = vadd.f32 0.0, %v1693
    %1695 = vdwg.mxu0
    %v1696 = vadd.f32 %v1532, %v1609
    %v1697 = vadd.f32 %v1533, %v1611
    %v1698 = vadd.f32 %v1534, %v1686
    %v1699 = vadd.f32 %v1535, %v1688
    %v1700 = vadd.f32 %v1536, %v1615
    %v1701 = vadd.f32 %v1537, %v1617
    %v1702 = vadd.f32 %v1538, %v1692
    %v1703 = vadd.f32 %v1539, %v1694
    %v1704 = vxor.u32 %v1696, 2147483648
    %v1705 = vxor.u32 %v1697, 2147483648
    %v1706 = vxor.u32 %v1698, 2147483648
    %v1707 = vxor.u32 %v1700, 2147483648
    %v1708 = vxor.u32 %v1701, 2147483648
    %v1709 = vxor.u32 %v1702, 2147483648
    %v1710 = vmul.f32 %v1704, 1.442695
    %v1711 = vpow.pop %v1710
    %v1712 = vmul.f32 %v1705, 1.442695
    %v1713 = vpow.pop %v1712
    %v1714 = vmul.f32 %v1706, 1.442695
    %v1715 = vpow.pop %v1714
    %v1716 = vmul.f32 %v1707, 1.442695
    %v1717 = vpow.pop %v1716
    %v1718 = vmul.f32 %v1708, 1.442695
    %v1719 = vpow.pop %v1718
    %v1720 = vmul.f32 %v1709, 1.442695
    %v1721 = vpow.pop %v1720
    %v1722 = vadd.f32 %v1711, 1.0
    %v1723 = vadd.f32 %v1713, 1.0
    %v1724 = vadd.f32 %v1715, 1.0
    %v1725 = vadd.f32 %v1717, 1.0
    %v1726 = vadd.f32 %v1719, 1.0
    %v1727 = vadd.f32 %v1721, 1.0
    %v1728 = vrcp.pop %v1722
    %v1729 = vmul.f32 1.0, %v1728
    %v1730 = vrcp.pop %v1723
    %v1731 = vmul.f32 1.0, %v1730
    %v1732 = vrcp.pop %v1724
    %v1733 = vmul.f32 1.0, %v1732
    %v1734 = vrcp.pop %v1725
    %v1735 = vmul.f32 1.0, %v1734
    %v1736 = vrcp.pop %v1726
    %v1737 = vmul.f32 1.0, %v1736
    %v1738 = vrcp.pop %v1727
    %v1739 = vmul.f32 1.0, %v1738
    %v1740 = vtanh.pop %v1699
    %v1741 = vtanh.pop %v1703
    %v1742 = vld [vmem:[#allocation4] sm:$0xff]
    %v1743 = vld [vmem:[#allocation4 + $0x8] sm:$0xff]
    %v1744 = vmul.f32 %v1731, %v1742
    %v1745 = vmul.f32 %v1737, %v1743
    %v1746 = vmul.f32 %v1729, %v1740
    %v1747 = vmul.f32 %v1735, %v1741
    %v1748 = vadd.f32 %v1744, %v1746
    %v1749 = vadd.f32 %v1745, %v1747
    %v1750 = vtanh.pop %v1748
    %v1751 = vtanh.pop %v1749
    %v1752 = vmul.f32 %v1733, %v1750
    %v1753 = vmul.f32 %v1739, %v1751
    %1754 = vst [vmem:[#allocation4] sm:$0xff] %v1748
    %1755 = vst [vmem:[#allocation4 + $0x8] sm:$0xff] %v1749
    %1756 = vst [vmem:[#allocation3] sm:$0xff] %v1752
    %1757 = vst [vmem:[#allocation3 + $0x8] sm:$0xff] %v1753
    %v1758 = vld [vmem:[#allocation5] sm:$0xff]
    %v1759 = vld [vmem:[#allocation5 + $0x8] sm:$0xff]
    %s1760 = sld [smem:[#allocation12 + $0x3]]
    %v1761 = vstv %s1760
    %v1762 = vmul.f32 %v1752, %v1761
    %v1763 = vmul.f32 %v1753, %v1761
    %v1764 = vadd.f32 %v1758, %v1762
    %v1765 = vadd.f32 %v1759, %v1763
    %1766 = vst [vmem:[#allocation5] sm:$0xff] %v1764
    %1767 = vst [vmem:[#allocation5 + $0x8] sm:$0xff] %v1765
    %v1768 = vld [vmem:[#allocation2 + $0x100] sm:$0xff]
    %v1769 = vld [vmem:[#allocation2 + $0x108] sm:$0xff]
    %v1770 = vld [vmem:[#allocation2 + $0x110] sm:$0xff]
    %v1771 = vld [vmem:[#allocation2 + $0x118] sm:$0xff]
    %v1772 = vld [vmem:[#allocation2 + $0x120] sm:$0xff]
    %v1773 = vld [vmem:[#allocation2 + $0x128] sm:$0xff]
    %v1774 = vld [vmem:[#allocation2 + $0x130] sm:$0xff]
    %v1775 = vld [vmem:[#allocation2 + $0x138] sm:$0xff]
    %v1776 = vld [vmem:[#allocation3] sm:$0xff]
    %v1777 = vld [vmem:[#allocation3 + $0x8] sm:$0xff]
    %1778 = vmatprep.subr.mxu0 %v821
    %1779 = vmatpush1.msra.mxu0 %v820
    %1780 = vmatprep.subr.mxu0 %v817
    %1781 = vmatpush1.msra.mxu0 %v816
    %1782 = vmatprep.subr.mxu0 %v813
    %1783 = vmatpush1.msra.mxu0 %v812
    %1784 = vmatprep.subr.mxu0 %v809
    %1785 = vmatpush1.msra.mxu0 %v808
    %1786 = vmatprep.subr.mxu0 %v805
    %1787 = vmatpush1.msra.mxu0 %v804
    %1788 = vmatprep.subr.mxu0 %v801
    %1789 = vmatpush1.msra.mxu0 %v800
    %1790 = vmatprep.subr.mxu0 %v797
    %1791 = vmatpush1.msra.mxu0 %v796
    %1792 = vmatprep.subr.mxu0 %v793
    %1793 = vmatpush1.msra.mxu0 %v792
    %1794 = vmatprep.subr.mxu0 %v789
    %1795 = vmatpush1.msra.mxu0 %v788
    %1796 = vmatprep.subr.mxu0 %v785
    %1797 = vmatpush1.msra.mxu0 %v784
    %1798 = vmatprep.subr.mxu0 %v781
    %1799 = vmatpush1.msra.mxu0 %v780
    %1800 = vmatprep.subr.mxu0 %v777
    %1801 = vmatpush1.msra.mxu0 %v776
    %1802 = vmatprep.subr.mxu0 %v773
    %1803 = vmatpush1.msra.mxu0 %v772
    %1804 = vmatprep.subr.mxu0 %v769
    %1805 = vmatpush1.msra.mxu0 %v768
    %1806 = vmatprep.subr.mxu0 %v765
    %1807 = vmatpush1.msra.mxu0 %v764
    %1808 = vmatprep.subr.mxu0 %v761
    %1809 = vmatpush1.msra.mxu0 %v760
    %1810 = vmatprep.subr.mxu0 0.0
    %1811 = vmatpush2.msra.mxu0 0.0
    %1812 = vmatprep.subr.mxu0 0.0
    %1813 = vmatpush2.msra.mxu0 0.0
    %1814 = vmatprep.subr.mxu0 0.0
    %1815 = vmatpush2.msra.mxu0 0.0
    %1816 = vmatprep.subr.mxu0 0.0
    %1817 = vmatpush2.msra.mxu0 0.0
    %1818 = vmatprep.subr.mxu0 0.0
    %1819 = vmatpush2.msra.mxu0 0.0
    %1820 = vmatprep.subr.mxu0 0.0
    %1821 = vmatpush2.msra.mxu0 0.0
    %1822 = vmatprep.subr.mxu0 0.0
    %1823 = vmatpush2.msra.mxu0 0.0
    %1824 = vmatprep.subr.mxu0 0.0
    %1825 = vmatpush2.msra.mxu0 0.0
    %1826 = vmatprep.subr.mxu0 0.0
    %1827 = vmatpush2.msra.mxu0 0.0
    %1828 = vmatprep.subr.mxu0 0.0
    %1829 = vmatpush2.msra.mxu0 0.0
    %1830 = vmatprep.subr.mxu0 0.0
    %1831 = vmatpush2.msra.mxu0 0.0
    %1832 = vmatprep.subr.mxu0 0.0
    %1833 = vmatpush2.msra.mxu0 0.0
    %1834 = vmatprep.subr.mxu0 0.0
    %1835 = vmatpush2.msra.mxu0 0.0
    %1836 = vmatprep.subr.mxu0 0.0
    %1837 = vmatpush2.msra.mxu0 0.0
    %1838 = vmatprep.subr.mxu0 0.0
    %1839 = vmatpush2.msra.mxu0 0.0
    %1840 = vmatprep.subr.mxu0 0.0
    %1841 = vmatpush2.msra.mxu0 0.0
    %1842 = vmatprep.mubr.f32.mxu0 0.0
    %1843 = vmatmul.mubr.f32.gmra.mxu0 %v1776
    %v1844 = vpop.f32.mrf.mxu0
    %v1845 = vadd.f32 0.0, %v1844
    %v1846 = vpop.f32.mrf.mxu0
    %v1847 = vadd.f32 0.0, %v1846
    %1848 = vmatprep.mubr.f32.mxu0 0.0
    %1849 = vmatmul.mubr.f32.gmra.mxu0 %v1777
    %v1850 = vpop.f32.mrf.mxu0
    %v1851 = vadd.f32 0.0, %v1850
    %v1852 = vpop.f32.mrf.mxu0
    %v1853 = vadd.f32 0.0, %v1852
    %1854 = vdwg.mxu0
    %1855 = vmatprep.subr.mxu0 %v823
    %1856 = vmatpush1.msra.mxu0 %v822
    %1857 = vmatprep.subr.mxu0 %v819
    %1858 = vmatpush1.msra.mxu0 %v818
    %1859 = vmatprep.subr.mxu0 %v815
    %1860 = vmatpush1.msra.mxu0 %v814
    %1861 = vmatprep.subr.mxu0 %v811
    %1862 = vmatpush1.msra.mxu0 %v810
    %1863 = vmatprep.subr.mxu0 %v807
    %1864 = vmatpush1.msra.mxu0 %v806
    %1865 = vmatprep.subr.mxu0 %v803
    %1866 = vmatpush1.msra.mxu0 %v802
    %1867 = vmatprep.subr.mxu0 %v799
    %1868 = vmatpush1.msra.mxu0 %v798
    %1869 = vmatprep.subr.mxu0 %v795
    %1870 = vmatpush1.msra.mxu0 %v794
    %1871 = vmatprep.subr.mxu0 %v791
    %1872 = vmatpush1.msra.mxu0 %v790
    %1873 = vmatprep.subr.mxu0 %v787
    %1874 = vmatpush1.msra.mxu0 %v786
    %1875 = vmatprep.subr.mxu0 %v783
    %1876 = vmatpush1.msra.mxu0 %v782
    %1877 = vmatprep.subr.mxu0 %v779
    %1878 = vmatpush1.msra.mxu0 %v778
    %1879 = vmatprep.subr.mxu0 %v775
    %1880 = vmatpush1.msra.mxu0 %v774
    %1881 = vmatprep.subr.mxu0 %v771
    %1882 = vmatpush1.msra.mxu0 %v770
    %1883 = vmatprep.subr.mxu0 %v767
    %1884 = vmatpush1.msra.mxu0 %v766
    %1885 = vmatprep.subr.mxu0 %v763
    %1886 = vmatpush1.msra.mxu0 %v762
    %1887 = vmatprep.subr.mxu0 0.0
    %1888 = vmatpush2.msra.mxu0 0.0
    %1889 = vmatprep.subr.mxu0 0.0
    %1890 = vmatpush2.msra.mxu0 0.0
    %1891 = vmatprep.subr.mxu0 0.0
    %1892 = vmatpush2.msra.mxu0 0.0
    %1893 = vmatprep.subr.mxu0 0.0
    %1894 = vmatpush2.msra.mxu0 0.0
    %1895 = vmatprep.subr.mxu0 0.0
    %1896 = vmatpush2.msra.mxu0 0.0
    %1897 = vmatprep.subr.mxu0 0.0
    %1898 = vmatpush2.msra.mxu0 0.0
    %1899 = vmatprep.subr.mxu0 0.0
    %1900 = vmatpush2.msra.mxu0 0.0
    %1901 = vmatprep.subr.mxu0 0.0
    %1902 = vmatpush2.msra.mxu0 0.0
    %1903 = vmatprep.subr.mxu0 0.0
    %1904 = vmatpush2.msra.mxu0 0.0
    %1905 = vmatprep.subr.mxu0 0.0
    %1906 = vmatpush2.msra.mxu0 0.0
    %1907 = vmatprep.subr.mxu0 0.0
    %1908 = vmatpush2.msra.mxu0 0.0
    %1909 = vmatprep.subr.mxu0 0.0
    %1910 = vmatpush2.msra.mxu0 0.0
    %1911 = vmatprep.subr.mxu0 0.0
    %1912 = vmatpush2.msra.mxu0 0.0
    %1913 = vmatprep.subr.mxu0 0.0
    %1914 = vmatpush2.msra.mxu0 0.0
    %1915 = vmatprep.subr.mxu0 0.0
    %1916 = vmatpush2.msra.mxu0 0.0
    %1917 = vmatprep.subr.mxu0 0.0
    %1918 = vmatpush2.msra.mxu0 0.0
    %1919 = vmatprep.mubr.f32.mxu0 0.0
    %1920 = vmatmul.mubr.f32.gmra.mxu0 %v1776
    %v1921 = vpop.f32.mrf.mxu0
    %v1922 = vadd.f32 0.0, %v1921
    %v1923 = vpop.f32.mrf.mxu0
    %v1924 = vadd.f32 0.0, %v1923
    %1925 = vmatprep.mubr.f32.mxu0 0.0
    %1926 = vmatmul.mubr.f32.gmra.mxu0 %v1777
    %v1927 = vpop.f32.mrf.mxu0
    %v1928 = vadd.f32 0.0, %v1927
    %v1929 = vpop.f32.mrf.mxu0
    %v1930 = vadd.f32 0.0, %v1929
    %1931 = vdwg.mxu0
    %v1932 = vadd.f32 %v1768, %v1845
    %v1933 = vadd.f32 %v1769, %v1847
    %v1934 = vadd.f32 %v1770, %v1922
    %v1935 = vadd.f32 %v1771, %v1924
    %v1936 = vadd.f32 %v1772, %v1851
    %v1937 = vadd.f32 %v1773, %v1853
    %v1938 = vadd.f32 %v1774, %v1928
    %v1939 = vadd.f32 %v1775, %v1930
    %v1940 = vxor.u32 %v1932, 2147483648
    %v1941 = vxor.u32 %v1933, 2147483648
    %v1942 = vxor.u32 %v1934, 2147483648
    %v1943 = vxor.u32 %v1936, 2147483648
    %v1944 = vxor.u32 %v1937, 2147483648
    %v1945 = vxor.u32 %v1938, 2147483648
    %v1946 = vmul.f32 %v1940, 1.442695
    %v1947 = vpow.pop %v1946
    %v1948 = vmul.f32 %v1941, 1.442695
    %v1949 = vpow.pop %v1948
    %v1950 = vmul.f32 %v1942, 1.442695
    %v1951 = vpow.pop %v1950
    %v1952 = vmul.f32 %v1943, 1.442695
    %v1953 = vpow.pop %v1952
    %v1954 = vmul.f32 %v1944, 1.442695
    %v1955 = vpow.pop %v1954
    %v1956 = vmul.f32 %v1945, 1.442695
    %v1957 = vpow.pop %v1956
    %v1958 = vadd.f32 %v1947, 1.0
    %v1959 = vadd.f32 %v1949, 1.0
    %v1960 = vadd.f32 %v1951, 1.0
    %v1961 = vadd.f32 %v1953, 1.0
    %v1962 = vadd.f32 %v1955, 1.0
    %v1963 = vadd.f32 %v1957, 1.0
    %v1964 = vrcp.pop %v1958
    %v1965 = vmul.f32 1.0, %v1964
    %v1966 = vrcp.pop %v1959
    %v1967 = vmul.f32 1.0, %v1966
    %v1968 = vrcp.pop %v1960
    %v1969 = vmul.f32 1.0, %v1968
    %v1970 = vrcp.pop %v1961
    %v1971 = vmul.f32 1.0, %v1970
    %v1972 = vrcp.pop %v1962
    %v1973 = vmul.f32 1.0, %v1972
    %v1974 = vrcp.pop %v1963
    %v1975 = vmul.f32 1.0, %v1974
    %v1976 = vtanh.pop %v1935
    %v1977 = vtanh.pop %v1939
    %v1978 = vld [vmem:[#allocation4] sm:$0xff]
    %v1979 = vld [vmem:[#allocation4 + $0x8] sm:$0xff]
    %v1980 = vmul.f32 %v1967, %v1978
    %v1981 = vmul.f32 %v1973, %v1979
    %v1982 = vmul.f32 %v1965, %v1976
    %v1983 = vmul.f32 %v1971, %v1977
    %v1984 = vadd.f32 %v1980, %v1982
    %v1985 = vadd.f32 %v1981, %v1983
    %v1986 = vtanh.pop %v1984
    %v1987 = vtanh.pop %v1985
    %v1988 = vmul.f32 %v1969, %v1986
    %v1989 = vmul.f32 %v1975, %v1987
    %1990 = vst [vmem:[#allocation4] sm:$0xff] %v1984
    %1991 = vst [vmem:[#allocation4 + $0x8] sm:$0xff] %v1985
    %1992 = vst [vmem:[#allocation3] sm:$0xff] %v1988
    %1993 = vst [vmem:[#allocation3 + $0x8] sm:$0xff] %v1989
    %v1994 = vld [vmem:[#allocation5] sm:$0xff]
    %v1995 = vld [vmem:[#allocation5 + $0x8] sm:$0xff]
    %s1996 = sld [smem:[#allocation12 + $0x4]]
    %v1997 = vstv %s1996
    %v1998 = vmul.f32 %v1988, %v1997
    %v1999 = vmul.f32 %v1989, %v1997
    %v2000 = vadd.f32 %v1994, %v1998
    %v2001 = vadd.f32 %v1995, %v1999
    %2002 = vst [vmem:[#allocation5] sm:$0xff] %v2000
    %2003 = vst [vmem:[#allocation5 + $0x8] sm:$0xff] %v2001
    %v2004 = vld [vmem:[#allocation2 + $0x140] sm:$0xff]
    %v2005 = vld [vmem:[#allocation2 + $0x148] sm:$0xff]
    %v2006 = vld [vmem:[#allocation2 + $0x150] sm:$0xff]
    %v2007 = vld [vmem:[#allocation2 + $0x158] sm:$0xff]
    %v2008 = vld [vmem:[#allocation2 + $0x160] sm:$0xff]
    %v2009 = vld [vmem:[#allocation2 + $0x168] sm:$0xff]
    %v2010 = vld [vmem:[#allocation2 + $0x170] sm:$0xff]
    %v2011 = vld [vmem:[#allocation2 + $0x178] sm:$0xff]
    %v2012 = vld [vmem:[#allocation3] sm:$0xff]
    %v2013 = vld [vmem:[#allocation3 + $0x8] sm:$0xff]
    %2014 = vmatprep.subr.mxu0 %v821
    %2015 = vmatpush1.msra.mxu0 %v820
    %2016 = vmatprep.subr.mxu0 %v817
    %2017 = vmatpush1.msra.mxu0 %v816
    %2018 = vmatprep.subr.mxu0 %v813
    %2019 = vmatpush1.msra.mxu0 %v812
    %2020 = vmatprep.subr.mxu0 %v809
    %2021 = vmatpush1.msra.mxu0 %v808
    %2022 = vmatprep.subr.mxu0 %v805
    %2023 = vmatpush1.msra.mxu0 %v804
    %2024 = vmatprep.subr.mxu0 %v801
    %2025 = vmatpush1.msra.mxu0 %v800
    %2026 = vmatprep.subr.mxu0 %v797
    %2027 = vmatpush1.msra.mxu0 %v796
    %2028 = vmatprep.subr.mxu0 %v793
    %2029 = vmatpush1.msra.mxu0 %v792
    %2030 = vmatprep.subr.mxu0 %v789
    %2031 = vmatpush1.msra.mxu0 %v788
    %2032 = vmatprep.subr.mxu0 %v785
    %2033 = vmatpush1.msra.mxu0 %v784
    %2034 = vmatprep.subr.mxu0 %v781
    %2035 = vmatpush1.msra.mxu0 %v780
    %2036 = vmatprep.subr.mxu0 %v777
    %2037 = vmatpush1.msra.mxu0 %v776
    %2038 = vmatprep.subr.mxu0 %v773
    %2039 = vmatpush1.msra.mxu0 %v772
    %2040 = vmatprep.subr.mxu0 %v769
    %2041 = vmatpush1.msra.mxu0 %v768
    %2042 = vmatprep.subr.mxu0 %v765
    %2043 = vmatpush1.msra.mxu0 %v764
    %2044 = vmatprep.subr.mxu0 %v761
    %2045 = vmatpush1.msra.mxu0 %v760
    %2046 = vmatprep.subr.mxu0 0.0
    %2047 = vmatpush2.msra.mxu0 0.0
    %2048 = vmatprep.subr.mxu0 0.0
    %2049 = vmatpush2.msra.mxu0 0.0
    %2050 = vmatprep.subr.mxu0 0.0
    %2051 = vmatpush2.msra.mxu0 0.0
    %2052 = vmatprep.subr.mxu0 0.0
    %2053 = vmatpush2.msra.mxu0 0.0
    %2054 = vmatprep.subr.mxu0 0.0
    %2055 = vmatpush2.msra.mxu0 0.0
    %2056 = vmatprep.subr.mxu0 0.0
    %2057 = vmatpush2.msra.mxu0 0.0
    %2058 = vmatprep.subr.mxu0 0.0
    %2059 = vmatpush2.msra.mxu0 0.0
    %2060 = vmatprep.subr.mxu0 0.0
    %2061 = vmatpush2.msra.mxu0 0.0
    %2062 = vmatprep.subr.mxu0 0.0
    %2063 = vmatpush2.msra.mxu0 0.0
    %2064 = vmatprep.subr.mxu0 0.0
    %2065 = vmatpush2.msra.mxu0 0.0
    %2066 = vmatprep.subr.mxu0 0.0
    %2067 = vmatpush2.msra.mxu0 0.0
    %2068 = vmatprep.subr.mxu0 0.0
    %2069 = vmatpush2.msra.mxu0 0.0
    %2070 = vmatprep.subr.mxu0 0.0
    %2071 = vmatpush2.msra.mxu0 0.0
    %2072 = vmatprep.subr.mxu0 0.0
    %2073 = vmatpush2.msra.mxu0 0.0
    %2074 = vmatprep.subr.mxu0 0.0
    %2075 = vmatpush2.msra.mxu0 0.0
    %2076 = vmatprep.subr.mxu0 0.0
    %2077 = vmatpush2.msra.mxu0 0.0
    %2078 = vmatprep.mubr.f32.mxu0 0.0
    %2079 = vmatmul.mubr.f32.gmra.mxu0 %v2012
    %v2080 = vpop.f32.mrf.mxu0
    %v2081 = vadd.f32 0.0, %v2080
    %v2082 = vpop.f32.mrf.mxu0
    %v2083 = vadd.f32 0.0, %v2082
    %2084 = vmatprep.mubr.f32.mxu0 0.0
    %2085 = vmatmul.mubr.f32.gmra.mxu0 %v2013
    %v2086 = vpop.f32.mrf.mxu0
    %v2087 = vadd.f32 0.0, %v2086
    %v2088 = vpop.f32.mrf.mxu0
    %v2089 = vadd.f32 0.0, %v2088
    %2090 = vdwg.mxu0
    %2091 = vmatprep.subr.mxu0 %v823
    %2092 = vmatpush1.msra.mxu0 %v822
    %2093 = vmatprep.subr.mxu0 %v819
    %2094 = vmatpush1.msra.mxu0 %v818
    %2095 = vmatprep.subr.mxu0 %v815
    %2096 = vmatpush1.msra.mxu0 %v814
    %2097 = vmatprep.subr.mxu0 %v811
    %2098 = vmatpush1.msra.mxu0 %v810
    %2099 = vmatprep.subr.mxu0 %v807
    %2100 = vmatpush1.msra.mxu0 %v806
    %2101 = vmatprep.subr.mxu0 %v803
    %2102 = vmatpush1.msra.mxu0 %v802
    %2103 = vmatprep.subr.mxu0 %v799
    %2104 = vmatpush1.msra.mxu0 %v798
    %2105 = vmatprep.subr.mxu0 %v795
    %2106 = vmatpush1.msra.mxu0 %v794
    %2107 = vmatprep.subr.mxu0 %v791
    %2108 = vmatpush1.msra.mxu0 %v790
    %2109 = vmatprep.subr.mxu0 %v787
    %2110 = vmatpush1.msra.mxu0 %v786
    %2111 = vmatprep.subr.mxu0 %v783
    %2112 = vmatpush1.msra.mxu0 %v782
    %2113 = vmatprep.subr.mxu0 %v779
    %2114 = vmatpush1.msra.mxu0 %v778
    %2115 = vmatprep.subr.mxu0 %v775
    %2116 = vmatpush1.msra.mxu0 %v774
    %2117 = vmatprep.subr.mxu0 %v771
    %2118 = vmatpush1.msra.mxu0 %v770
    %2119 = vmatprep.subr.mxu0 %v767
    %2120 = vmatpush1.msra.mxu0 %v766
    %2121 = vmatprep.subr.mxu0 %v763
    %2122 = vmatpush1.msra.mxu0 %v762
    %2123 = vmatprep.subr.mxu0 0.0
    %2124 = vmatpush2.msra.mxu0 0.0
    %2125 = vmatprep.subr.mxu0 0.0
    %2126 = vmatpush2.msra.mxu0 0.0
    %2127 = vmatprep.subr.mxu0 0.0
    %2128 = vmatpush2.msra.mxu0 0.0
    %2129 = vmatprep.subr.mxu0 0.0
    %2130 = vmatpush2.msra.mxu0 0.0
    %2131 = vmatprep.subr.mxu0 0.0
    %2132 = vmatpush2.msra.mxu0 0.0
    %2133 = vmatprep.subr.mxu0 0.0
    %2134 = vmatpush2.msra.mxu0 0.0
    %2135 = vmatprep.subr.mxu0 0.0
    %2136 = vmatpush2.msra.mxu0 0.0
    %2137 = vmatprep.subr.mxu0 0.0
    %2138 = vmatpush2.msra.mxu0 0.0
    %2139 = vmatprep.subr.mxu0 0.0
    %2140 = vmatpush2.msra.mxu0 0.0
    %2141 = vmatprep.subr.mxu0 0.0
    %2142 = vmatpush2.msra.mxu0 0.0
    %2143 = vmatprep.subr.mxu0 0.0
    %2144 = vmatpush2.msra.mxu0 0.0
    %2145 = vmatprep.subr.mxu0 0.0
    %2146 = vmatpush2.msra.mxu0 0.0
    %2147 = vmatprep.subr.mxu0 0.0
    %2148 = vmatpush2.msra.mxu0 0.0
    %2149 = vmatprep.subr.mxu0 0.0
    %2150 = vmatpush2.msra.mxu0 0.0
    %2151 = vmatprep.subr.mxu0 0.0
    %2152 = vmatpush2.msra.mxu0 0.0
    %2153 = vmatprep.subr.mxu0 0.0
    %2154 = vmatpush2.msra.mxu0 0.0
    %2155 = vmatprep.mubr.f32.mxu0 0.0
    %2156 = vmatmul.mubr.f32.gmra.mxu0 %v2012
    %v2157 = vpop.f32.mrf.mxu0
    %v2158 = vadd.f32 0.0, %v2157
    %v2159 = vpop.f32.mrf.mxu0
    %v2160 = vadd.f32 0.0, %v2159
    %2161 = vmatprep.mubr.f32.mxu0 0.0
    %2162 = vmatmul.mubr.f32.gmra.mxu0 %v2013
    %v2163 = vpop.f32.mrf.mxu0
    %v2164 = vadd.f32 0.0, %v2163
    %v2165 = vpop.f32.mrf.mxu0
    %v2166 = vadd.f32 0.0, %v2165
    %2167 = vdwg.mxu0
    %v2168 = vadd.f32 %v2004, %v2081
    %v2169 = vadd.f32 %v2005, %v2083
    %v2170 = vadd.f32 %v2006, %v2158
    %v2171 = vadd.f32 %v2007, %v2160
    %v2172 = vadd.f32 %v2008, %v2087
    %v2173 = vadd.f32 %v2009, %v2089
    %v2174 = vadd.f32 %v2010, %v2164
    %v2175 = vadd.f32 %v2011, %v2166
    %v2176 = vxor.u32 %v2168, 2147483648
    %v2177 = vxor.u32 %v2169, 2147483648
    %v2178 = vxor.u32 %v2170, 2147483648
    %v2179 = vxor.u32 %v2172, 2147483648
    %v2180 = vxor.u32 %v2173, 2147483648
    %v2181 = vxor.u32 %v2174, 2147483648
    %v2182 = vmul.f32 %v2176, 1.442695
    %v2183 = vpow.pop %v2182
    %v2184 = vmul.f32 %v2177, 1.442695
    %v2185 = vpow.pop %v2184
    %v2186 = vmul.f32 %v2178, 1.442695
    %v2187 = vpow.pop %v2186
    %v2188 = vmul.f32 %v2179, 1.442695
    %v2189 = vpow.pop %v2188
    %v2190 = vmul.f32 %v2180, 1.442695
    %v2191 = vpow.pop %v2190
    %v2192 = vmul.f32 %v2181, 1.442695
    %v2193 = vpow.pop %v2192
    %v2194 = vadd.f32 %v2183, 1.0
    %v2195 = vadd.f32 %v2185, 1.0
    %v2196 = vadd.f32 %v2187, 1.0
    %v2197 = vadd.f32 %v2189, 1.0
    %v2198 = vadd.f32 %v2191, 1.0
    %v2199 = vadd.f32 %v2193, 1.0
    %v2200 = vrcp.pop %v2194
    %v2201 = vmul.f32 1.0, %v2200
    %v2202 = vrcp.pop %v2195
    %v2203 = vmul.f32 1.0, %v2202
    %v2204 = vrcp.pop %v2196
    %v2205 = vmul.f32 1.0, %v2204
    %v2206 = vrcp.pop %v2197
    %v2207 = vmul.f32 1.0, %v2206
    %v2208 = vrcp.pop %v2198
    %v2209 = vmul.f32 1.0, %v2208
    %v2210 = vrcp.pop %v2199
    %v2211 = vmul.f32 1.0, %v2210
    %v2212 = vtanh.pop %v2171
    %v2213 = vtanh.pop %v2175
    %v2214 = vld [vmem:[#allocation4] sm:$0xff]
    %v2215 = vld [vmem:[#allocation4 + $0x8] sm:$0xff]
    %v2216 = vmul.f32 %v2203, %v2214
    %v2217 = vmul.f32 %v2209, %v2215
    %v2218 = vmul.f32 %v2201, %v2212
    %v2219 = vmul.f32 %v2207, %v2213
    %v2220 = vadd.f32 %v2216, %v2218
    %v2221 = vadd.f32 %v2217, %v2219
    %v2222 = vtanh.pop %v2220
    %v2223 = vtanh.pop %v2221
    %v2224 = vmul.f32 %v2205, %v2222
    %v2225 = vmul.f32 %v2211, %v2223
    %2226 = vst [vmem:[#allocation4] sm:$0xff] %v2220
    %2227 = vst [vmem:[#allocation4 + $0x8] sm:$0xff] %v2221
    %2228 = vst [vmem:[#allocation3] sm:$0xff] %v2224
    %2229 = vst [vmem:[#allocation3 + $0x8] sm:$0xff] %v2225
    %v2230 = vld [vmem:[#allocation5] sm:$0xff]
    %v2231 = vld [vmem:[#allocation5 + $0x8] sm:$0xff]
    %s2232 = sld [smem:[#allocation12 + $0x5]]
    %v2233 = vstv %s2232
    %v2234 = vmul.f32 %v2224, %v2233
    %v2235 = vmul.f32 %v2225, %v2233
    %v2236 = vadd.f32 %v2230, %v2234
    %v2237 = vadd.f32 %v2231, %v2235
    %2238 = vst [vmem:[#allocation5] sm:$0xff] %v2236
    %2239 = vst [vmem:[#allocation5 + $0x8] sm:$0xff] %v2237
    %v2240 = vld [vmem:[#allocation2 + $0x180] sm:$0xff]
    %v2241 = vld [vmem:[#allocation2 + $0x188] sm:$0xff]
    %v2242 = vld [vmem:[#allocation2 + $0x190] sm:$0xff]
    %v2243 = vld [vmem:[#allocation2 + $0x198] sm:$0xff]
    %v2244 = vld [vmem:[#allocation2 + $0x1a0] sm:$0xff]
    %v2245 = vld [vmem:[#allocation2 + $0x1a8] sm:$0xff]
    %v2246 = vld [vmem:[#allocation2 + $0x1b0] sm:$0xff]
    %v2247 = vld [vmem:[#allocation2 + $0x1b8] sm:$0xff]
    %v2248 = vld [vmem:[#allocation3] sm:$0xff]
    %v2249 = vld [vmem:[#allocation3 + $0x8] sm:$0xff]
    %2250 = vmatprep.subr.mxu0 %v821
    %2251 = vmatpush1.msra.mxu0 %v820
    %2252 = vmatprep.subr.mxu0 %v817
    %2253 = vmatpush1.msra.mxu0 %v816
    %2254 = vmatprep.subr.mxu0 %v813
    %2255 = vmatpush1.msra.mxu0 %v812
    %2256 = vmatprep.subr.mxu0 %v809
    %2257 = vmatpush1.msra.mxu0 %v808
    %2258 = vmatprep.subr.mxu0 %v805
    %2259 = vmatpush1.msra.mxu0 %v804
    %2260 = vmatprep.subr.mxu0 %v801
    %2261 = vmatpush1.msra.mxu0 %v800
    %2262 = vmatprep.subr.mxu0 %v797
    %2263 = vmatpush1.msra.mxu0 %v796
    %2264 = vmatprep.subr.mxu0 %v793
    %2265 = vmatpush1.msra.mxu0 %v792
    %2266 = vmatprep.subr.mxu0 %v789
    %2267 = vmatpush1.msra.mxu0 %v788
    %2268 = vmatprep.subr.mxu0 %v785
    %2269 = vmatpush1.msra.mxu0 %v784
    %2270 = vmatprep.subr.mxu0 %v781
    %2271 = vmatpush1.msra.mxu0 %v780
    %2272 = vmatprep.subr.mxu0 %v777
    %2273 = vmatpush1.msra.mxu0 %v776
    %2274 = vmatprep.subr.mxu0 %v773
    %2275 = vmatpush1.msra.mxu0 %v772
    %2276 = vmatprep.subr.mxu0 %v769
    %2277 = vmatpush1.msra.mxu0 %v768
    %2278 = vmatprep.subr.mxu0 %v765
    %2279 = vmatpush1.msra.mxu0 %v764
    %2280 = vmatprep.subr.mxu0 %v761
    %2281 = vmatpush1.msra.mxu0 %v760
    %2282 = vmatprep.subr.mxu0 0.0
    %2283 = vmatpush2.msra.mxu0 0.0
    %2284 = vmatprep.subr.mxu0 0.0
    %2285 = vmatpush2.msra.mxu0 0.0
    %2286 = vmatprep.subr.mxu0 0.0
    %2287 = vmatpush2.msra.mxu0 0.0
    %2288 = vmatprep.subr.mxu0 0.0
    %2289 = vmatpush2.msra.mxu0 0.0
    %2290 = vmatprep.subr.mxu0 0.0
    %2291 = vmatpush2.msra.mxu0 0.0
    %2292 = vmatprep.subr.mxu0 0.0
    %2293 = vmatpush2.msra.mxu0 0.0
    %2294 = vmatprep.subr.mxu0 0.0
    %2295 = vmatpush2.msra.mxu0 0.0
    %2296 = vmatprep.subr.mxu0 0.0
    %2297 = vmatpush2.msra.mxu0 0.0
    %2298 = vmatprep.subr.mxu0 0.0
    %2299 = vmatpush2.msra.mxu0 0.0
    %2300 = vmatprep.subr.mxu0 0.0
    %2301 = vmatpush2.msra.mxu0 0.0
    %2302 = vmatprep.subr.mxu0 0.0
    %2303 = vmatpush2.msra.mxu0 0.0
    %2304 = vmatprep.subr.mxu0 0.0
    %2305 = vmatpush2.msra.mxu0 0.0
    %2306 = vmatprep.subr.mxu0 0.0
    %2307 = vmatpush2.msra.mxu0 0.0
    %2308 = vmatprep.subr.mxu0 0.0
    %2309 = vmatpush2.msra.mxu0 0.0
    %2310 = vmatprep.subr.mxu0 0.0
    %2311 = vmatpush2.msra.mxu0 0.0
    %2312 = vmatprep.subr.mxu0 0.0
    %2313 = vmatpush2.msra.mxu0 0.0
    %2314 = vmatprep.mubr.f32.mxu0 0.0
    %2315 = vmatmul.mubr.f32.gmra.mxu0 %v2248
    %v2316 = vpop.f32.mrf.mxu0
    %v2317 = vadd.f32 0.0, %v2316
    %v2318 = vpop.f32.mrf.mxu0
    %v2319 = vadd.f32 0.0, %v2318
    %2320 = vmatprep.mubr.f32.mxu0 0.0
    %2321 = vmatmul.mubr.f32.gmra.mxu0 %v2249
    %v2322 = vpop.f32.mrf.mxu0
    %v2323 = vadd.f32 0.0, %v2322
    %v2324 = vpop.f32.mrf.mxu0
    %v2325 = vadd.f32 0.0, %v2324
    %2326 = vdwg.mxu0
    %2327 = vmatprep.subr.mxu0 %v823
    %2328 = vmatpush1.msra.mxu0 %v822
    %2329 = vmatprep.subr.mxu0 %v819
    %2330 = vmatpush1.msra.mxu0 %v818
    %2331 = vmatprep.subr.mxu0 %v815
    %2332 = vmatpush1.msra.mxu0 %v814
    %2333 = vmatprep.subr.mxu0 %v811
    %2334 = vmatpush1.msra.mxu0 %v810
    %2335 = vmatprep.subr.mxu0 %v807
    %2336 = vmatpush1.msra.mxu0 %v806
    %2337 = vmatprep.subr.mxu0 %v803
    %2338 = vmatpush1.msra.mxu0 %v802
    %2339 = vmatprep.subr.mxu0 %v799
    %2340 = vmatpush1.msra.mxu0 %v798
    %2341 = vmatprep.subr.mxu0 %v795
    %2342 = vmatpush1.msra.mxu0 %v794
    %2343 = vmatprep.subr.mxu0 %v791
    %2344 = vmatpush1.msra.mxu0 %v790
    %2345 = vmatprep.subr.mxu0 %v787
    %2346 = vmatpush1.msra.mxu0 %v786
    %2347 = vmatprep.subr.mxu0 %v783
    %2348 = vmatpush1.msra.mxu0 %v782
    %2349 = vmatprep.subr.mxu0 %v779
    %2350 = vmatpush1.msra.mxu0 %v778
    %2351 = vmatprep.subr.mxu0 %v775
    %2352 = vmatpush1.msra.mxu0 %v774
    %2353 = vmatprep.subr.mxu0 %v771
    %2354 = vmatpush1.msra.mxu0 %v770
    %2355 = vmatprep.subr.mxu0 %v767
    %2356 = vmatpush1.msra.mxu0 %v766
    %2357 = vmatprep.subr.mxu0 %v763
    %2358 = vmatpush1.msra.mxu0 %v762
    %2359 = vmatprep.subr.mxu0 0.0
    %2360 = vmatpush2.msra.mxu0 0.0
    %2361 = vmatprep.subr.mxu0 0.0
    %2362 = vmatpush2.msra.mxu0 0.0
    %2363 = vmatprep.subr.mxu0 0.0
    %2364 = vmatpush2.msra.mxu0 0.0
    %2365 = vmatprep.subr.mxu0 0.0
    %2366 = vmatpush2.msra.mxu0 0.0
    %2367 = vmatprep.subr.mxu0 0.0
    %2368 = vmatpush2.msra.mxu0 0.0
    %2369 = vmatprep.subr.mxu0 0.0
    %2370 = vmatpush2.msra.mxu0 0.0
    %2371 = vmatprep.subr.mxu0 0.0
    %2372 = vmatpush2.msra.mxu0 0.0
    %2373 = vmatprep.subr.mxu0 0.0
    %2374 = vmatpush2.msra.mxu0 0.0
    %2375 = vmatprep.subr.mxu0 0.0
    %2376 = vmatpush2.msra.mxu0 0.0
    %2377 = vmatprep.subr.mxu0 0.0
    %2378 = vmatpush2.msra.mxu0 0.0
    %2379 = vmatprep.subr.mxu0 0.0
    %2380 = vmatpush2.msra.mxu0 0.0
    %2381 = vmatprep.subr.mxu0 0.0
    %2382 = vmatpush2.msra.mxu0 0.0
    %2383 = vmatprep.subr.mxu0 0.0
    %2384 = vmatpush2.msra.mxu0 0.0
    %2385 = vmatprep.subr.mxu0 0.0
    %2386 = vmatpush2.msra.mxu0 0.0
    %2387 = vmatprep.subr.mxu0 0.0
    %2388 = vmatpush2.msra.mxu0 0.0
    %2389 = vmatprep.subr.mxu0 0.0
    %2390 = vmatpush2.msra.mxu0 0.0
    %2391 = vmatprep.mubr.f32.mxu0 0.0
    %2392 = vmatmul.mubr.f32.gmra.mxu0 %v2248
    %v2393 = vpop.f32.mrf.mxu0
    %v2394 = vadd.f32 0.0, %v2393
    %v2395 = vpop.f32.mrf.mxu0
    %v2396 = vadd.f32 0.0, %v2395
    %2397 = vmatprep.mubr.f32.mxu0 0.0
    %2398 = vmatmul.mubr.f32.gmra.mxu0 %v2249
    %v2399 = vpop.f32.mrf.mxu0
    %v2400 = vadd.f32 0.0, %v2399
    %v2401 = vpop.f32.mrf.mxu0
    %v2402 = vadd.f32 0.0, %v2401
    %2403 = vdwg.mxu0
    %v2404 = vadd.f32 %v2240, %v2317
    %v2405 = vadd.f32 %v2241, %v2319
    %v2406 = vadd.f32 %v2242, %v2394
    %v2407 = vadd.f32 %v2243, %v2396
    %v2408 = vadd.f32 %v2244, %v2323
    %v2409 = vadd.f32 %v2245, %v2325
    %v2410 = vadd.f32 %v2246, %v2400
    %v2411 = vadd.f32 %v2247, %v2402
    %v2412 = vxor.u32 %v2404, 2147483648
    %v2413 = vxor.u32 %v2405, 2147483648
    %v2414 = vxor.u32 %v2406, 2147483648
    %v2415 = vxor.u32 %v2408, 2147483648
    %v2416 = vxor.u32 %v2409, 2147483648
    %v2417 = vxor.u32 %v2410, 2147483648
    %v2418 = vmul.f32 %v2412, 1.442695
    %v2419 = vpow.pop %v2418
    %v2420 = vmul.f32 %v2413, 1.442695
    %v2421 = vpow.pop %v2420
    %v2422 = vmul.f32 %v2414, 1.442695
    %v2423 = vpow.pop %v2422
    %v2424 = vmul.f32 %v2415, 1.442695
    %v2425 = vpow.pop %v2424
    %v2426 = vmul.f32 %v2416, 1.442695
    %v2427 = vpow.pop %v2426
    %v2428 = vmul.f32 %v2417, 1.442695
    %v2429 = vpow.pop %v2428
    %v2430 = vadd.f32 %v2419, 1.0
    %v2431 = vadd.f32 %v2421, 1.0
    %v2432 = vadd.f32 %v2423, 1.0
    %v2433 = vadd.f32 %v2425, 1.0
    %v2434 = vadd.f32 %v2427, 1.0
    %v2435 = vadd.f32 %v2429, 1.0
    %v2436 = vrcp.pop %v2430
    %v2437 = vmul.f32 1.0, %v2436
    %v2438 = vrcp.pop %v2431
    %v2439 = vmul.f32 1.0, %v2438
    %v2440 = vrcp.pop %v2432
    %v2441 = vmul.f32 1.0, %v2440
    %v2442 = vrcp.pop %v2433
    %v2443 = vmul.f32 1.0, %v2442
    %v2444 = vrcp.pop %v2434
    %v2445 = vmul.f32 1.0, %v2444
    %v2446 = vrcp.pop %v2435
    %v2447 = vmul.f32 1.0, %v2446
    %v2448 = vtanh.pop %v2407
    %v2449 = vtanh.pop %v2411
    %v2450 = vld [vmem:[#allocation4] sm:$0xff]
    %v2451 = vld [vmem:[#allocation4 + $0x8] sm:$0xff]
    %v2452 = vmul.f32 %v2439, %v2450
    %v2453 = vmul.f32 %v2445, %v2451
    %v2454 = vmul.f32 %v2437, %v2448
    %v2455 = vmul.f32 %v2443, %v2449
    %v2456 = vadd.f32 %v2452, %v2454
    %v2457 = vadd.f32 %v2453, %v2455
    %v2458 = vtanh.pop %v2456
    %v2459 = vtanh.pop %v2457
    %v2460 = vmul.f32 %v2441, %v2458
    %v2461 = vmul.f32 %v2447, %v2459
    %2462 = vst [vmem:[#allocation4] sm:$0xff] %v2456
    %2463 = vst [vmem:[#allocation4 + $0x8] sm:$0xff] %v2457
    %2464 = vst [vmem:[#allocation3] sm:$0xff] %v2460
    %2465 = vst [vmem:[#allocation3 + $0x8] sm:$0xff] %v2461
    %v2466 = vld [vmem:[#allocation5] sm:$0xff]
    %v2467 = vld [vmem:[#allocation5 + $0x8] sm:$0xff]
    %s2468 = sld [smem:[#allocation12 + $0x6]]
    %v2469 = vstv %s2468
    %v2470 = vmul.f32 %v2460, %v2469
    %v2471 = vmul.f32 %v2461, %v2469
    %v2472 = vadd.f32 %v2466, %v2470
    %v2473 = vadd.f32 %v2467, %v2471
    %2474 = vst [vmem:[#allocation5] sm:$0xff] %v2472
    %2475 = vst [vmem:[#allocation5 + $0x8] sm:$0xff] %v2473
    %v2476 = vld [vmem:[#allocation2 + $0x1c0] sm:$0xff]
    %v2477 = vld [vmem:[#allocation2 + $0x1c8] sm:$0xff]
    %v2478 = vld [vmem:[#allocation2 + $0x1d0] sm:$0xff]
    %v2479 = vld [vmem:[#allocation2 + $0x1d8] sm:$0xff]
    %v2480 = vld [vmem:[#allocation2 + $0x1e0] sm:$0xff]
    %v2481 = vld [vmem:[#allocation2 + $0x1e8] sm:$0xff]
    %v2482 = vld [vmem:[#allocation2 + $0x1f0] sm:$0xff]
    %v2483 = vld [vmem:[#allocation2 + $0x1f8] sm:$0xff]
    %v2484 = vld [vmem:[#allocation3] sm:$0xff]
    %v2485 = vld [vmem:[#allocation3 + $0x8] sm:$0xff]
    %2486 = vmatprep.subr.mxu0 %v821
    %2487 = vmatpush1.msra.mxu0 %v820
    %2488 = vmatprep.subr.mxu0 %v817
    %2489 = vmatpush1.msra.mxu0 %v816
    %2490 = vmatprep.subr.mxu0 %v813
    %2491 = vmatpush1.msra.mxu0 %v812
    %2492 = vmatprep.subr.mxu0 %v809
    %2493 = vmatpush1.msra.mxu0 %v808
    %2494 = vmatprep.subr.mxu0 %v805
    %2495 = vmatpush1.msra.mxu0 %v804
    %2496 = vmatprep.subr.mxu0 %v801
    %2497 = vmatpush1.msra.mxu0 %v800
    %2498 = vmatprep.subr.mxu0 %v797
    %2499 = vmatpush1.msra.mxu0 %v796
    %2500 = vmatprep.subr.mxu0 %v793
    %2501 = vmatpush1.msra.mxu0 %v792
    %2502 = vmatprep.subr.mxu0 %v789
    %2503 = vmatpush1.msra.mxu0 %v788
    %2504 = vmatprep.subr.mxu0 %v785
    %2505 = vmatpush1.msra.mxu0 %v784
    %2506 = vmatprep.subr.mxu0 %v781
    %2507 = vmatpush1.msra.mxu0 %v780
    %2508 = vmatprep.subr.mxu0 %v777
    %2509 = vmatpush1.msra.mxu0 %v776
    %2510 = vmatprep.subr.mxu0 %v773
    %2511 = vmatpush1.msra.mxu0 %v772
    %2512 = vmatprep.subr.mxu0 %v769
    %2513 = vmatpush1.msra.mxu0 %v768
    %2514 = vmatprep.subr.mxu0 %v765
    %2515 = vmatpush1.msra.mxu0 %v764
    %2516 = vmatprep.subr.mxu0 %v761
    %2517 = vmatpush1.msra.mxu0 %v760
    %2518 = vmatprep.subr.mxu0 0.0
    %2519 = vmatpush2.msra.mxu0 0.0
    %2520 = vmatprep.subr.mxu0 0.0
    %2521 = vmatpush2.msra.mxu0 0.0
    %2522 = vmatprep.subr.mxu0 0.0
    %2523 = vmatpush2.msra.mxu0 0.0
    %2524 = vmatprep.subr.mxu0 0.0
    %2525 = vmatpush2.msra.mxu0 0.0
    %2526 = vmatprep.subr.mxu0 0.0
    %2527 = vmatpush2.msra.mxu0 0.0
    %2528 = vmatprep.subr.mxu0 0.0
    %2529 = vmatpush2.msra.mxu0 0.0
    %2530 = vmatprep.subr.mxu0 0.0
    %2531 = vmatpush2.msra.mxu0 0.0
    %2532 = vmatprep.subr.mxu0 0.0
    %2533 = vmatpush2.msra.mxu0 0.0
    %2534 = vmatprep.subr.mxu0 0.0
    %2535 = vmatpush2.msra.mxu0 0.0
    %2536 = vmatprep.subr.mxu0 0.0
    %2537 = vmatpush2.msra.mxu0 0.0
    %2538 = vmatprep.subr.mxu0 0.0
    %2539 = vmatpush2.msra.mxu0 0.0
    %2540 = vmatprep.subr.mxu0 0.0
    %2541 = vmatpush2.msra.mxu0 0.0
    %2542 = vmatprep.subr.mxu0 0.0
    %2543 = vmatpush2.msra.mxu0 0.0
    %2544 = vmatprep.subr.mxu0 0.0
    %2545 = vmatpush2.msra.mxu0 0.0
    %2546 = vmatprep.subr.mxu0 0.0
    %2547 = vmatpush2.msra.mxu0 0.0
    %2548 = vmatprep.subr.mxu0 0.0
    %2549 = vmatpush2.msra.mxu0 0.0
    %2550 = vmatprep.mubr.f32.mxu0 0.0
    %2551 = vmatmul.mubr.f32.gmra.mxu0 %v2484
    %v2552 = vpop.f32.mrf.mxu0
    %v2553 = vadd.f32 0.0, %v2552
    %v2554 = vpop.f32.mrf.mxu0
    %v2555 = vadd.f32 0.0, %v2554
    %2556 = vmatprep.mubr.f32.mxu0 0.0
    %2557 = vmatmul.mubr.f32.gmra.mxu0 %v2485
    %v2558 = vpop.f32.mrf.mxu0
    %v2559 = vadd.f32 0.0, %v2558
    %v2560 = vpop.f32.mrf.mxu0
    %v2561 = vadd.f32 0.0, %v2560
    %2562 = vdwg.mxu0
    %2563 = vmatprep.subr.mxu0 %v823
    %2564 = vmatpush1.msra.mxu0 %v822
    %2565 = vmatprep.subr.mxu0 %v819
    %2566 = vmatpush1.msra.mxu0 %v818
    %2567 = vmatprep.subr.mxu0 %v815
    %2568 = vmatpush1.msra.mxu0 %v814
    %2569 = vmatprep.subr.mxu0 %v811
    %2570 = vmatpush1.msra.mxu0 %v810
    %2571 = vmatprep.subr.mxu0 %v807
    %2572 = vmatpush1.msra.mxu0 %v806
    %2573 = vmatprep.subr.mxu0 %v803
    %2574 = vmatpush1.msra.mxu0 %v802
    %2575 = vmatprep.subr.mxu0 %v799
    %2576 = vmatpush1.msra.mxu0 %v798
    %2577 = vmatprep.subr.mxu0 %v795
    %2578 = vmatpush1.msra.mxu0 %v794
    %2579 = vmatprep.subr.mxu0 %v791
    %2580 = vmatpush1.msra.mxu0 %v790
    %2581 = vmatprep.subr.mxu0 %v787
    %2582 = vmatpush1.msra.mxu0 %v786
    %2583 = vmatprep.subr.mxu0 %v783
    %2584 = vmatpush1.msra.mxu0 %v782
    %2585 = vmatprep.subr.mxu0 %v779
    %2586 = vmatpush1.msra.mxu0 %v778
    %2587 = vmatprep.subr.mxu0 %v775
    %2588 = vmatpush1.msra.mxu0 %v774
    %2589 = vmatprep.subr.mxu0 %v771
    %2590 = vmatpush1.msra.mxu0 %v770
    %2591 = vmatprep.subr.mxu0 %v767
    %2592 = vmatpush1.msra.mxu0 %v766
    %2593 = vmatprep.subr.mxu0 %v763
    %2594 = vmatpush1.msra.mxu0 %v762
    %2595 = vmatprep.subr.mxu0 0.0
    %2596 = vmatpush2.msra.mxu0 0.0
    %2597 = vmatprep.subr.mxu0 0.0
    %2598 = vmatpush2.msra.mxu0 0.0
    %2599 = vmatprep.subr.mxu0 0.0
    %2600 = vmatpush2.msra.mxu0 0.0
    %2601 = vmatprep.subr.mxu0 0.0
    %2602 = vmatpush2.msra.mxu0 0.0
    %2603 = vmatprep.subr.mxu0 0.0
    %2604 = vmatpush2.msra.mxu0 0.0
    %2605 = vmatprep.subr.mxu0 0.0
    %2606 = vmatpush2.msra.mxu0 0.0
    %2607 = vmatprep.subr.mxu0 0.0
    %2608 = vmatpush2.msra.mxu0 0.0
    %2609 = vmatprep.subr.mxu0 0.0
    %2610 = vmatpush2.msra.mxu0 0.0
    %2611 = vmatprep.subr.mxu0 0.0
    %2612 = vmatpush2.msra.mxu0 0.0
    %2613 = vmatprep.subr.mxu0 0.0
    %2614 = vmatpush2.msra.mxu0 0.0
    %2615 = vmatprep.subr.mxu0 0.0
    %2616 = vmatpush2.msra.mxu0 0.0
    %2617 = vmatprep.subr.mxu0 0.0
    %2618 = vmatpush2.msra.mxu0 0.0
    %2619 = vmatprep.subr.mxu0 0.0
    %2620 = vmatpush2.msra.mxu0 0.0
    %2621 = vmatprep.subr.mxu0 0.0
    %2622 = vmatpush2.msra.mxu0 0.0
    %2623 = vmatprep.subr.mxu0 0.0
    %2624 = vmatpush2.msra.mxu0 0.0
    %2625 = vmatprep.subr.mxu0 0.0
    %2626 = vmatpush2.msra.mxu0 0.0
    %2627 = vmatprep.mubr.f32.mxu0 0.0
    %2628 = vmatmul.mubr.f32.gmra.mxu0 %v2484
    %v2629 = vpop.f32.mrf.mxu0
    %v2630 = vadd.f32 0.0, %v2629
    %v2631 = vpop.f32.mrf.mxu0
    %v2632 = vadd.f32 0.0, %v2631
    %2633 = vmatprep.mubr.f32.mxu0 0.0
    %2634 = vmatmul.mubr.f32.gmra.mxu0 %v2485
    %v2635 = vpop.f32.mrf.mxu0
    %v2636 = vadd.f32 0.0, %v2635
    %v2637 = vpop.f32.mrf.mxu0
    %v2638 = vadd.f32 0.0, %v2637
    %2639 = vdwg.mxu0
    %v2640 = vadd.f32 %v2476, %v2553
    %v2641 = vadd.f32 %v2477, %v2555
    %v2642 = vadd.f32 %v2478, %v2630
    %v2643 = vadd.f32 %v2479, %v2632
    %v2644 = vadd.f32 %v2480, %v2559
    %v2645 = vadd.f32 %v2481, %v2561
    %v2646 = vadd.f32 %v2482, %v2636
    %v2647 = vadd.f32 %v2483, %v2638
    %v2648 = vxor.u32 %v2640, 2147483648
    %v2649 = vxor.u32 %v2641, 2147483648
    %v2650 = vxor.u32 %v2642, 2147483648
    %v2651 = vxor.u32 %v2644, 2147483648
    %v2652 = vxor.u32 %v2645, 2147483648
    %v2653 = vxor.u32 %v2646, 2147483648
    %v2654 = vmul.f32 %v2648, 1.442695
    %v2655 = vpow.pop %v2654
    %v2656 = vmul.f32 %v2649, 1.442695
    %v2657 = vpow.pop %v2656
    %v2658 = vmul.f32 %v2650, 1.442695
    %v2659 = vpow.pop %v2658
    %v2660 = vmul.f32 %v2651, 1.442695
    %v2661 = vpow.pop %v2660
    %v2662 = vmul.f32 %v2652, 1.442695
    %v2663 = vpow.pop %v2662
    %v2664 = vmul.f32 %v2653, 1.442695
    %v2665 = vpow.pop %v2664
    %v2666 = vadd.f32 %v2655, 1.0
    %v2667 = vadd.f32 %v2657, 1.0
    %v2668 = vadd.f32 %v2659, 1.0
    %v2669 = vadd.f32 %v2661, 1.0
    %v2670 = vadd.f32 %v2663, 1.0
    %v2671 = vadd.f32 %v2665, 1.0
    %v2672 = vrcp.pop %v2666
    %v2673 = vmul.f32 1.0, %v2672
    %v2674 = vrcp.pop %v2667
    %v2675 = vmul.f32 1.0, %v2674
    %v2676 = vrcp.pop %v2668
    %v2677 = vmul.f32 1.0, %v2676
    %v2678 = vrcp.pop %v2669
    %v2679 = vmul.f32 1.0, %v2678
    %v2680 = vrcp.pop %v2670
    %v2681 = vmul.f32 1.0, %v2680
    %v2682 = vrcp.pop %v2671
    %v2683 = vmul.f32 1.0, %v2682
    %v2684 = vtanh.pop %v2643
    %v2685 = vtanh.pop %v2647
    %v2686 = vld [vmem:[#allocation4] sm:$0xff]
    %v2687 = vld [vmem:[#allocation4 + $0x8] sm:$0xff]
    %v2688 = vmul.f32 %v2675, %v2686
    %v2689 = vmul.f32 %v2681, %v2687
    %v2690 = vmul.f32 %v2673, %v2684
    %v2691 = vmul.f32 %v2679, %v2685
    %v2692 = vadd.f32 %v2688, %v2690
    %v2693 = vadd.f32 %v2689, %v2691
    %v2694 = vtanh.pop %v2692
    %v2695 = vtanh.pop %v2693
    %v2696 = vmul.f32 %v2677, %v2694
    %v2697 = vmul.f32 %v2683, %v2695
    %2698 = vst [vmem:[#allocation4] sm:$0xff] %v2692
    %2699 = vst [vmem:[#allocation4 + $0x8] sm:$0xff] %v2693
    %2700 = vst [vmem:[#allocation3] sm:$0xff] %v2696
    %2701 = vst [vmem:[#allocation3 + $0x8] sm:$0xff] %v2697
    %v2702 = vld [vmem:[#allocation5] sm:$0xff]
    %v2703 = vld [vmem:[#allocation5 + $0x8] sm:$0xff]
    %s2704 = sld [smem:[#allocation12 + $0x7]]
    %v2705 = vstv %s2704
    %v2706 = vmul.f32 %v2696, %v2705
    %v2707 = vmul.f32 %v2697, %v2705
    %v2708 = vadd.f32 %v2702, %v2706
    %v2709 = vadd.f32 %v2703, %v2707
    %2710 = vst [vmem:[#allocation5] sm:$0xff] %v2708
    %2711 = vst [vmem:[#allocation5 + $0x8] sm:$0xff] %v2709
    %v2712 = vld [vmem:[#allocation2 + $0x200] sm:$0xff]
    %v2713 = vld [vmem:[#allocation2 + $0x208] sm:$0xff]
    %v2714 = vld [vmem:[#allocation2 + $0x210] sm:$0xff]
    %v2715 = vld [vmem:[#allocation2 + $0x218] sm:$0xff]
    %v2716 = vld [vmem:[#allocation2 + $0x220] sm:$0xff]
    %v2717 = vld [vmem:[#allocation2 + $0x228] sm:$0xff]
    %v2718 = vld [vmem:[#allocation2 + $0x230] sm:$0xff]
    %v2719 = vld [vmem:[#allocation2 + $0x238] sm:$0xff]
    %v2720 = vld [vmem:[#allocation3] sm:$0xff]
    %v2721 = vld [vmem:[#allocation3 + $0x8] sm:$0xff]
    %2722 = vmatprep.subr.mxu0 %v821
    %2723 = vmatpush1.msra.mxu0 %v820
    %2724 = vmatprep.subr.mxu0 %v817
    %2725 = vmatpush1.msra.mxu0 %v816
    %2726 = vmatprep.subr.mxu0 %v813
    %2727 = vmatpush1.msra.mxu0 %v812
    %2728 = vmatprep.subr.mxu0 %v809
    %2729 = vmatpush1.msra.mxu0 %v808
    %2730 = vmatprep.subr.mxu0 %v805
    %2731 = vmatpush1.msra.mxu0 %v804
    %2732 = vmatprep.subr.mxu0 %v801
    %2733 = vmatpush1.msra.mxu0 %v800
    %2734 = vmatprep.subr.mxu0 %v797
    %2735 = vmatpush1.msra.mxu0 %v796
    %2736 = vmatprep.subr.mxu0 %v793
    %2737 = vmatpush1.msra.mxu0 %v792
    %2738 = vmatprep.subr.mxu0 %v789
    %2739 = vmatpush1.msra.mxu0 %v788
    %2740 = vmatprep.subr.mxu0 %v785
    %2741 = vmatpush1.msra.mxu0 %v784
    %2742 = vmatprep.subr.mxu0 %v781
    %2743 = vmatpush1.msra.mxu0 %v780
    %2744 = vmatprep.subr.mxu0 %v777
    %2745 = vmatpush1.msra.mxu0 %v776
    %2746 = vmatprep.subr.mxu0 %v773
    %2747 = vmatpush1.msra.mxu0 %v772
    %2748 = vmatprep.subr.mxu0 %v769
    %2749 = vmatpush1.msra.mxu0 %v768
    %2750 = vmatprep.subr.mxu0 %v765
    %2751 = vmatpush1.msra.mxu0 %v764
    %2752 = vmatprep.subr.mxu0 %v761
    %2753 = vmatpush1.msra.mxu0 %v760
    %2754 = vmatprep.subr.mxu0 0.0
    %2755 = vmatpush2.msra.mxu0 0.0
    %2756 = vmatprep.subr.mxu0 0.0
    %2757 = vmatpush2.msra.mxu0 0.0
    %2758 = vmatprep.subr.mxu0 0.0
    %2759 = vmatpush2.msra.mxu0 0.0
    %2760 = vmatprep.subr.mxu0 0.0
    %2761 = vmatpush2.msra.mxu0 0.0
    %2762 = vmatprep.subr.mxu0 0.0
    %2763 = vmatpush2.msra.mxu0 0.0
    %2764 = vmatprep.subr.mxu0 0.0
    %2765 = vmatpush2.msra.mxu0 0.0
    %2766 = vmatprep.subr.mxu0 0.0
    %2767 = vmatpush2.msra.mxu0 0.0
    %2768 = vmatprep.subr.mxu0 0.0
    %2769 = vmatpush2.msra.mxu0 0.0
    %2770 = vmatprep.subr.mxu0 0.0
    %2771 = vmatpush2.msra.mxu0 0.0
    %2772 = vmatprep.subr.mxu0 0.0
    %2773 = vmatpush2.msra.mxu0 0.0
    %2774 = vmatprep.subr.mxu0 0.0
    %2775 = vmatpush2.msra.mxu0 0.0
    %2776 = vmatprep.subr.mxu0 0.0
    %2777 = vmatpush2.msra.mxu0 0.0
    %2778 = vmatprep.subr.mxu0 0.0
    %2779 = vmatpush2.msra.mxu0 0.0
    %2780 = vmatprep.subr.mxu0 0.0
    %2781 = vmatpush2.msra.mxu0 0.0
    %2782 = vmatprep.subr.mxu0 0.0
    %2783 = vmatpush2.msra.mxu0 0.0
    %2784 = vmatprep.subr.mxu0 0.0
    %2785 = vmatpush2.msra.mxu0 0.0
    %2786 = vmatprep.mubr.f32.mxu0 0.0
    %2787 = vmatmul.mubr.f32.gmra.mxu0 %v2720
    %v2788 = vpop.f32.mrf.mxu0
    %v2789 = vadd.f32 0.0, %v2788
    %v2790 = vpop.f32.mrf.mxu0
    %v2791 = vadd.f32 0.0, %v2790
    %2792 = vmatprep.mubr.f32.mxu0 0.0
    %2793 = vmatmul.mubr.f32.gmra.mxu0 %v2721
    %v2794 = vpop.f32.mrf.mxu0
    %v2795 = vadd.f32 0.0, %v2794
    %v2796 = vpop.f32.mrf.mxu0
    %v2797 = vadd.f32 0.0, %v2796
    %2798 = vdwg.mxu0
    %2799 = vmatprep.subr.mxu0 %v823
    %2800 = vmatpush1.msra.mxu0 %v822
    %2801 = vmatprep.subr.mxu0 %v819
    %2802 = vmatpush1.msra.mxu0 %v818
    %2803 = vmatprep.subr.mxu0 %v815
    %2804 = vmatpush1.msra.mxu0 %v814
    %2805 = vmatprep.subr.mxu0 %v811
    %2806 = vmatpush1.msra.mxu0 %v810
    %2807 = vmatprep.subr.mxu0 %v807
    %2808 = vmatpush1.msra.mxu0 %v806
    %2809 = vmatprep.subr.mxu0 %v803
    %2810 = vmatpush1.msra.mxu0 %v802
    %2811 = vmatprep.subr.mxu0 %v799
    %2812 = vmatpush1.msra.mxu0 %v798
    %2813 = vmatprep.subr.mxu0 %v795
    %2814 = vmatpush1.msra.mxu0 %v794
    %2815 = vmatprep.subr.mxu0 %v791
    %2816 = vmatpush1.msra.mxu0 %v790
    %2817 = vmatprep.subr.mxu0 %v787
    %2818 = vmatpush1.msra.mxu0 %v786
    %2819 = vmatprep.subr.mxu0 %v783
    %2820 = vmatpush1.msra.mxu0 %v782
    %2821 = vmatprep.subr.mxu0 %v779
    %2822 = vmatpush1.msra.mxu0 %v778
    %2823 = vmatprep.subr.mxu0 %v775
    %2824 = vmatpush1.msra.mxu0 %v774
    %2825 = vmatprep.subr.mxu0 %v771
    %2826 = vmatpush1.msra.mxu0 %v770
    %2827 = vmatprep.subr.mxu0 %v767
    %2828 = vmatpush1.msra.mxu0 %v766
    %2829 = vmatprep.subr.mxu0 %v763
    %2830 = vmatpush1.msra.mxu0 %v762
    %2831 = vmatprep.subr.mxu0 0.0
    %2832 = vmatpush2.msra.mxu0 0.0
    %2833 = vmatprep.subr.mxu0 0.0
    %2834 = vmatpush2.msra.mxu0 0.0
    %2835 = vmatprep.subr.mxu0 0.0
    %2836 = vmatpush2.msra.mxu0 0.0
    %2837 = vmatprep.subr.mxu0 0.0
    %2838 = vmatpush2.msra.mxu0 0.0
    %2839 = vmatprep.subr.mxu0 0.0
    %2840 = vmatpush2.msra.mxu0 0.0
    %2841 = vmatprep.subr.mxu0 0.0
    %2842 = vmatpush2.msra.mxu0 0.0
    %2843 = vmatprep.subr.mxu0 0.0
    %2844 = vmatpush2.msra.mxu0 0.0
    %2845 = vmatprep.subr.mxu0 0.0
    %2846 = vmatpush2.msra.mxu0 0.0
    %2847 = vmatprep.subr.mxu0 0.0
    %2848 = vmatpush2.msra.mxu0 0.0
    %2849 = vmatprep.subr.mxu0 0.0
    %2850 = vmatpush2.msra.mxu0 0.0
    %2851 = vmatprep.subr.mxu0 0.0
    %2852 = vmatpush2.msra.mxu0 0.0
    %2853 = vmatprep.subr.mxu0 0.0
    %2854 = vmatpush2.msra.mxu0 0.0
    %2855 = vmatprep.subr.mxu0 0.0
    %2856 = vmatpush2.msra.mxu0 0.0
    %2857 = vmatprep.subr.mxu0 0.0
    %2858 = vmatpush2.msra.mxu0 0.0
    %2859 = vmatprep.subr.mxu0 0.0
    %2860 = vmatpush2.msra.mxu0 0.0
    %2861 = vmatprep.subr.mxu0 0.0
    %2862 = vmatpush2.msra.mxu0 0.0
    %2863 = vmatprep.mubr.f32.mxu0 0.0
    %2864 = vmatmul.mubr.f32.gmra.mxu0 %v2720
    %v2865 = vpop.f32.mrf.mxu0
    %v2866 = vadd.f32 0.0, %v2865
    %v2867 = vpop.f32.mrf.mxu0
    %v2868 = vadd.f32 0.0, %v2867
    %2869 = vmatprep.mubr.f32.mxu0 0.0
    %2870 = vmatmul.mubr.f32.gmra.mxu0 %v2721
    %v2871 = vpop.f32.mrf.mxu0
    %v2872 = vadd.f32 0.0, %v2871
    %v2873 = vpop.f32.mrf.mxu0
    %v2874 = vadd.f32 0.0, %v2873
    %2875 = vdwg.mxu0
    %v2876 = vadd.f32 %v2712, %v2789
    %v2877 = vadd.f32 %v2713, %v2791
    %v2878 = vadd.f32 %v2714, %v2866
    %v2879 = vadd.f32 %v2715, %v2868
    %v2880 = vadd.f32 %v2716, %v2795
    %v2881 = vadd.f32 %v2717, %v2797
    %v2882 = vadd.f32 %v2718, %v2872
    %v2883 = vadd.f32 %v2719, %v2874
    %v2884 = vxor.u32 %v2876, 2147483648
    %v2885 = vxor.u32 %v2877, 2147483648
    %v2886 = vxor.u32 %v2878, 2147483648
    %v2887 = vxor.u32 %v2880, 2147483648
    %v2888 = vxor.u32 %v2881, 2147483648
    %v2889 = vxor.u32 %v2882, 2147483648
    %v2890 = vmul.f32 %v2884, 1.442695
    %v2891 = vpow.pop %v2890
    %v2892 = vmul.f32 %v2885, 1.442695
    %v2893 = vpow.pop %v2892
    %v2894 = vmul.f32 %v2886, 1.442695
    %v2895 = vpow.pop %v2894
    %v2896 = vmul.f32 %v2887, 1.442695
    %v2897 = vpow.pop %v2896
    %v2898 = vmul.f32 %v2888, 1.442695
    %v2899 = vpow.pop %v2898
    %v2900 = vmul.f32 %v2889, 1.442695
    %v2901 = vpow.pop %v2900
    %v2902 = vadd.f32 %v2891, 1.0
    %v2903 = vadd.f32 %v2893, 1.0
    %v2904 = vadd.f32 %v2895, 1.0
    %v2905 = vadd.f32 %v2897, 1.0
    %v2906 = vadd.f32 %v2899, 1.0
    %v2907 = vadd.f32 %v2901, 1.0
    %v2908 = vrcp.pop %v2902
    %v2909 = vmul.f32 1.0, %v2908
    %v2910 = vrcp.pop %v2903
    %v2911 = vmul.f32 1.0, %v2910
    %v2912 = vrcp.pop %v2904
    %v2913 = vmul.f32 1.0, %v2912
    %v2914 = vrcp.pop %v2905
    %v2915 = vmul.f32 1.0, %v2914
    %v2916 = vrcp.pop %v2906
    %v2917 = vmul.f32 1.0, %v2916
    %v2918 = vrcp.pop %v2907
    %v2919 = vmul.f32 1.0, %v2918
    %v2920 = vtanh.pop %v2879
    %v2921 = vtanh.pop %v2883
    %v2922 = vld [vmem:[#allocation4] sm:$0xff]
    %v2923 = vld [vmem:[#allocation4 + $0x8] sm:$0xff]
    %v2924 = vmul.f32 %v2911, %v2922
    %v2925 = vmul.f32 %v2917, %v2923
    %v2926 = vmul.f32 %v2909, %v2920
    %v2927 = vmul.f32 %v2915, %v2921
    %v2928 = vadd.f32 %v2924, %v2926
    %v2929 = vadd.f32 %v2925, %v2927
    %v2930 = vtanh.pop %v2928
    %v2931 = vtanh.pop %v2929
    %v2932 = vmul.f32 %v2913, %v2930
    %v2933 = vmul.f32 %v2919, %v2931
    %2934 = vst [vmem:[#allocation4] sm:$0xff] %v2928
    %2935 = vst [vmem:[#allocation4 + $0x8] sm:$0xff] %v2929
    %2936 = vst [vmem:[#allocation3] sm:$0xff] %v2932
    %2937 = vst [vmem:[#allocation3 + $0x8] sm:$0xff] %v2933
    %v2938 = vld [vmem:[#allocation5] sm:$0xff]
    %v2939 = vld [vmem:[#allocation5 + $0x8] sm:$0xff]
    %s2940 = sld [smem:[#allocation12 + $0x8]]
    %v2941 = vstv %s2940
    %v2942 = vmul.f32 %v2932, %v2941
    %v2943 = vmul.f32 %v2933, %v2941
    %v2944 = vadd.f32 %v2938, %v2942
    %v2945 = vadd.f32 %v2939, %v2943
    %2946 = vst [vmem:[#allocation5] sm:$0xff] %v2944
    %2947 = vst [vmem:[#allocation5 + $0x8] sm:$0xff] %v2945
    %v2948 = vld [vmem:[#allocation2 + $0x240] sm:$0xff]
    %v2949 = vld [vmem:[#allocation2 + $0x248] sm:$0xff]
    %v2950 = vld [vmem:[#allocation2 + $0x250] sm:$0xff]
    %v2951 = vld [vmem:[#allocation2 + $0x258] sm:$0xff]
    %v2952 = vld [vmem:[#allocation2 + $0x260] sm:$0xff]
    %v2953 = vld [vmem:[#allocation2 + $0x268] sm:$0xff]
    %v2954 = vld [vmem:[#allocation2 + $0x270] sm:$0xff]
    %v2955 = vld [vmem:[#allocation2 + $0x278] sm:$0xff]
    %v2956 = vld [vmem:[#allocation3] sm:$0xff]
    %v2957 = vld [vmem:[#allocation3 + $0x8] sm:$0xff]
    %2958 = vmatprep.subr.mxu0 %v821
    %2959 = vmatpush1.msra.mxu0 %v820
    %2960 = vmatprep.subr.mxu0 %v817
    %2961 = vmatpush1.msra.mxu0 %v816
    %2962 = vmatprep.subr.mxu0 %v813
    %2963 = vmatpush1.msra.mxu0 %v812
    %2964 = vmatprep.subr.mxu0 %v809
    %2965 = vmatpush1.msra.mxu0 %v808
    %2966 = vmatprep.subr.mxu0 %v805
    %2967 = vmatpush1.msra.mxu0 %v804
    %2968 = vmatprep.subr.mxu0 %v801
    %2969 = vmatpush1.msra.mxu0 %v800
    %2970 = vmatprep.subr.mxu0 %v797
    %2971 = vmatpush1.msra.mxu0 %v796
    %2972 = vmatprep.subr.mxu0 %v793
    %2973 = vmatpush1.msra.mxu0 %v792
    %2974 = vmatprep.subr.mxu0 %v789
    %2975 = vmatpush1.msra.mxu0 %v788
    %2976 = vmatprep.subr.mxu0 %v785
    %2977 = vmatpush1.msra.mxu0 %v784
    %2978 = vmatprep.subr.mxu0 %v781
    %2979 = vmatpush1.msra.mxu0 %v780
    %2980 = vmatprep.subr.mxu0 %v777
    %2981 = vmatpush1.msra.mxu0 %v776
    %2982 = vmatprep.subr.mxu0 %v773
    %2983 = vmatpush1.msra.mxu0 %v772
    %2984 = vmatprep.subr.mxu0 %v769
    %2985 = vmatpush1.msra.mxu0 %v768
    %2986 = vmatprep.subr.mxu0 %v765
    %2987 = vmatpush1.msra.mxu0 %v764
    %2988 = vmatprep.subr.mxu0 %v761
    %2989 = vmatpush1.msra.mxu0 %v760
    %2990 = vmatprep.subr.mxu0 0.0
    %2991 = vmatpush2.msra.mxu0 0.0
    %2992 = vmatprep.subr.mxu0 0.0
    %2993 = vmatpush2.msra.mxu0 0.0
    %2994 = vmatprep.subr.mxu0 0.0
    %2995 = vmatpush2.msra.mxu0 0.0
    %2996 = vmatprep.subr.mxu0 0.0
    %2997 = vmatpush2.msra.mxu0 0.0
    %2998 = vmatprep.subr.mxu0 0.0
    %2999 = vmatpush2.msra.mxu0 0.0
    %3000 = vmatprep.subr.mxu0 0.0
    %3001 = vmatpush2.msra.mxu0 0.0
    %3002 = vmatprep.subr.mxu0 0.0
    %3003 = vmatpush2.msra.mxu0 0.0
    %3004 = vmatprep.subr.mxu0 0.0
    %3005 = vmatpush2.msra.mxu0 0.0
    %3006 = vmatprep.subr.mxu0 0.0
    %3007 = vmatpush2.msra.mxu0 0.0
    %3008 = vmatprep.subr.mxu0 0.0
    %3009 = vmatpush2.msra.mxu0 0.0
    %3010 = vmatprep.subr.mxu0 0.0
    %3011 = vmatpush2.msra.mxu0 0.0
    %3012 = vmatprep.subr.mxu0 0.0
    %3013 = vmatpush2.msra.mxu0 0.0
    %3014 = vmatprep.subr.mxu0 0.0
    %3015 = vmatpush2.msra.mxu0 0.0
    %3016 = vmatprep.subr.mxu0 0.0
    %3017 = vmatpush2.msra.mxu0 0.0
    %3018 = vmatprep.subr.mxu0 0.0
    %3019 = vmatpush2.msra.mxu0 0.0
    %3020 = vmatprep.subr.mxu0 0.0
    %3021 = vmatpush2.msra.mxu0 0.0
    %3022 = vmatprep.mubr.f32.mxu0 0.0
    %3023 = vmatmul.mubr.f32.gmra.mxu0 %v2956
    %v3024 = vpop.f32.mrf.mxu0
    %v3025 = vadd.f32 0.0, %v3024
    %v3026 = vpop.f32.mrf.mxu0
    %v3027 = vadd.f32 0.0, %v3026
    %3028 = vmatprep.mubr.f32.mxu0 0.0
    %3029 = vmatmul.mubr.f32.gmra.mxu0 %v2957
    %v3030 = vpop.f32.mrf.mxu0
    %v3031 = vadd.f32 0.0, %v3030
    %v3032 = vpop.f32.mrf.mxu0
    %v3033 = vadd.f32 0.0, %v3032
    %3034 = vdwg.mxu0
    %3035 = vmatprep.subr.mxu0 %v823
    %3036 = vmatpush1.msra.mxu0 %v822
    %3037 = vmatprep.subr.mxu0 %v819
    %3038 = vmatpush1.msra.mxu0 %v818
    %3039 = vmatprep.subr.mxu0 %v815
    %3040 = vmatpush1.msra.mxu0 %v814
    %3041 = vmatprep.subr.mxu0 %v811
    %3042 = vmatpush1.msra.mxu0 %v810
    %3043 = vmatprep.subr.mxu0 %v807
    %3044 = vmatpush1.msra.mxu0 %v806
    %3045 = vmatprep.subr.mxu0 %v803
    %3046 = vmatpush1.msra.mxu0 %v802
    %3047 = vmatprep.subr.mxu0 %v799
    %3048 = vmatpush1.msra.mxu0 %v798
    %3049 = vmatprep.subr.mxu0 %v795
    %3050 = vmatpush1.msra.mxu0 %v794
    %3051 = vmatprep.subr.mxu0 %v791
    %3052 = vmatpush1.msra.mxu0 %v790
    %3053 = vmatprep.subr.mxu0 %v787
    %3054 = vmatpush1.msra.mxu0 %v786
    %3055 = vmatprep.subr.mxu0 %v783
    %3056 = vmatpush1.msra.mxu0 %v782
    %3057 = vmatprep.subr.mxu0 %v779
    %3058 = vmatpush1.msra.mxu0 %v778
    %3059 = vmatprep.subr.mxu0 %v775
    %3060 = vmatpush1.msra.mxu0 %v774
    %3061 = vmatprep.subr.mxu0 %v771
    %3062 = vmatpush1.msra.mxu0 %v770
    %3063 = vmatprep.subr.mxu0 %v767
    %3064 = vmatpush1.msra.mxu0 %v766
    %3065 = vmatprep.subr.mxu0 %v763
    %3066 = vmatpush1.msra.mxu0 %v762
    %3067 = vmatprep.subr.mxu0 0.0
    %3068 = vmatpush2.msra.mxu0 0.0
    %3069 = vmatprep.subr.mxu0 0.0
    %3070 = vmatpush2.msra.mxu0 0.0
    %3071 = vmatprep.subr.mxu0 0.0
    %3072 = vmatpush2.msra.mxu0 0.0
    %3073 = vmatprep.subr.mxu0 0.0
    %3074 = vmatpush2.msra.mxu0 0.0
    %3075 = vmatprep.subr.mxu0 0.0
    %3076 = vmatpush2.msra.mxu0 0.0
    %3077 = vmatprep.subr.mxu0 0.0
    %3078 = vmatpush2.msra.mxu0 0.0
    %3079 = vmatprep.subr.mxu0 0.0
    %3080 = vmatpush2.msra.mxu0 0.0
    %3081 = vmatprep.subr.mxu0 0.0
    %3082 = vmatpush2.msra.mxu0 0.0
    %3083 = vmatprep.subr.mxu0 0.0
    %3084 = vmatpush2.msra.mxu0 0.0
    %3085 = vmatprep.subr.mxu0 0.0
    %3086 = vmatpush2.msra.mxu0 0.0
    %3087 = vmatprep.subr.mxu0 0.0
    %3088 = vmatpush2.msra.mxu0 0.0
    %3089 = vmatprep.subr.mxu0 0.0
    %3090 = vmatpush2.msra.mxu0 0.0
    %3091 = vmatprep.subr.mxu0 0.0
    %3092 = vmatpush2.msra.mxu0 0.0
    %3093 = vmatprep.subr.mxu0 0.0
    %3094 = vmatpush2.msra.mxu0 0.0
    %3095 = vmatprep.subr.mxu0 0.0
    %3096 = vmatpush2.msra.mxu0 0.0
    %3097 = vmatprep.subr.mxu0 0.0
    %3098 = vmatpush2.msra.mxu0 0.0
    %3099 = vmatprep.mubr.f32.mxu0 0.0
    %3100 = vmatmul.mubr.f32.gmra.mxu0 %v2956
    %v3101 = vpop.f32.mrf.mxu0
    %v3102 = vadd.f32 0.0, %v3101
    %v3103 = vpop.f32.mrf.mxu0
    %v3104 = vadd.f32 0.0, %v3103
    %3105 = vmatprep.mubr.f32.mxu0 0.0
    %3106 = vmatmul.mubr.f32.gmra.mxu0 %v2957
    %v3107 = vpop.f32.mrf.mxu0
    %v3108 = vadd.f32 0.0, %v3107
    %v3109 = vpop.f32.mrf.mxu0
    %v3110 = vadd.f32 0.0, %v3109
    %3111 = vdwg.mxu0
    %v3112 = vadd.f32 %v2948, %v3025
    %v3113 = vadd.f32 %v2949, %v3027
    %v3114 = vadd.f32 %v2950, %v3102
    %v3115 = vadd.f32 %v2951, %v3104
    %v3116 = vadd.f32 %v2952, %v3031
    %v3117 = vadd.f32 %v2953, %v3033
    %v3118 = vadd.f32 %v2954, %v3108
    %v3119 = vadd.f32 %v2955, %v3110
    %v3120 = vxor.u32 %v3112, 2147483648
    %v3121 = vxor.u32 %v3113, 2147483648
    %v3122 = vxor.u32 %v3114, 2147483648
    %v3123 = vxor.u32 %v3116, 2147483648
    %v3124 = vxor.u32 %v3117, 2147483648
    %v3125 = vxor.u32 %v3118, 2147483648
    %v3126 = vmul.f32 %v3120, 1.442695
    %v3127 = vpow.pop %v3126
    %v3128 = vmul.f32 %v3121, 1.442695
    %v3129 = vpow.pop %v3128
    %v3130 = vmul.f32 %v3122, 1.442695
    %v3131 = vpow.pop %v3130
    %v3132 = vmul.f32 %v3123, 1.442695
    %v3133 = vpow.pop %v3132
    %v3134 = vmul.f32 %v3124, 1.442695
    %v3135 = vpow.pop %v3134
    %v3136 = vmul.f32 %v3125, 1.442695
    %v3137 = vpow.pop %v3136
    %v3138 = vadd.f32 %v3127, 1.0
    %v3139 = vadd.f32 %v3129, 1.0
    %v3140 = vadd.f32 %v3131, 1.0
    %v3141 = vadd.f32 %v3133, 1.0
    %v3142 = vadd.f32 %v3135, 1.0
    %v3143 = vadd.f32 %v3137, 1.0
    %v3144 = vrcp.pop %v3138
    %v3145 = vmul.f32 1.0, %v3144
    %v3146 = vrcp.pop %v3139
    %v3147 = vmul.f32 1.0, %v3146
    %v3148 = vrcp.pop %v3140
    %v3149 = vmul.f32 1.0, %v3148
    %v3150 = vrcp.pop %v3141
    %v3151 = vmul.f32 1.0, %v3150
    %v3152 = vrcp.pop %v3142
    %v3153 = vmul.f32 1.0, %v3152
    %v3154 = vrcp.pop %v3143
    %v3155 = vmul.f32 1.0, %v3154
    %v3156 = vtanh.pop %v3115
    %v3157 = vtanh.pop %v3119
    %v3158 = vld [vmem:[#allocation4] sm:$0xff]
    %v3159 = vld [vmem:[#allocation4 + $0x8] sm:$0xff]
    %v3160 = vmul.f32 %v3147, %v3158
    %v3161 = vmul.f32 %v3153, %v3159
    %v3162 = vmul.f32 %v3145, %v3156
    %v3163 = vmul.f32 %v3151, %v3157
    %v3164 = vadd.f32 %v3160, %v3162
    %v3165 = vadd.f32 %v3161, %v3163
    %v3166 = vtanh.pop %v3164
    %v3167 = vtanh.pop %v3165
    %v3168 = vmul.f32 %v3149, %v3166
    %v3169 = vmul.f32 %v3155, %v3167
    %3170 = vst [vmem:[#allocation4] sm:$0xff] %v3164
    %3171 = vst [vmem:[#allocation4 + $0x8] sm:$0xff] %v3165
    %3172 = vst [vmem:[#allocation3] sm:$0xff] %v3168
    %3173 = vst [vmem:[#allocation3 + $0x8] sm:$0xff] %v3169
    %v3174 = vld [vmem:[#allocation5] sm:$0xff]
    %v3175 = vld [vmem:[#allocation5 + $0x8] sm:$0xff]
    %s3176 = sld [smem:[#allocation12 + $0x9]]
    %v3177 = vstv %s3176
    %v3178 = vmul.f32 %v3168, %v3177
    %v3179 = vmul.f32 %v3169, %v3177
    %v3180 = vadd.f32 %v3174, %v3178
    %v3181 = vadd.f32 %v3175, %v3179
    %3182 = vst [vmem:[#allocation5] sm:$0xff] %v3180
    %3183 = vst [vmem:[#allocation5 + $0x8] sm:$0xff] %v3181
    %v3184 = vld [vmem:[#allocation2 + $0x280] sm:$0xff]
    %v3185 = vld [vmem:[#allocation2 + $0x288] sm:$0xff]
    %v3186 = vld [vmem:[#allocation2 + $0x290] sm:$0xff]
    %v3187 = vld [vmem:[#allocation2 + $0x298] sm:$0xff]
    %v3188 = vld [vmem:[#allocation2 + $0x2a0] sm:$0xff]
    %v3189 = vld [vmem:[#allocation2 + $0x2a8] sm:$0xff]
    %v3190 = vld [vmem:[#allocation2 + $0x2b0] sm:$0xff]
    %v3191 = vld [vmem:[#allocation2 + $0x2b8] sm:$0xff]
    %v3192 = vld [vmem:[#allocation3] sm:$0xff]
    %v3193 = vld [vmem:[#allocation3 + $0x8] sm:$0xff]
    %3194 = vmatprep.subr.mxu0 %v821
    %3195 = vmatpush1.msra.mxu0 %v820
    %3196 = vmatprep.subr.mxu0 %v817
    %3197 = vmatpush1.msra.mxu0 %v816
    %3198 = vmatprep.subr.mxu0 %v813
    %3199 = vmatpush1.msra.mxu0 %v812
    %3200 = vmatprep.subr.mxu0 %v809
    %3201 = vmatpush1.msra.mxu0 %v808
    %3202 = vmatprep.subr.mxu0 %v805
    %3203 = vmatpush1.msra.mxu0 %v804
    %3204 = vmatprep.subr.mxu0 %v801
    %3205 = vmatpush1.msra.mxu0 %v800
    %3206 = vmatprep.subr.mxu0 %v797
    %3207 = vmatpush1.msra.mxu0 %v796
    %3208 = vmatprep.subr.mxu0 %v793
    %3209 = vmatpush1.msra.mxu0 %v792
    %3210 = vmatprep.subr.mxu0 %v789
    %3211 = vmatpush1.msra.mxu0 %v788
    %3212 = vmatprep.subr.mxu0 %v785
    %3213 = vmatpush1.msra.mxu0 %v784
    %3214 = vmatprep.subr.mxu0 %v781
    %3215 = vmatpush1.msra.mxu0 %v780
    %3216 = vmatprep.subr.mxu0 %v777
    %3217 = vmatpush1.msra.mxu0 %v776
    %3218 = vmatprep.subr.mxu0 %v773
    %3219 = vmatpush1.msra.mxu0 %v772
    %3220 = vmatprep.subr.mxu0 %v769
    %3221 = vmatpush1.msra.mxu0 %v768
    %3222 = vmatprep.subr.mxu0 %v765
    %3223 = vmatpush1.msra.mxu0 %v764
    %3224 = vmatprep.subr.mxu0 %v761
    %3225 = vmatpush1.msra.mxu0 %v760
    %3226 = vmatprep.subr.mxu0 0.0
    %3227 = vmatpush2.msra.mxu0 0.0
    %3228 = vmatprep.subr.mxu0 0.0
    %3229 = vmatpush2.msra.mxu0 0.0
    %3230 = vmatprep.subr.mxu0 0.0
    %3231 = vmatpush2.msra.mxu0 0.0
    %3232 = vmatprep.subr.mxu0 0.0
    %3233 = vmatpush2.msra.mxu0 0.0
    %3234 = vmatprep.subr.mxu0 0.0
    %3235 = vmatpush2.msra.mxu0 0.0
    %3236 = vmatprep.subr.mxu0 0.0
    %3237 = vmatpush2.msra.mxu0 0.0
    %3238 = vmatprep.subr.mxu0 0.0
    %3239 = vmatpush2.msra.mxu0 0.0
    %3240 = vmatprep.subr.mxu0 0.0
    %3241 = vmatpush2.msra.mxu0 0.0
    %3242 = vmatprep.subr.mxu0 0.0
    %3243 = vmatpush2.msra.mxu0 0.0
    %3244 = vmatprep.subr.mxu0 0.0
    %3245 = vmatpush2.msra.mxu0 0.0
    %3246 = vmatprep.subr.mxu0 0.0
    %3247 = vmatpush2.msra.mxu0 0.0
    %3248 = vmatprep.subr.mxu0 0.0
    %3249 = vmatpush2.msra.mxu0 0.0
    %3250 = vmatprep.subr.mxu0 0.0
    %3251 = vmatpush2.msra.mxu0 0.0
    %3252 = vmatprep.subr.mxu0 0.0
    %3253 = vmatpush2.msra.mxu0 0.0
    %3254 = vmatprep.subr.mxu0 0.0
    %3255 = vmatpush2.msra.mxu0 0.0
    %3256 = vmatprep.subr.mxu0 0.0
    %3257 = vmatpush2.msra.mxu0 0.0
    %3258 = vmatprep.mubr.f32.mxu0 0.0
    %3259 = vmatmul.mubr.f32.gmra.mxu0 %v3192
    %v3260 = vpop.f32.mrf.mxu0
    %v3261 = vadd.f32 0.0, %v3260
    %v3262 = vpop.f32.mrf.mxu0
    %v3263 = vadd.f32 0.0, %v3262
    %3264 = vmatprep.mubr.f32.mxu0 0.0
    %3265 = vmatmul.mubr.f32.gmra.mxu0 %v3193
    %v3266 = vpop.f32.mrf.mxu0
    %v3267 = vadd.f32 0.0, %v3266
    %v3268 = vpop.f32.mrf.mxu0
    %v3269 = vadd.f32 0.0, %v3268
    %3270 = vdwg.mxu0
    %3271 = vmatprep.subr.mxu0 %v823
    %3272 = vmatpush1.msra.mxu0 %v822
    %3273 = vmatprep.subr.mxu0 %v819
    %3274 = vmatpush1.msra.mxu0 %v818
    %3275 = vmatprep.subr.mxu0 %v815
    %3276 = vmatpush1.msra.mxu0 %v814
    %3277 = vmatprep.subr.mxu0 %v811
    %3278 = vmatpush1.msra.mxu0 %v810
    %3279 = vmatprep.subr.mxu0 %v807
    %3280 = vmatpush1.msra.mxu0 %v806
    %3281 = vmatprep.subr.mxu0 %v803
    %3282 = vmatpush1.msra.mxu0 %v802
    %3283 = vmatprep.subr.mxu0 %v799
    %3284 = vmatpush1.msra.mxu0 %v798
    %3285 = vmatprep.subr.mxu0 %v795
    %3286 = vmatpush1.msra.mxu0 %v794
    %3287 = vmatprep.subr.mxu0 %v791
    %3288 = vmatpush1.msra.mxu0 %v790
    %3289 = vmatprep.subr.mxu0 %v787
    %3290 = vmatpush1.msra.mxu0 %v786
    %3291 = vmatprep.subr.mxu0 %v783
    %3292 = vmatpush1.msra.mxu0 %v782
    %3293 = vmatprep.subr.mxu0 %v779
    %3294 = vmatpush1.msra.mxu0 %v778
    %3295 = vmatprep.subr.mxu0 %v775
    %3296 = vmatpush1.msra.mxu0 %v774
    %3297 = vmatprep.subr.mxu0 %v771
    %3298 = vmatpush1.msra.mxu0 %v770
    %3299 = vmatprep.subr.mxu0 %v767
    %3300 = vmatpush1.msra.mxu0 %v766
    %3301 = vmatprep.subr.mxu0 %v763
    %3302 = vmatpush1.msra.mxu0 %v762
    %3303 = vmatprep.subr.mxu0 0.0
    %3304 = vmatpush2.msra.mxu0 0.0
    %3305 = vmatprep.subr.mxu0 0.0
    %3306 = vmatpush2.msra.mxu0 0.0
    %3307 = vmatprep.subr.mxu0 0.0
    %3308 = vmatpush2.msra.mxu0 0.0
    %3309 = vmatprep.subr.mxu0 0.0
    %3310 = vmatpush2.msra.mxu0 0.0
    %3311 = vmatprep.subr.mxu0 0.0
    %3312 = vmatpush2.msra.mxu0 0.0
    %3313 = vmatprep.subr.mxu0 0.0
    %3314 = vmatpush2.msra.mxu0 0.0
    %3315 = vmatprep.subr.mxu0 0.0
    %3316 = vmatpush2.msra.mxu0 0.0
    %3317 = vmatprep.subr.mxu0 0.0
    %3318 = vmatpush2.msra.mxu0 0.0
    %3319 = vmatprep.subr.mxu0 0.0
    %3320 = vmatpush2.msra.mxu0 0.0
    %3321 = vmatprep.subr.mxu0 0.0
    %3322 = vmatpush2.msra.mxu0 0.0
    %3323 = vmatprep.subr.mxu0 0.0
    %3324 = vmatpush2.msra.mxu0 0.0
    %3325 = vmatprep.subr.mxu0 0.0
    %3326 = vmatpush2.msra.mxu0 0.0
    %3327 = vmatprep.subr.mxu0 0.0
    %3328 = vmatpush2.msra.mxu0 0.0
    %3329 = vmatprep.subr.mxu0 0.0
    %3330 = vmatpush2.msra.mxu0 0.0
    %3331 = vmatprep.subr.mxu0 0.0
    %3332 = vmatpush2.msra.mxu0 0.0
    %3333 = vmatprep.subr.mxu0 0.0
    %3334 = vmatpush2.msra.mxu0 0.0
    %3335 = vmatprep.mubr.f32.mxu0 0.0
    %3336 = vmatmul.mubr.f32.gmra.mxu0 %v3192
    %v3337 = vpop.f32.mrf.mxu0
    %v3338 = vadd.f32 0.0, %v3337
    %v3339 = vpop.f32.mrf.mxu0
    %v3340 = vadd.f32 0.0, %v3339
    %3341 = vmatprep.mubr.f32.mxu0 0.0
    %3342 = vmatmul.mubr.f32.gmra.mxu0 %v3193
    %v3343 = vpop.f32.mrf.mxu0
    %v3344 = vadd.f32 0.0, %v3343
    %v3345 = vpop.f32.mrf.mxu0
    %v3346 = vadd.f32 0.0, %v3345
    %3347 = vdwg.mxu0
    %v3348 = vadd.f32 %v3184, %v3261
    %v3349 = vadd.f32 %v3185, %v3263
    %v3350 = vadd.f32 %v3186, %v3338
    %v3351 = vadd.f32 %v3187, %v3340
    %v3352 = vadd.f32 %v3188, %v3267
    %v3353 = vadd.f32 %v3189, %v3269
    %v3354 = vadd.f32 %v3190, %v3344
    %v3355 = vadd.f32 %v3191, %v3346
    %v3356 = vxor.u32 %v3348, 2147483648
    %v3357 = vxor.u32 %v3349, 2147483648
    %v3358 = vxor.u32 %v3350, 2147483648
    %v3359 = vxor.u32 %v3352, 2147483648
    %v3360 = vxor.u32 %v3353, 2147483648
    %v3361 = vxor.u32 %v3354, 2147483648
    %v3362 = vmul.f32 %v3356, 1.442695
    %v3363 = vpow.pop %v3362
    %v3364 = vmul.f32 %v3357, 1.442695
    %v3365 = vpow.pop %v3364
    %v3366 = vmul.f32 %v3358, 1.442695
    %v3367 = vpow.pop %v3366
    %v3368 = vmul.f32 %v3359, 1.442695
    %v3369 = vpow.pop %v3368
    %v3370 = vmul.f32 %v3360, 1.442695
    %v3371 = vpow.pop %v3370
    %v3372 = vmul.f32 %v3361, 1.442695
    %v3373 = vpow.pop %v3372
    %v3374 = vadd.f32 %v3363, 1.0
    %v3375 = vadd.f32 %v3365, 1.0
    %v3376 = vadd.f32 %v3367, 1.0
    %v3377 = vadd.f32 %v3369, 1.0
    %v3378 = vadd.f32 %v3371, 1.0
    %v3379 = vadd.f32 %v3373, 1.0
    %v3380 = vrcp.pop %v3374
    %v3381 = vmul.f32 1.0, %v3380
    %v3382 = vrcp.pop %v3375
    %v3383 = vmul.f32 1.0, %v3382
    %v3384 = vrcp.pop %v3376
    %v3385 = vmul.f32 1.0, %v3384
    %v3386 = vrcp.pop %v3377
    %v3387 = vmul.f32 1.0, %v3386
    %v3388 = vrcp.pop %v3378
    %v3389 = vmul.f32 1.0, %v3388
    %v3390 = vrcp.pop %v3379
    %v3391 = vmul.f32 1.0, %v3390
    %v3392 = vtanh.pop %v3351
    %v3393 = vtanh.pop %v3355
    %v3394 = vld [vmem:[#allocation4] sm:$0xff]
    %v3395 = vld [vmem:[#allocation4 + $0x8] sm:$0xff]
    %v3396 = vmul.f32 %v3383, %v3394
    %v3397 = vmul.f32 %v3389, %v3395
    %v3398 = vmul.f32 %v3381, %v3392
    %v3399 = vmul.f32 %v3387, %v3393
    %v3400 = vadd.f32 %v3396, %v3398
    %v3401 = vadd.f32 %v3397, %v3399
    %v3402 = vtanh.pop %v3400
    %v3403 = vtanh.pop %v3401
    %v3404 = vmul.f32 %v3385, %v3402
    %v3405 = vmul.f32 %v3391, %v3403
    %3406 = vst [vmem:[#allocation4] sm:$0xff] %v3400
    %3407 = vst [vmem:[#allocation4 + $0x8] sm:$0xff] %v3401
    %3408 = vst [vmem:[#allocation3] sm:$0xff] %v3404
    %3409 = vst [vmem:[#allocation3 + $0x8] sm:$0xff] %v3405
    %v3410 = vld [vmem:[#allocation5] sm:$0xff]
    %v3411 = vld [vmem:[#allocation5 + $0x8] sm:$0xff]
    %s3412 = sld [smem:[#allocation12 + $0xa]]
    %v3413 = vstv %s3412
    %v3414 = vmul.f32 %v3404, %v3413
    %v3415 = vmul.f32 %v3405, %v3413
    %v3416 = vadd.f32 %v3410, %v3414
    %v3417 = vadd.f32 %v3411, %v3415
    %3418 = vst [vmem:[#allocation5] sm:$0xff] %v3416
    %3419 = vst [vmem:[#allocation5 + $0x8] sm:$0xff] %v3417
    %v3420 = vld [vmem:[#allocation2 + $0x2c0] sm:$0xff]
    %v3421 = vld [vmem:[#allocation2 + $0x2c8] sm:$0xff]
    %v3422 = vld [vmem:[#allocation2 + $0x2d0] sm:$0xff]
    %v3423 = vld [vmem:[#allocation2 + $0x2d8] sm:$0xff]
    %v3424 = vld [vmem:[#allocation2 + $0x2e0] sm:$0xff]
    %v3425 = vld [vmem:[#allocation2 + $0x2e8] sm:$0xff]
    %v3426 = vld [vmem:[#allocation2 + $0x2f0] sm:$0xff]
    %v3427 = vld [vmem:[#allocation2 + $0x2f8] sm:$0xff]
    %v3428 = vld [vmem:[#allocation3] sm:$0xff]
    %v3429 = vld [vmem:[#allocation3 + $0x8] sm:$0xff]
    %3430 = vmatprep.subr.mxu0 %v821
    %3431 = vmatpush1.msra.mxu0 %v820
    %3432 = vmatprep.subr.mxu0 %v817
    %3433 = vmatpush1.msra.mxu0 %v816
    %3434 = vmatprep.subr.mxu0 %v813
    %3435 = vmatpush1.msra.mxu0 %v812
    %3436 = vmatprep.subr.mxu0 %v809
    %3437 = vmatpush1.msra.mxu0 %v808
    %3438 = vmatprep.subr.mxu0 %v805
    %3439 = vmatpush1.msra.mxu0 %v804
    %3440 = vmatprep.subr.mxu0 %v801
    %3441 = vmatpush1.msra.mxu0 %v800
    %3442 = vmatprep.subr.mxu0 %v797
    %3443 = vmatpush1.msra.mxu0 %v796
    %3444 = vmatprep.subr.mxu0 %v793
    %3445 = vmatpush1.msra.mxu0 %v792
    %3446 = vmatprep.subr.mxu0 %v789
    %3447 = vmatpush1.msra.mxu0 %v788
    %3448 = vmatprep.subr.mxu0 %v785
    %3449 = vmatpush1.msra.mxu0 %v784
    %3450 = vmatprep.subr.mxu0 %v781
    %3451 = vmatpush1.msra.mxu0 %v780
    %3452 = vmatprep.subr.mxu0 %v777
    %3453 = vmatpush1.msra.mxu0 %v776
    %3454 = vmatprep.subr.mxu0 %v773
    %3455 = vmatpush1.msra.mxu0 %v772
    %3456 = vmatprep.subr.mxu0 %v769
    %3457 = vmatpush1.msra.mxu0 %v768
    %3458 = vmatprep.subr.mxu0 %v765
    %3459 = vmatpush1.msra.mxu0 %v764
    %3460 = vmatprep.subr.mxu0 %v761
    %3461 = vmatpush1.msra.mxu0 %v760
    %3462 = vmatprep.subr.mxu0 0.0
    %3463 = vmatpush2.msra.mxu0 0.0
    %3464 = vmatprep.subr.mxu0 0.0
    %3465 = vmatpush2.msra.mxu0 0.0
    %3466 = vmatprep.subr.mxu0 0.0
    %3467 = vmatpush2.msra.mxu0 0.0
    %3468 = vmatprep.subr.mxu0 0.0
    %3469 = vmatpush2.msra.mxu0 0.0
    %3470 = vmatprep.subr.mxu0 0.0
    %3471 = vmatpush2.msra.mxu0 0.0
    %3472 = vmatprep.subr.mxu0 0.0
    %3473 = vmatpush2.msra.mxu0 0.0
    %3474 = vmatprep.subr.mxu0 0.0
    %3475 = vmatpush2.msra.mxu0 0.0
    %3476 = vmatprep.subr.mxu0 0.0
    %3477 = vmatpush2.msra.mxu0 0.0
    %3478 = vmatprep.subr.mxu0 0.0
    %3479 = vmatpush2.msra.mxu0 0.0
    %3480 = vmatprep.subr.mxu0 0.0
    %3481 = vmatpush2.msra.mxu0 0.0
    %3482 = vmatprep.subr.mxu0 0.0
    %3483 = vmatpush2.msra.mxu0 0.0
    %3484 = vmatprep.subr.mxu0 0.0
    %3485 = vmatpush2.msra.mxu0 0.0
    %3486 = vmatprep.subr.mxu0 0.0
    %3487 = vmatpush2.msra.mxu0 0.0
    %3488 = vmatprep.subr.mxu0 0.0
    %3489 = vmatpush2.msra.mxu0 0.0
    %3490 = vmatprep.subr.mxu0 0.0
    %3491 = vmatpush2.msra.mxu0 0.0
    %3492 = vmatprep.subr.mxu0 0.0
    %3493 = vmatpush2.msra.mxu0 0.0
    %3494 = vmatprep.mubr.f32.mxu0 0.0
    %3495 = vmatmul.mubr.f32.gmra.mxu0 %v3428
    %v3496 = vpop.f32.mrf.mxu0
    %v3497 = vadd.f32 0.0, %v3496
    %v3498 = vpop.f32.mrf.mxu0
    %v3499 = vadd.f32 0.0, %v3498
    %3500 = vmatprep.mubr.f32.mxu0 0.0
    %3501 = vmatmul.mubr.f32.gmra.mxu0 %v3429
    %v3502 = vpop.f32.mrf.mxu0
    %v3503 = vadd.f32 0.0, %v3502
    %v3504 = vpop.f32.mrf.mxu0
    %v3505 = vadd.f32 0.0, %v3504
    %3506 = vdwg.mxu0
    %3507 = vmatprep.subr.mxu0 %v823
    %3508 = vmatpush1.msra.mxu0 %v822
    %3509 = vmatprep.subr.mxu0 %v819
    %3510 = vmatpush1.msra.mxu0 %v818
    %3511 = vmatprep.subr.mxu0 %v815
    %3512 = vmatpush1.msra.mxu0 %v814
    %3513 = vmatprep.subr.mxu0 %v811
    %3514 = vmatpush1.msra.mxu0 %v810
    %3515 = vmatprep.subr.mxu0 %v807
    %3516 = vmatpush1.msra.mxu0 %v806
    %3517 = vmatprep.subr.mxu0 %v803
    %3518 = vmatpush1.msra.mxu0 %v802
    %3519 = vmatprep.subr.mxu0 %v799
    %3520 = vmatpush1.msra.mxu0 %v798
    %3521 = vmatprep.subr.mxu0 %v795
    %3522 = vmatpush1.msra.mxu0 %v794
    %3523 = vmatprep.subr.mxu0 %v791
    %3524 = vmatpush1.msra.mxu0 %v790
    %3525 = vmatprep.subr.mxu0 %v787
    %3526 = vmatpush1.msra.mxu0 %v786
    %3527 = vmatprep.subr.mxu0 %v783
    %3528 = vmatpush1.msra.mxu0 %v782
    %3529 = vmatprep.subr.mxu0 %v779
    %3530 = vmatpush1.msra.mxu0 %v778
    %3531 = vmatprep.subr.mxu0 %v775
    %3532 = vmatpush1.msra.mxu0 %v774
    %3533 = vmatprep.subr.mxu0 %v771
    %3534 = vmatpush1.msra.mxu0 %v770
    %3535 = vmatprep.subr.mxu0 %v767
    %3536 = vmatpush1.msra.mxu0 %v766
    %3537 = vmatprep.subr.mxu0 %v763
    %3538 = vmatpush1.msra.mxu0 %v762
    %3539 = vmatprep.subr.mxu0 0.0
    %3540 = vmatpush2.msra.mxu0 0.0
    %3541 = vmatprep.subr.mxu0 0.0
    %3542 = vmatpush2.msra.mxu0 0.0
    %3543 = vmatprep.subr.mxu0 0.0
    %3544 = vmatpush2.msra.mxu0 0.0
    %3545 = vmatprep.subr.mxu0 0.0
    %3546 = vmatpush2.msra.mxu0 0.0
    %3547 = vmatprep.subr.mxu0 0.0
    %3548 = vmatpush2.msra.mxu0 0.0
    %3549 = vmatprep.subr.mxu0 0.0
    %3550 = vmatpush2.msra.mxu0 0.0
    %3551 = vmatprep.subr.mxu0 0.0
    %3552 = vmatpush2.msra.mxu0 0.0
    %3553 = vmatprep.subr.mxu0 0.0
    %3554 = vmatpush2.msra.mxu0 0.0
    %3555 = vmatprep.subr.mxu0 0.0
    %3556 = vmatpush2.msra.mxu0 0.0
    %3557 = vmatprep.subr.mxu0 0.0
    %3558 = vmatpush2.msra.mxu0 0.0
    %3559 = vmatprep.subr.mxu0 0.0
    %3560 = vmatpush2.msra.mxu0 0.0
    %3561 = vmatprep.subr.mxu0 0.0
    %3562 = vmatpush2.msra.mxu0 0.0
    %3563 = vmatprep.subr.mxu0 0.0
    %3564 = vmatpush2.msra.mxu0 0.0
    %3565 = vmatprep.subr.mxu0 0.0
    %3566 = vmatpush2.msra.mxu0 0.0
    %3567 = vmatprep.subr.mxu0 0.0
    %3568 = vmatpush2.msra.mxu0 0.0
    %3569 = vmatprep.subr.mxu0 0.0
    %3570 = vmatpush2.msra.mxu0 0.0
    %3571 = vmatprep.mubr.f32.mxu0 0.0
    %3572 = vmatmul.mubr.f32.gmra.mxu0 %v3428
    %v3573 = vpop.f32.mrf.mxu0
    %v3574 = vadd.f32 0.0, %v3573
    %v3575 = vpop.f32.mrf.mxu0
    %v3576 = vadd.f32 0.0, %v3575
    %3577 = vmatprep.mubr.f32.mxu0 0.0
    %3578 = vmatmul.mubr.f32.gmra.mxu0 %v3429
    %v3579 = vpop.f32.mrf.mxu0
    %v3580 = vadd.f32 0.0, %v3579
    %v3581 = vpop.f32.mrf.mxu0
    %v3582 = vadd.f32 0.0, %v3581
    %3583 = vdwg.mxu0
    %v3584 = vadd.f32 %v3420, %v3497
    %v3585 = vadd.f32 %v3421, %v3499
    %v3586 = vadd.f32 %v3422, %v3574
    %v3587 = vadd.f32 %v3423, %v3576
    %v3588 = vadd.f32 %v3424, %v3503
    %v3589 = vadd.f32 %v3425, %v3505
    %v3590 = vadd.f32 %v3426, %v3580
    %v3591 = vadd.f32 %v3427, %v3582
    %v3592 = vxor.u32 %v3584, 2147483648
    %v3593 = vxor.u32 %v3585, 2147483648
    %v3594 = vxor.u32 %v3586, 2147483648
    %v3595 = vxor.u32 %v3588, 2147483648
    %v3596 = vxor.u32 %v3589, 2147483648
    %v3597 = vxor.u32 %v3590, 2147483648
    %v3598 = vmul.f32 %v3592, 1.442695
    %v3599 = vpow.pop %v3598
    %v3600 = vmul.f32 %v3593, 1.442695
    %v3601 = vpow.pop %v3600
    %v3602 = vmul.f32 %v3594, 1.442695
    %v3603 = vpow.pop %v3602
    %v3604 = vmul.f32 %v3595, 1.442695
    %v3605 = vpow.pop %v3604
    %v3606 = vmul.f32 %v3596, 1.442695
    %v3607 = vpow.pop %v3606
    %v3608 = vmul.f32 %v3597, 1.442695
    %v3609 = vpow.pop %v3608
    %v3610 = vadd.f32 %v3599, 1.0
    %v3611 = vadd.f32 %v3601, 1.0
    %v3612 = vadd.f32 %v3603, 1.0
    %v3613 = vadd.f32 %v3605, 1.0
    %v3614 = vadd.f32 %v3607, 1.0
    %v3615 = vadd.f32 %v3609, 1.0
    %v3616 = vrcp.pop %v3610
    %v3617 = vmul.f32 1.0, %v3616
    %v3618 = vrcp.pop %v3611
    %v3619 = vmul.f32 1.0, %v3618
    %v3620 = vrcp.pop %v3612
    %v3621 = vmul.f32 1.0, %v3620
    %v3622 = vrcp.pop %v3613
    %v3623 = vmul.f32 1.0, %v3622
    %v3624 = vrcp.pop %v3614
    %v3625 = vmul.f32 1.0, %v3624
    %v3626 = vrcp.pop %v3615
    %v3627 = vmul.f32 1.0, %v3626
    %v3628 = vtanh.pop %v3587
    %v3629 = vtanh.pop %v3591
    %v3630 = vld [vmem:[#allocation4] sm:$0xff]
    %v3631 = vld [vmem:[#allocation4 + $0x8] sm:$0xff]
    %v3632 = vmul.f32 %v3619, %v3630
    %v3633 = vmul.f32 %v3625, %v3631
    %v3634 = vmul.f32 %v3617, %v3628
    %v3635 = vmul.f32 %v3623, %v3629
    %v3636 = vadd.f32 %v3632, %v3634
    %v3637 = vadd.f32 %v3633, %v3635
    %v3638 = vtanh.pop %v3636
    %v3639 = vtanh.pop %v3637
    %v3640 = vmul.f32 %v3621, %v3638
    %v3641 = vmul.f32 %v3627, %v3639
    %3642 = vst [vmem:[#allocation4] sm:$0xff] %v3636
    %3643 = vst [vmem:[#allocation4 + $0x8] sm:$0xff] %v3637
    %3644 = vst [vmem:[#allocation3] sm:$0xff] %v3640
    %3645 = vst [vmem:[#allocation3 + $0x8] sm:$0xff] %v3641
    %v3646 = vld [vmem:[#allocation5] sm:$0xff]
    %v3647 = vld [vmem:[#allocation5 + $0x8] sm:$0xff]
    %s3648 = sld [smem:[#allocation12 + $0xb]]
    %v3649 = vstv %s3648
    %v3650 = vmul.f32 %v3640, %v3649
    %v3651 = vmul.f32 %v3641, %v3649
    %v3652 = vadd.f32 %v3646, %v3650
    %v3653 = vadd.f32 %v3647, %v3651
    %3654 = vst [vmem:[#allocation5] sm:$0xff] %v3652
    %3655 = vst [vmem:[#allocation5 + $0x8] sm:$0xff] %v3653
    %v3656 = vld [vmem:[#allocation5] sm:$0xff]
    %v3657 = vld [vmem:[#allocation5 + $0x8] sm:$0xff]
    %s3658 = sld [smem:[#allocation13]]
    %v3659 = vstv %s3658
    %v3660 = vadd.f32 %v3656, %v3659
    %v3661 = vadd.f32 %v3657, %v3659
    %v3662 = vld [vmem:[%s5] sm:$0x1]
    %v3664 = vlaneseq
    %v3665 = vshrl.u32 %v3664, 7
    %v3666 = vsub.s32 0, %v3665
    %v3667 = vrot.slane %v3662, %v3666
    %v3669 = vmul.f32 %v3660, %v3667
    %v3670 = vmul.f32 %v3661, %v3667
    %3671 = vadd.xlane.f32.xlu0 %v3669
    %v3672 = vpop.xlane.xlu0 %3671
    %3673 = vadd.xlane.f32.xlu0 %v3670
    %v3674 = vpop.xlane.xlu0 %3673
    %s3675 = sld [smem:[#allocation13 + $0x1]]
    %v3676 = vstv %s3675
    %v3677 = vadd.f32 %v3672, %v3676
    %v3678 = vadd.f32 %v3674, %v3676
    %vm3679 = vcmask 7168
    %3680 = vst.msk [vmem:[%s7] sm:$0xff] %vm3679, %v3677
    %3681 = vst.msk [vmem:[%s7 + $0x8] sm:$0xff] %vm3679, %v3678
    // Predicated region
    $region50: #{tpu_custom_call.1} parent=1 // pred_check
      _
    $region51: #{tpu_custom_call.1} parent=1 // pred_check_branch
      %3683 = sbr.rel (0) target = $region53
    $region52: #{tpu_custom_call.1} parent=1 // pred_region
      _
    $region53: #{tpu_custom_call.1} parent=1 // pred_fallthru
      _
    // Predicated region
    $region54: #{tpu_custom_call.1} parent=1 // pred_check
      _
    $region55: #{tpu_custom_call.1} parent=1 // pred_check_branch
      %3685 = sbr.rel (0) target = $region57
    $region56: #{tpu_custom_call.1} parent=1 // pred_region
      _
    $region57: #{tpu_custom_call.1} parent=1 // pred_fallthru
      _
    %3686 = vsyncpa [#allocation7], 1
    %3687 = vsyncpa [#allocation10], 1
    %3688 = vsyncpa [#allocation8], 1
    %3689 = vsyncpa [#allocation14], 1

</llo_original>
